<compile_context>
chip_gen: v7x
topology: tpu7x:2x2x1
jax: 0.10.0
libtpu: 0.0.40
codegen_flags: <defaults>
</compile_context>

<pallas_src>
import functools

import jax
import jax.numpy as jnp
import numpy as np
from jax.experimental import pallas as pl
from jax.experimental.pallas import tpu as pltpu

NUM_CLASSES = 53
C_IN = 320            # channels produced by efficientnet_b0 `blocks`
C_PAD = 384           # contract dim zero-padded to a multiple of 128
C_HEAD = 1280         # enet_out_size
C_CHUNK = 256         # in-kernel chunk of the C_HEAD dimension
N_CHUNKS = C_HEAD // C_CHUNK
N_PAD = 128           # lane-dense padded class dimension (>= NUM_CLASSES)

assert C_HEAD % C_CHUNK == 0


def _head_classifier_kernel(x_ref, w_head_ref, bias_ref, pool_ref,
                            w_cls_ref, b_cls_ref, o_ref, *, inv_hw):
    # x_ref     : (M, C_PAD)      f32   flattened (batch-tile, spatial) rows, zero-padded
    # w_head_ref: (C_PAD, C_HEAD) bf16  1x1 conv weight, BN scale folded, rows zero-padded
    # bias_ref  : (1, C_HEAD)     f32   folded BN bias
    # pool_ref  : (TB, M)         bf16  0/1 spatial-membership mask (1/HW applied after)
    # w_cls_ref : (C_HEAD, N_PAD) bf16  classifier weight, zero-padded classes
    # b_cls_ref : (1, N_PAD)      f32   classifier bias, zero-padded classes
    # o_ref     : (TB, N_PAD)     f32   logits for this batch tile

    # In-kernel bf16 cast of the activations (single VPU pass, no wrapper-side cast).
    x = x_ref[...].astype(jnp.bfloat16)
    pool = pool_ref[...]

    pooled_chunks = []
    for c in range(N_CHUNKS):               # static unroll over C_HEAD chunks
        sl = slice(c * C_CHUNK, (c + 1) * C_CHUNK)

        # conv_head chunk (1x1 conv == channel matmul), f32 accumulation.
        h = jnp.dot(x, w_head_ref[:, sl], preferred_element_type=jnp.float32)

        # bn2 (scale already folded into the weight).
        h = h + bias_ref[:, sl]

        # SiLU: exp on the EUP in bf16, approx reciprocal stays on the EUP slot.
        e = jnp.exp((-h).astype(jnp.bfloat16)).astype(jnp.float32)
        h = h * pl.reciprocal(1.0 + e, approx=True)

        # Masked global sum-pool as a bf16 matmul with f32 accumulation; the
        # exact 1/HW scale is applied in f32 on the small pooled chunk.
        p = jnp.dot(pool, h.astype(jnp.bfloat16), preferred_element_type=jnp.float32)
        pooled_chunks.append(p * inv_hw)

    pooled = jnp.concatenate(pooled_chunks, axis=-1)          # (TB, C_HEAD) f32

    # classifier Linear (lane-dense padded output).
    logits = jnp.dot(pooled.astype(jnp.bfloat16), w_cls_ref[...],
                     preferred_element_type=jnp.float32) + b_cls_ref[...]
    o_ref[...] = logits


@functools.lru_cache(maxsize=None)
def _pool_mask(tb, hw, hw_pad):
    """0/1 bf16 mask: row i selects the HW real spatial rows of tile element i."""
    m = np.zeros((tb, tb * hw_pad), np.float32)
    for i in range(tb):
        m[i, i * hw_pad:i * hw_pad + hw] = 1.0
    return jnp.asarray(m, dtype=jnp.bfloat16)


def simple_card_classifier_head(x_bhwc, kparams, *, tb=None):
    """Head + classifier.

    x_bhwc : (B, H, W, C_IN) NHWC feature map from the EfficientNet-B0 blocks
             stack (channels last so they map onto the 128-wide lane axis; a
             backbone emitting NCHW would need a single transpose upstream).
    kparams: output of fold_params().
    Returns (B, NUM_CLASSES) float32 logits.
    """
    B, H, W, C = x_bhwc.shape
    assert C == C_IN
    HW = H * W
    hw_pad = -(-HW // 8) * 8                    # spatial padded to a sublane multiple

    if tb is None:
        if B <= 8:
            tb = B                              # one grid step, no wasted pad rows
        else:
            # >= 2 parallel grid steps (both v7x TCs busy), tiles of <= 32 rows,
            # rounded up to a multiple of 8.
            tb = min(32, (-(-B // 2) + 7) // 8 * 8)
    else:
        tb = max(1, min(tb, B))
    n_blocks = -(-B // tb)
    assert n_blocks == 1 or tb % 8 == 0, "tb must be a multiple of 8 when tiling the batch"
    b_pad = n_blocks * tb

    # Keep x in its original dtype (f32): the kernel casts to bf16 on the VPU.
    x = x_bhwc.reshape(B, HW, C)
    x = jnp.pad(x, ((0, b_pad - B), (0, hw_pad - HW), (0, C_PAD - C_IN)))
    x = x.reshape(b_pad * hw_pad, C_PAD)

    m = tb * hw_pad
    pool = _pool_mask(tb, HW, hw_pad)           # (tb, m) bf16 0/1 mask (cached)

    flops = n_blocks * (2 * m * C_PAD * C_HEAD          # conv_head
                        + 2 * tb * m * C_HEAD            # masked pool
                        + 2 * tb * C_HEAD * N_PAD)       # classifier
    transcendentals = n_blocks * m * C_HEAD              # exp per element
    bytes_accessed = int(x.size) * x.dtype.itemsize \
        + int(kparams["w_head"].size) * 2 + int(kparams["w_cls"].size) * 2 \
        + int(kparams["bn_bias"].size) * 4 + int(kparams["b_cls"].size) * 4 \
        + int(pool.size) * 2 + b_pad * N_PAD * 4

    kernel = functools.partial(_head_classifier_kernel, inv_hw=1.0 / float(HW))

    out = pl.pallas_call(
        kernel,
        out_shape=jax.ShapeDtypeStruct((b_pad, N_PAD), jnp.float32),
        grid=(n_blocks,),
        in_specs=[
            pl.BlockSpec((m, C_PAD), lambda b: (b, 0)),
            # Constant index maps: fetched once, resident across the whole grid.
            pl.BlockSpec((C_PAD, C_HEAD), lambda b: (0, 0)),
            pl.BlockSpec((1, C_HEAD), lambda b: (0, 0)),
            pl.BlockSpec((tb, m), lambda b: (0, 0)),
            pl.BlockSpec((C_HEAD, N_PAD), lambda b: (0, 0)),
            pl.BlockSpec((1, N_PAD), lambda b: (0, 0)),
        ],
        out_specs=pl.BlockSpec((tb, N_PAD), lambda b: (b, 0)),
        compiler_params=pltpu.CompilerParams(
            dimension_semantics=("parallel",)),
        cost_estimate=pl.CostEstimate(flops=int(flops),
                                      transcendentals=int(transcendentals),
                                      bytes_accessed=int(bytes_accessed)),
    )(x, kparams["w_head"], kparams["bn_bias"], pool,
      kparams["w_cls"], kparams["b_cls"])

    return out[:B, :NUM_CLASSES]


def init_params(key):
    """Deterministic synthetic parameters with the PyTorch module's shapes."""
    k1, k2, k3, k4, k5, k6, k7 = jax.random.split(key, 7)
    # conv_head: Conv2d(320, 1280, kernel_size=1, bias=False) -> weight (1280, 320)
    w_head = jax.random.normal(k1, (C_HEAD, C_IN), jnp.float32) * 0.02
    # bn2: BatchNorm2d(1280), eval mode
    gamma = 1.0 + 0.1 * jax.random.normal(k2, (C_HEAD,), jnp.float32)
    beta = 0.1 * jax.random.normal(k3, (C_HEAD,), jnp.float32)
    mean = 0.1 * jax.random.normal(k4, (C_HEAD,), jnp.float32)
    var = jnp.abs(1.0 + 0.1 * jax.random.normal(k5, (C_HEAD,), jnp.float32))
    # classifier: Linear(1280, 53)
    w_cls = jax.random.normal(k6, (NUM_CLASSES, C_HEAD), jnp.float32) * 0.02
    b_cls = 0.01 * jax.random.normal(k7, (NUM_CLASSES,), jnp.float32)
    return {"w_head_oihw": w_head, "bn_gamma": gamma, "bn_beta": beta,
            "bn_mean": mean, "bn_var": var, "w_cls": w_cls, "b_cls": b_cls}


def fold_params(params, eps=1e-5):
    """Fold BN (eval) into the 1x1 conv, cast matmul operands to bf16, pad the
    contract dim to C_PAD, and zero-pad the classifier to a lane-dense width."""
    inv_std = 1.0 / jnp.sqrt(params["bn_var"] + eps)
    scale = params["bn_gamma"] * inv_std                        # (C_HEAD,)
    bias = params["bn_beta"] - params["bn_mean"] * scale        # (C_HEAD,)
    w_head = (params["w_head_oihw"] * scale[:, None]).T         # (C_IN, C_HEAD), scale folded
    w_head = jnp.pad(w_head, ((0, C_PAD - C_IN), (0, 0)))       # (C_PAD, C_HEAD)
    w_cls = jnp.zeros((C_HEAD, N_PAD), jnp.float32)
    w_cls = w_cls.at[:, :NUM_CLASSES].set(params["w_cls"].T)
    b_cls = jnp.zeros((1, N_PAD), jnp.float32)
    b_cls = b_cls.at[0, :NUM_CLASSES].set(params["b_cls"])
    return {
        "w_head": w_head.astype(jnp.bfloat16),
        "bn_bias": bias.reshape(1, C_HEAD).astype(jnp.float32),
        "w_cls": w_cls.astype(jnp.bfloat16),
        "b_cls": b_cls,
    }


def reference_head(x_bhwc, params, eps=1e-5):
    """Plain-JAX f32 reference for the same ops (NHWC in)."""
    B, H, W, C = x_bhwc.shape
    x = x_bhwc.reshape(B, H * W, C)
    h = jnp.einsum("bpc,dc->bpd", x, params["w_head_oihw"])
    inv_std = 1.0 / jnp.sqrt(params["bn_var"] + eps)
    h = (h - params["bn_mean"]) * inv_std * params["bn_gamma"] + params["bn_beta"]
    h = h * jax.nn.sigmoid(h)
    pooled = jnp.mean(h, axis=1)                                # (B, C_HEAD)
    return pooled @ params["w_cls"].T + params["b_cls"]


if __name__ == "__main__":
    key = jax.random.PRNGKey(0)
    kx, kx2, kp = jax.random.split(key, 3)

    params = init_params(kp)
    kparams = fold_params(params)

    # Case 1: small NHWC feature map consistent with the blocks-stack output.
    B, H, W = 2, 8, 8
    x = jax.random.normal(kx, (B, H, W, C_IN), jnp.float32)
    out = jax.block_until_ready(simple_card_classifier_head(x, kparams))
    assert out.shape == (B, NUM_CLASSES)
    ref = reference_head(x, params)
    assert jnp.allclose(out, ref, atol=2e-2, rtol=2e-2), "mismatch vs reference (case 1)"

    # Case 2: batch > tile and HW not a sublane multiple (exercises padding,
    # masking, and a >=2-step parallel grid).
    B2, H2, W2 = 10, 7, 7
    x2 = jax.random.normal(kx2, (B2, H2, W2, C_IN), jnp.float32)
    out2 = jax.block_until_ready(simple_card_classifier_head(x2, kparams))
    assert out2.shape == (B2, NUM_CLASSES)
    ref2 = reference_head(x2, params)
    assert jnp.allclose(out2, ref2, atol=2e-2, rtol=2e-2), "mismatch vs reference (case 2)"

    print("KERNEL_OK")
</pallas_src>

<mosaic_0001>
module attributes {stable_mosaic.version = 11 : i64} {
  func.func @_head_classifier_kernel(%arg0: i32, %arg1: memref<128x384xf32, #tpu.memory_space<vmem>>, %arg2: memref<384x1280xbf16, #tpu.memory_space<vmem>>, %arg3: memref<1x1280xf32, #tpu.memory_space<vmem>>, %arg4: memref<2x128xbf16, #tpu.memory_space<vmem>>, %arg5: memref<1280x128xbf16, #tpu.memory_space<vmem>>, %arg6: memref<1x128xf32, #tpu.memory_space<vmem>>, %arg7: memref<2x128xf32, #tpu.memory_space<vmem>>) attributes {dimension_semantics = [#tpu.dimension_semantics<parallel>], iteration_bounds = array<i64: 1>, scalar_prefetch = 0 : i64, scratch_operands = 0 : i64, tpu.core_type = #tpu.core_type<tc>, window_params = [{transform_indices = @transform_0, window_bounds = array<i64: 128, 384>}, {pipeline_mode = #tpu.pipeline_mode<synchronous>, transform_indices = @transform_1, window_bounds = array<i64: 384, 1280>}, {pipeline_mode = #tpu.pipeline_mode<synchronous>, transform_indices = @transform_2, window_bounds = array<i64: 1, 1280>}, {pipeline_mode = #tpu.pipeline_mode<synchronous>, transform_indices = @transform_3, window_bounds = array<i64: 2, 128>}, {pipeline_mode = #tpu.pipeline_mode<synchronous>, transform_indices = @transform_4, window_bounds = array<i64: 1280, 128>}, {pipeline_mode = #tpu.pipeline_mode<synchronous>, transform_indices = @transform_5, window_bounds = array<i64: 1, 128>}, {transform_indices = @transform_6, window_bounds = array<i64: 2, 128>}]} {
    %c0 = arith.constant 0 : index
    %c0_0 = arith.constant 0 : index
    %0 = vector.load %arg1[%c0, %c0_0] : memref<128x384xf32, #tpu.memory_space<vmem>>, vector<128x384xf32>
    %1 = arith.truncf %0 : vector<128x384xf32> to vector<128x384xbf16>
    %c0_1 = arith.constant 0 : index
    %c0_2 = arith.constant 0 : index
    %2 = vector.load %arg4[%c0_1, %c0_2] : memref<2x128xbf16, #tpu.memory_space<vmem>>, vector<2x128xbf16>
    %c0_3 = arith.constant 0 : index
    %c0_4 = arith.constant 0 : index
    %3 = vector.load %arg2[%c0_3, %c0_4] : memref<384x1280xbf16, #tpu.memory_space<vmem>>, vector<384x256xbf16>
    %cst = arith.constant dense<0.000000e+00> : vector<128x256xf32>
    %4 = tpu.matmul %1, %3, %cst {dimension_numbers = #tpu.dot_dimension_numbers<[1], [0], [0], [1], [0, 0, 1, 1], [], []>} : vector<128x384xbf16>, vector<384x256xbf16>, vector<128x256xf32> -> vector<128x256xf32>
    %c0_5 = arith.constant 0 : index
    %c0_6 = arith.constant 0 : index
    %5 = vector.load %arg3[%c0_5, %c0_6] : memref<1x1280xf32, #tpu.memory_space<vmem>>, vector<1x256xf32>
    %6 = vector.broadcast %5 : vector<1x256xf32> to vector<128x256xf32>
    %7 = arith.addf %4, %6 : vector<128x256xf32>
    %cst_7 = arith.constant 0.000000e+00 : f32
    %8 = vector.broadcast %cst_7 : f32 to vector<128x256xf32>
    %9 = arith.subf %8, %7 : vector<128x256xf32>
    %10 = arith.truncf %9 : vector<128x256xf32> to vector<128x256xbf16>
    %11 = math.exp %10 : vector<128x256xbf16>
    %12 = arith.extf %11 : vector<128x256xbf16> to vector<128x256xf32>
    %cst_8 = arith.constant 1.000000e+00 : f32
    %13 = vector.broadcast %cst_8 : f32 to vector<128x256xf32>
    %14 = arith.addf %13, %12 : vector<128x256xf32>
    %15 = tpu.reciprocal %14 {approx = true} : vector<128x256xf32> -> vector<128x256xf32>
    %16 = arith.mulf %7, %15 : vector<128x256xf32>
    %17 = arith.truncf %16 : vector<128x256xf32> to vector<128x256xbf16>
    %cst_9 = arith.constant dense<0.000000e+00> : vector<2x256xf32>
    %18 = tpu.matmul %2, %17, %cst_9 {dimension_numbers = #tpu.dot_dimension_numbers<[1], [0], [0], [1], [0, 0, 1, 1], [], []>} : vector<2x128xbf16>, vector<128x256xbf16>, vector<2x256xf32> -> vector<2x256xf32>
    %cst_10 = arith.constant 1.562500e-02 : f32
    %19 = vector.broadcast %cst_10 : f32 to vector<2x256xf32>
    %20 = arith.mulf %18, %19 : vector<2x256xf32>
    %c0_11 = arith.constant 0 : index
    %c256 = arith.constant 256 : index
    %21 = vector.load %arg2[%c0_11, %c256] : memref<384x1280xbf16, #tpu.memory_space<vmem>>, vector<384x256xbf16>
    %cst_12 = arith.constant dense<0.000000e+00> : vector<128x256xf32>
    %22 = tpu.matmul %1, %21, %cst_12 {dimension_numbers = #tpu.dot_dimension_numbers<[1], [0], [0], [1], [0, 0, 1, 1], [], []>} : vector<128x384xbf16>, vector<384x256xbf16>, vector<128x256xf32> -> vector<128x256xf32>
    %c0_13 = arith.constant 0 : index
    %c256_14 = arith.constant 256 : index
    %23 = vector.load %arg3[%c0_13, %c256_14] : memref<1x1280xf32, #tpu.memory_space<vmem>>, vector<1x256xf32>
    %24 = vector.broadcast %23 : vector<1x256xf32> to vector<128x256xf32>
    %25 = arith.addf %22, %24 : vector<128x256xf32>
    %cst_15 = arith.constant 0.000000e+00 : f32
    %26 = vector.broadcast %cst_15 : f32 to vector<128x256xf32>
    %27 = arith.subf %26, %25 : vector<128x256xf32>
    %28 = arith.truncf %27 : vector<128x256xf32> to vector<128x256xbf16>
    %29 = math.exp %28 : vector<128x256xbf16>
    %30 = arith.extf %29 : vector<128x256xbf16> to vector<128x256xf32>
    %cst_16 = arith.constant 1.000000e+00 : f32
    %31 = vector.broadcast %cst_16 : f32 to vector<128x256xf32>
    %32 = arith.addf %31, %30 : vector<128x256xf32>
    %33 = tpu.reciprocal %32 {approx = true} : vector<128x256xf32> -> vector<128x256xf32>
    %34 = arith.mulf %25, %33 : vector<128x256xf32>
    %35 = arith.truncf %34 : vector<128x256xf32> to vector<128x256xbf16>
    %cst_17 = arith.constant dense<0.000000e+00> : vector<2x256xf32>
    %36 = tpu.matmul %2, %35, %cst_17 {dimension_numbers = #tpu.dot_dimension_numbers<[1], [0], [0], [1], [0, 0, 1, 1], [], []>} : vector<2x128xbf16>, vector<128x256xbf16>, vector<2x256xf32> -> vector<2x256xf32>
    %cst_18 = arith.constant 1.562500e-02 : f32
    %37 = vector.broadcast %cst_18 : f32 to vector<2x256xf32>
    %38 = arith.mulf %36, %37 : vector<2x256xf32>
    %c0_19 = arith.constant 0 : index
    %c512 = arith.constant 512 : index
    %39 = vector.load %arg2[%c0_19, %c512] : memref<384x1280xbf16, #tpu.memory_space<vmem>>, vector<384x256xbf16>
    %cst_20 = arith.constant dense<0.000000e+00> : vector<128x256xf32>
    %40 = tpu.matmul %1, %39, %cst_20 {dimension_numbers = #tpu.dot_dimension_numbers<[1], [0], [0], [1], [0, 0, 1, 1], [], []>} : vector<128x384xbf16>, vector<384x256xbf16>, vector<128x256xf32> -> vector<128x256xf32>
    %c0_21 = arith.constant 0 : index
    %c512_22 = arith.constant 512 : index
    %41 = vector.load %arg3[%c0_21, %c512_22] : memref<1x1280xf32, #tpu.memory_space<vmem>>, vector<1x256xf32>
    %42 = vector.broadcast %41 : vector<1x256xf32> to vector<128x256xf32>
    %43 = arith.addf %40, %42 : vector<128x256xf32>
    %cst_23 = arith.constant 0.000000e+00 : f32
    %44 = vector.broadcast %cst_23 : f32 to vector<128x256xf32>
    %45 = arith.subf %44, %43 : vector<128x256xf32>
    %46 = arith.truncf %45 : vector<128x256xf32> to vector<128x256xbf16>
    %47 = math.exp %46 : vector<128x256xbf16>
    %48 = arith.extf %47 : vector<128x256xbf16> to vector<128x256xf32>
    %cst_24 = arith.constant 1.000000e+00 : f32
    %49 = vector.broadcast %cst_24 : f32 to vector<128x256xf32>
    %50 = arith.addf %49, %48 : vector<128x256xf32>
    %51 = tpu.reciprocal %50 {approx = true} : vector<128x256xf32> -> vector<128x256xf32>
    %52 = arith.mulf %43, %51 : vector<128x256xf32>
    %53 = arith.truncf %52 : vector<128x256xf32> to vector<128x256xbf16>
    %cst_25 = arith.constant dense<0.000000e+00> : vector<2x256xf32>
    %54 = tpu.matmul %2, %53, %cst_25 {dimension_numbers = #tpu.dot_dimension_numbers<[1], [0], [0], [1], [0, 0, 1, 1], [], []>} : vector<2x128xbf16>, vector<128x256xbf16>, vector<2x256xf32> -> vector<2x256xf32>
    %cst_26 = arith.constant 1.562500e-02 : f32
    %55 = vector.broadcast %cst_26 : f32 to vector<2x256xf32>
    %56 = arith.mulf %54, %55 : vector<2x256xf32>
    %c0_27 = arith.constant 0 : index
    %c768 = arith.constant 768 : index
    %57 = vector.load %arg2[%c0_27, %c768] : memref<384x1280xbf16, #tpu.memory_space<vmem>>, vector<384x256xbf16>
    %cst_28 = arith.constant dense<0.000000e+00> : vector<128x256xf32>
    %58 = tpu.matmul %1, %57, %cst_28 {dimension_numbers = #tpu.dot_dimension_numbers<[1], [0], [0], [1], [0, 0, 1, 1], [], []>} : vector<128x384xbf16>, vector<384x256xbf16>, vector<128x256xf32> -> vector<128x256xf32>
    %c0_29 = arith.constant 0 : index
    %c768_30 = arith.constant 768 : index
    %59 = vector.load %arg3[%c0_29, %c768_30] : memref<1x1280xf32, #tpu.memory_space<vmem>>, vector<1x256xf32>
    %60 = vector.broadcast %59 : vector<1x256xf32> to vector<128x256xf32>
    %61 = arith.addf %58, %60 : vector<128x256xf32>
    %cst_31 = arith.constant 0.000000e+00 : f32
    %62 = vector.broadcast %cst_31 : f32 to vector<128x256xf32>
    %63 = arith.subf %62, %61 : vector<128x256xf32>
    %64 = arith.truncf %63 : vector<128x256xf32> to vector<128x256xbf16>
    %65 = math.exp %64 : vector<128x256xbf16>
    %66 = arith.extf %65 : vector<128x256xbf16> to vector<128x256xf32>
    %cst_32 = arith.constant 1.000000e+00 : f32
    %67 = vector.broadcast %cst_32 : f32 to vector<128x256xf32>
    %68 = arith.addf %67, %66 : vector<128x256xf32>
    %69 = tpu.reciprocal %68 {approx = true} : vector<128x256xf32> -> vector<128x256xf32>
    %70 = arith.mulf %61, %69 : vector<128x256xf32>
    %71 = arith.truncf %70 : vector<128x256xf32> to vector<128x256xbf16>
    %cst_33 = arith.constant dense<0.000000e+00> : vector<2x256xf32>
    %72 = tpu.matmul %2, %71, %cst_33 {dimension_numbers = #tpu.dot_dimension_numbers<[1], [0], [0], [1], [0, 0, 1, 1], [], []>} : vector<2x128xbf16>, vector<128x256xbf16>, vector<2x256xf32> -> vector<2x256xf32>
    %cst_34 = arith.constant 1.562500e-02 : f32
    %73 = vector.broadcast %cst_34 : f32 to vector<2x256xf32>
    %74 = arith.mulf %72, %73 : vector<2x256xf32>
    %c0_35 = arith.constant 0 : index
    %c1024 = arith.constant 1024 : index
    %75 = vector.load %arg2[%c0_35, %c1024] : memref<384x1280xbf16, #tpu.memory_space<vmem>>, vector<384x256xbf16>
    %cst_36 = arith.constant dense<0.000000e+00> : vector<128x256xf32>
    %76 = tpu.matmul %1, %75, %cst_36 {dimension_numbers = #tpu.dot_dimension_numbers<[1], [0], [0], [1], [0, 0, 1, 1], [], []>} : vector<128x384xbf16>, vector<384x256xbf16>, vector<128x256xf32> -> vector<128x256xf32>
    %c0_37 = arith.constant 0 : index
    %c1024_38 = arith.constant 1024 : index
    %77 = vector.load %arg3[%c0_37, %c1024_38] : memref<1x1280xf32, #tpu.memory_space<vmem>>, vector<1x256xf32>
    %78 = vector.broadcast %77 : vector<1x256xf32> to vector<128x256xf32>
    %79 = arith.addf %76, %78 : vector<128x256xf32>
    %cst_39 = arith.constant 0.000000e+00 : f32
    %80 = vector.broadcast %cst_39 : f32 to vector<128x256xf32>
    %81 = arith.subf %80, %79 : vector<128x256xf32>
    %82 = arith.truncf %81 : vector<128x256xf32> to vector<128x256xbf16>
    %83 = math.exp %82 : vector<128x256xbf16>
    %84 = arith.extf %83 : vector<128x256xbf16> to vector<128x256xf32>
    %cst_40 = arith.constant 1.000000e+00 : f32
    %85 = vector.broadcast %cst_40 : f32 to vector<128x256xf32>
    %86 = arith.addf %85, %84 : vector<128x256xf32>
    %87 = tpu.reciprocal %86 {approx = true} : vector<128x256xf32> -> vector<128x256xf32>
    %88 = arith.mulf %79, %87 : vector<128x256xf32>
    %89 = arith.truncf %88 : vector<128x256xf32> to vector<128x256xbf16>
    %cst_41 = arith.constant dense<0.000000e+00> : vector<2x256xf32>
    %90 = tpu.matmul %2, %89, %cst_41 {dimension_numbers = #tpu.dot_dimension_numbers<[1], [0], [0], [1], [0, 0, 1, 1], [], []>} : vector<2x128xbf16>, vector<128x256xbf16>, vector<2x256xf32> -> vector<2x256xf32>
    %cst_42 = arith.constant 1.562500e-02 : f32
    %91 = vector.broadcast %cst_42 : f32 to vector<2x256xf32>
    %92 = arith.mulf %90, %91 : vector<2x256xf32>
    %93 = tpu.concatenate %20, %38, %56, %74, %92 in 1 : vector<2x256xf32>, vector<2x256xf32>, vector<2x256xf32>, vector<2x256xf32>, vector<2x256xf32> -> vector<2x1280xf32>
    %94 = arith.truncf %93 : vector<2x1280xf32> to vector<2x1280xbf16>
    %c0_43 = arith.constant 0 : index
    %c0_44 = arith.constant 0 : index
    %95 = vector.load %arg5[%c0_43, %c0_44] : memref<1280x128xbf16, #tpu.memory_space<vmem>>, vector<1280x128xbf16>
    %cst_45 = arith.constant dense<0.000000e+00> : vector<2x128xf32>
    %96 = tpu.matmul %94, %95, %cst_45 {dimension_numbers = #tpu.dot_dimension_numbers<[1], [0], [0], [1], [0, 0, 1, 1], [], []>} : vector<2x1280xbf16>, vector<1280x128xbf16>, vector<2x128xf32> -> vector<2x128xf32>
    %c0_46 = arith.constant 0 : index
    %c0_47 = arith.constant 0 : index
    %97 = vector.load %arg6[%c0_46, %c0_47] : memref<1x128xf32, #tpu.memory_space<vmem>>, vector<1x128xf32>
    %98 = vector.broadcast %97 : vector<1x128xf32> to vector<2x128xf32>
    %99 = arith.addf %96, %98 : vector<2x128xf32>
    %c0_48 = arith.constant 0 : index
    %c0_49 = arith.constant 0 : index
    %100 = vector.load %arg7[%c0_48, %c0_49] : memref<2x128xf32, #tpu.memory_space<vmem>>, vector<2x128xf32>
    tpu.vector_store %arg7[%c0_48, %c0_49], %99 {strides = array<i32>} : memref<2x128xf32, #tpu.memory_space<vmem>>, vector<2x128xf32>,
    return
  }
  func.func @transform_0(%arg0: i32) -> (i32, i32) {
    %c0_i32 = arith.constant 0 : i32
    %c0_i32_0 = arith.constant 0 : i32
    return %arg0, %c0_i32 : i32, i32
  }
  func.func @transform_1(%arg0: i32) -> (i32, i32) {
    %c0_i32 = arith.constant 0 : i32
    %c0_i32_0 = arith.constant 0 : i32
    %c0_i32_1 = arith.constant 0 : i32
    return %c0_i32, %c0_i32_0 : i32, i32
  }
  func.func @transform_2(%arg0: i32) -> (i32, i32) {
    %c0_i32 = arith.constant 0 : i32
    %c0_i32_0 = arith.constant 0 : i32
    %c0_i32_1 = arith.constant 0 : i32
    return %c0_i32, %c0_i32_0 : i32, i32
  }
  func.func @transform_3(%arg0: i32) -> (i32, i32) {
    %c0_i32 = arith.constant 0 : i32
    %c0_i32_0 = arith.constant 0 : i32
    %c0_i32_1 = arith.constant 0 : i32
    return %c0_i32, %c0_i32_0 : i32, i32
  }
  func.func @transform_4(%arg0: i32) -> (i32, i32) {
    %c0_i32 = arith.constant 0 : i32
    %c0_i32_0 = arith.constant 0 : i32
    %c0_i32_1 = arith.constant 0 : i32
    return %c0_i32, %c0_i32_0 : i32, i32
  }
  func.func @transform_5(%arg0: i32) -> (i32, i32) {
    %c0_i32 = arith.constant 0 : i32
    %c0_i32_0 = arith.constant 0 : i32
    %c0_i32_1 = arith.constant 0 : i32
    return %c0_i32, %c0_i32_0 : i32, i32
  }
  func.func @transform_6(%arg0: i32) -> (i32, i32) {
    %c0_i32 = arith.constant 0 : i32
    %c0_i32_0 = arith.constant 0 : i32
    return %arg0, %c0_i32 : i32, i32
  }
}

</mosaic_0001>

<llo_original>
// kernel: tpu_custom_call.1
$region0: #{tpu_custom_call.1}
  #allocation0 [shape = 'u32[]', space=smem, size = 0x4, offset = 0x4, fixed_abs, tag = 'smem constant byte address 0x4 - core index']
  #allocation1 [shape = 'u32[144,128]{1,0:T(1,128)}', space=vmem, size = 0x12000, scoped, tag = 'internal scratch']
  %s0 = inlined_call_operand.hbm [shape: f32[128,384], index: 0, kind: input, shape index: {}]
  %s1 = inlined_call_operand.hbm [shape: bf16[384,1280], index: 1, kind: input, shape index: {}]
  %s2 = inlined_call_operand.hbm [shape: f32[1,1280], index: 2, kind: input, shape index: {}]
  %s3 = inlined_call_operand.vmem [shape: bf16[2,128], index: 3, kind: input, shape index: {}]
  %s4 = inlined_call_operand.hbm [shape: bf16[1280,128], index: 4, kind: input, shape index: {}]
  %s5 = inlined_call_operand.vmem [shape: f32[1,128], index: 5, kind: input, shape index: {}]
  %s6 = inlined_call_operand.hbm [shape: f32[2,128], index: 6, kind: output, shape index: {}]
  %s7 = sld [smem:[#allocation0]]
  $region50: #{tpu_custom_call.1} parent=0
    _
  %s9 = ssub.s32 1, %s7
  %s10 = scalar_select 0, %s9, %s7
  $region1: #{tpu_custom_call.1} parent=0
    #allocation2 [shape = 'u8[196608]{0}', space=vmem, size = 0x30000, scoped, tag = 'input window, operand 0, single buffered']
    #allocation3 [shape = 's32[1]{0}', space=sflag, size = 0x4, scoped, tag = 'scoped memory for tpu_custom_call.1']
    #allocation4 [shape = 's32[1]{0}', space=sflag, size = 0x4, scoped, tag = 'scoped memory for tpu_custom_call.1']
    #allocation5 [shape = 'u8[983040]{0}', space=vmem, size = 0xf0000, scoped, tag = 'input window, operand 1, single buffered']
    #allocation6 [shape = 's32[1]{0}', space=sflag, size = 0x4, scoped, tag = 'scoped memory for tpu_custom_call.1']
    #allocation7 [shape = 'u8[5120]{0}', space=vmem, size = 0x1400, scoped, tag = 'input window, operand 2, single buffered']
    #allocation8 [shape = 'u8[327680]{0}', space=vmem, size = 0x50000, scoped, tag = 'input window, operand 4, single buffered']
    #allocation9 [shape = 's32[1]{0}', space=sflag, size = 0x4, scoped, tag = 'scoped memory for tpu_custom_call.1']
    #allocation10 [shape = 'u8[1024]{0}', space=vmem, size = 0x400, scoped, tag = 'output window, operand 0, single buffered']
    %11 = vsyncpa [#allocation3], 0
    %12 = vsyncpa [#allocation6], 0
    %13 = vsyncpa [#allocation9], 0
    %14 = vsyncpa [#allocation4], 0
    // Predicated region
    $region2: #{tpu_custom_call.1} parent=1 // pred_check
      _
    $region3: #{tpu_custom_call.1} parent=1 // pred_check_branch
      %16 = sbr.rel (0) target = $region5
    $region4: #{tpu_custom_call.1} parent=1 // pred_region
      %s18 = ssub.s32 6144, 6144
      %19 = vsyncadd [#allocation3], %s18
      %s20 = sshll.u32 [#allocation2], 4
      %s21 = int_to_ptr.vmem [resolvable:$true] %s20
      %26 = dma.hbm_to_vmem [thread:$0]  %s0, 6144, %s21, [#allocation3], 384, 384, 24
    $region5: #{tpu_custom_call.1} parent=1 // pred_fallthru
      _
    // Predicated region
    $region6: #{tpu_custom_call.1} parent=1 // pred_check
      _
    $region7: #{tpu_custom_call.1} parent=1 // pred_check_branch
      %28 = sbr.rel (0) target = $region9
    $region8: #{tpu_custom_call.1} parent=1 // pred_region
      %s30 = ssub.s32 30720, 30720
      %31 = vsyncadd [#allocation6], %s30
      %s32 = sshll.u32 [#allocation5], 4
      %s33 = int_to_ptr.vmem [resolvable:$true] %s32
      %38 = dma.hbm_to_vmem [thread:$0]  %s1, 30720, %s33, [#allocation6], 640, 640, 40
    $region9: #{tpu_custom_call.1} parent=1 // pred_fallthru
      _
    // Predicated region
    $region10: #{tpu_custom_call.1} parent=1 // pred_check
      _
    $region11: #{tpu_custom_call.1} parent=1 // pred_check_branch
      %40 = sbr.rel (0) target = $region13
    $region12: #{tpu_custom_call.1} parent=1 // pred_region
      %s42 = ssub.s32 160, 160
      %43 = vsyncadd [#allocation6], %s42
      %s45 = sshll.u32 [#allocation7], 4
      %s46 = int_to_ptr.vmem [resolvable:$true] %s45
      %48 = dma.hbm_to_vmem [thread:$0]  %s2, 160, %s46, [#allocation6]
    $region13: #{tpu_custom_call.1} parent=1 // pred_fallthru
      _
    // Predicated region
    $region14: #{tpu_custom_call.1} parent=1 // pred_check
      _
    $region15: #{tpu_custom_call.1} parent=1 // pred_check_branch
      %50 = sbr.rel (0) target = $region17
    $region16: #{tpu_custom_call.1} parent=1 // pred_region
      _
    $region17: #{tpu_custom_call.1} parent=1 // pred_fallthru
      _
    // Predicated region
    $region18: #{tpu_custom_call.1} parent=1 // pred_check
      _
    $region19: #{tpu_custom_call.1} parent=1 // pred_check_branch
      %52 = sbr.rel (0) target = $region21
    $region20: #{tpu_custom_call.1} parent=1 // pred_region
      %s54 = ssub.s32 10240, 10240
      %55 = vsyncadd [#allocation9], %s54
      %s56 = sshll.u32 [#allocation8], 4
      %s57 = int_to_ptr.vmem [resolvable:$true] %s56
      %62 = dma.hbm_to_vmem [thread:$0]  %s4, 10240, %s57, [#allocation9], 64, 64, 4
    $region21: #{tpu_custom_call.1} parent=1 // pred_fallthru
      _
    // Predicated region
    $region22: #{tpu_custom_call.1} parent=1 // pred_check
      _
    $region23: #{tpu_custom_call.1} parent=1 // pred_check_branch
      %64 = sbr.rel (0) target = $region25
    $region24: #{tpu_custom_call.1} parent=1 // pred_region
      _
    $region25: #{tpu_custom_call.1} parent=1 // pred_fallthru
      _
    // Predicated region
    $region26: #{tpu_custom_call.1} parent=1 // pred_check
      _
    $region27: #{tpu_custom_call.1} parent=1 // pred_check_branch
      %66 = sbr.rel (0) target = $region29
    $region28: #{tpu_custom_call.1} parent=1 // pred_region
      %67 = dma.done [#allocation3], 6144
    $region29: #{tpu_custom_call.1} parent=1 // pred_fallthru
      _
    // Predicated region
    $region30: #{tpu_custom_call.1} parent=1 // pred_check
      _
    $region31: #{tpu_custom_call.1} parent=1 // pred_check_branch
      %69 = sbr.rel (0) target = $region33
    $region32: #{tpu_custom_call.1} parent=1 // pred_region
      %70 = dma.done [#allocation6], 30720
    $region33: #{tpu_custom_call.1} parent=1 // pred_fallthru
      _
    // Predicated region
    $region34: #{tpu_custom_call.1} parent=1 // pred_check
      _
    $region35: #{tpu_custom_call.1} parent=1 // pred_check_branch
      %72 = sbr.rel (0) target = $region37
    $region36: #{tpu_custom_call.1} parent=1 // pred_region
      %73 = dma.done [#allocation6], 160
    $region37: #{tpu_custom_call.1} parent=1 // pred_fallthru
      _
    // Predicated region
    $region38: #{tpu_custom_call.1} parent=1 // pred_check
      _
    $region39: #{tpu_custom_call.1} parent=1 // pred_check_branch
      %75 = sbr.rel (0) target = $region41
    $region40: #{tpu_custom_call.1} parent=1 // pred_region
      %76 = dma.done [#allocation9], 10240
    $region41: #{tpu_custom_call.1} parent=1 // pred_fallthru
      _
    %v78 = vld [vmem:[#allocation2] sm:$0xff]
    %v79 = vld [vmem:[#allocation2 + $0x8] sm:$0xff]
    %v80 = vld [vmem:[#allocation2 + $0x10] sm:$0xff]
    %v81 = vld [vmem:[#allocation2 + $0x18] sm:$0xff]
    %v82 = vld [vmem:[#allocation2 + $0x20] sm:$0xff]
    %v83 = vld [vmem:[#allocation2 + $0x28] sm:$0xff]
    %v84 = vld [vmem:[#allocation2 + $0x30] sm:$0xff]
    %v85 = vld [vmem:[#allocation2 + $0x38] sm:$0xff]
    %v86 = vld [vmem:[#allocation2 + $0x40] sm:$0xff]
    %v87 = vld [vmem:[#allocation2 + $0x48] sm:$0xff]
    %v88 = vld [vmem:[#allocation2 + $0x50] sm:$0xff]
    %v89 = vld [vmem:[#allocation2 + $0x58] sm:$0xff]
    %v90 = vld [vmem:[#allocation2 + $0x60] sm:$0xff]
    %v91 = vld [vmem:[#allocation2 + $0x68] sm:$0xff]
    %v92 = vld [vmem:[#allocation2 + $0x70] sm:$0xff]
    %v93 = vld [vmem:[#allocation2 + $0x78] sm:$0xff]
    %v94 = vld [vmem:[#allocation2 + $0x80] sm:$0xff]
    %v95 = vld [vmem:[#allocation2 + $0x88] sm:$0xff]
    %v96 = vld [vmem:[#allocation2 + $0x90] sm:$0xff]
    %v97 = vld [vmem:[#allocation2 + $0x98] sm:$0xff]
    %v98 = vld [vmem:[#allocation2 + $0xa0] sm:$0xff]
    %v99 = vld [vmem:[#allocation2 + $0xa8] sm:$0xff]
    %v100 = vld [vmem:[#allocation2 + $0xb0] sm:$0xff]
    %v101 = vld [vmem:[#allocation2 + $0xb8] sm:$0xff]
    %v102 = vld [vmem:[#allocation2 + $0xc0] sm:$0xff]
    %v103 = vld [vmem:[#allocation2 + $0xc8] sm:$0xff]
    %v104 = vld [vmem:[#allocation2 + $0xd0] sm:$0xff]
    %v105 = vld [vmem:[#allocation2 + $0xd8] sm:$0xff]
    %v106 = vld [vmem:[#allocation2 + $0xe0] sm:$0xff]
    %v107 = vld [vmem:[#allocation2 + $0xe8] sm:$0xff]
    %v108 = vld [vmem:[#allocation2 + $0xf0] sm:$0xff]
    %v109 = vld [vmem:[#allocation2 + $0xf8] sm:$0xff]
    %v110 = vld [vmem:[#allocation2 + $0x100] sm:$0xff]
    %v111 = vld [vmem:[#allocation2 + $0x108] sm:$0xff]
    %v112 = vld [vmem:[#allocation2 + $0x110] sm:$0xff]
    %v113 = vld [vmem:[#allocation2 + $0x118] sm:$0xff]
    %v114 = vld [vmem:[#allocation2 + $0x120] sm:$0xff]
    %v115 = vld [vmem:[#allocation2 + $0x128] sm:$0xff]
    %v116 = vld [vmem:[#allocation2 + $0x130] sm:$0xff]
    %v117 = vld [vmem:[#allocation2 + $0x138] sm:$0xff]
    %v118 = vld [vmem:[#allocation2 + $0x140] sm:$0xff]
    %v119 = vld [vmem:[#allocation2 + $0x148] sm:$0xff]
    %v120 = vld [vmem:[#allocation2 + $0x150] sm:$0xff]
    %v121 = vld [vmem:[#allocation2 + $0x158] sm:$0xff]
    %v122 = vld [vmem:[#allocation2 + $0x160] sm:$0xff]
    %v123 = vld [vmem:[#allocation2 + $0x168] sm:$0xff]
    %v124 = vld [vmem:[#allocation2 + $0x170] sm:$0xff]
    %v125 = vld [vmem:[#allocation2 + $0x178] sm:$0xff]
    %v126 = vpack.c.bf16 %v81, %v78
    %v127 = vpack.c.bf16 %v82, %v79
    %v128 = vpack.c.bf16 %v83, %v80
    %v129 = vpack.c.bf16 %v87, %v84
    %v130 = vpack.c.bf16 %v88, %v85
    %v131 = vpack.c.bf16 %v89, %v86
    %v132 = vpack.c.bf16 %v93, %v90
    %v133 = vpack.c.bf16 %v94, %v91
    %v134 = vpack.c.bf16 %v95, %v92
    %v135 = vpack.c.bf16 %v99, %v96
    %v136 = vpack.c.bf16 %v100, %v97
    %v137 = vpack.c.bf16 %v101, %v98
    %v138 = vpack.c.bf16 %v105, %v102
    %v139 = vpack.c.bf16 %v106, %v103
    %v140 = vpack.c.bf16 %v107, %v104
    %v141 = vpack.c.bf16 %v111, %v108
    %v142 = vpack.c.bf16 %v112, %v109
    %v143 = vpack.c.bf16 %v113, %v110
    %v144 = vpack.c.bf16 %v117, %v114
    %v145 = vpack.c.bf16 %v118, %v115
    %v146 = vpack.c.bf16 %v119, %v116
    %v147 = vpack.c.bf16 %v123, %v120
    %v148 = vpack.c.bf16 %v124, %v121
    %v149 = vpack.c.bf16 %v125, %v122
    %v150 = vld [vmem:[%s3] sm:$0x1]
    %v151 = vld [vmem:[#allocation5] sm:$0xff]
    %v152 = vld [vmem:[#allocation5 + $0x28] sm:$0xff]
    %v153 = vld [vmem:[#allocation5 + $0x50] sm:$0xff]
    %v154 = vld [vmem:[#allocation5 + $0x78] sm:$0xff]
    %v155 = vld [vmem:[#allocation5 + $0xa0] sm:$0xff]
    %v156 = vld [vmem:[#allocation5 + $0xc8] sm:$0xff]
    %v157 = vld [vmem:[#allocation5 + $0xf0] sm:$0xff]
    %v158 = vld [vmem:[#allocation5 + $0x118] sm:$0xff]
    %v159 = vld [vmem:[#allocation5 + $0x140] sm:$0xff]
    %v160 = vld [vmem:[#allocation5 + $0x168] sm:$0xff]
    %v161 = vld [vmem:[#allocation5 + $0x190] sm:$0xff]
    %v162 = vld [vmem:[#allocation5 + $0x1b8] sm:$0xff]
    %v163 = vld [vmem:[#allocation5 + $0x1e0] sm:$0xff]
    %v164 = vld [vmem:[#allocation5 + $0x208] sm:$0xff]
    %v165 = vld [vmem:[#allocation5 + $0x230] sm:$0xff]
    %v166 = vld [vmem:[#allocation5 + $0x258] sm:$0xff]
    %v167 = vld [vmem:[#allocation5 + $0x280] sm:$0xff]
    %v168 = vld [vmem:[#allocation5 + $0x2a8] sm:$0xff]
    %v169 = vld [vmem:[#allocation5 + $0x2d0] sm:$0xff]
    %v170 = vld [vmem:[#allocation5 + $0x2f8] sm:$0xff]
    %v171 = vld [vmem:[#allocation5 + $0x320] sm:$0xff]
    %v172 = vld [vmem:[#allocation5 + $0x348] sm:$0xff]
    %v173 = vld [vmem:[#allocation5 + $0x370] sm:$0xff]
    %v174 = vld [vmem:[#allocation5 + $0x398] sm:$0xff]
    %v175 = vld [vmem:[#allocation5 + $0x3c0] sm:$0xff]
    %v176 = vld [vmem:[#allocation5 + $0x3e8] sm:$0xff]
    %v177 = vld [vmem:[#allocation5 + $0x410] sm:$0xff]
    %v178 = vld [vmem:[#allocation5 + $0x438] sm:$0xff]
    %v179 = vld [vmem:[#allocation5 + $0x460] sm:$0xff]
    %v180 = vld [vmem:[#allocation5 + $0x488] sm:$0xff]
    %v181 = vld [vmem:[#allocation5 + $0x4b0] sm:$0xff]
    %v182 = vld [vmem:[#allocation5 + $0x4d8] sm:$0xff]
    %v183 = vld [vmem:[#allocation5 + $0x500] sm:$0xff]
    %v184 = vld [vmem:[#allocation5 + $0x528] sm:$0xff]
    %v185 = vld [vmem:[#allocation5 + $0x550] sm:$0xff]
    %v186 = vld [vmem:[#allocation5 + $0x578] sm:$0xff]
    %v187 = vld [vmem:[#allocation5 + $0x5a0] sm:$0xff]
    %v188 = vld [vmem:[#allocation5 + $0x5c8] sm:$0xff]
    %v189 = vld [vmem:[#allocation5 + $0x5f0] sm:$0xff]
    %v190 = vld [vmem:[#allocation5 + $0x618] sm:$0xff]
    %v191 = vld [vmem:[#allocation5 + $0x640] sm:$0xff]
    %v192 = vld [vmem:[#allocation5 + $0x668] sm:$0xff]
    %v193 = vld [vmem:[#allocation5 + $0x690] sm:$0xff]
    %v194 = vld [vmem:[#allocation5 + $0x6b8] sm:$0xff]
    %v195 = vld [vmem:[#allocation5 + $0x6e0] sm:$0xff]
    %v196 = vld [vmem:[#allocation5 + $0x708] sm:$0xff]
    %v197 = vld [vmem:[#allocation5 + $0x730] sm:$0xff]
    %v198 = vld [vmem:[#allocation5 + $0x758] sm:$0xff]
    %v199 = vld [vmem:[#allocation7] sm:$0x3]
    %v201 = vlaneseq
    %v202 = vshrl.u32 %v201, 7
    %v203 = vsub.s32 0, %v202
    %v204 = vrot.slane %v199, %v203
    %v205 = vlaneseq
    %v206 = vshrl.u32 %v205, 7
    %v207 = vsub.s32 1, %v206
    %v208 = vrot.slane %v199, %v207
    %v259 = vunpack.c.l.b16 %v151
    %v260 = vunpack.c.h.b16 %v151
    %v261 = vunpack.c.l.b16 %v152
    %v262 = vunpack.c.h.b16 %v152
    %v263 = vunpack.c.l.b16 %v153
    %v264 = vunpack.c.h.b16 %v153
    %v265 = vunpack.c.l.b16 %v154
    %v266 = vunpack.c.h.b16 %v154
    %v267 = vunpack.c.l.b16 %v155
    %v268 = vunpack.c.h.b16 %v155
    %v269 = vunpack.c.l.b16 %v156
    %v270 = vunpack.c.h.b16 %v156
    %v271 = vunpack.c.l.b16 %v157
    %v272 = vunpack.c.h.b16 %v157
    %v273 = vunpack.c.l.b16 %v158
    %v274 = vunpack.c.h.b16 %v158
    %v275 = vunpack.c.l.b16 %v159
    %v276 = vunpack.c.h.b16 %v159
    %v277 = vunpack.c.l.b16 %v160
    %v278 = vunpack.c.h.b16 %v160
    %v279 = vunpack.c.l.b16 %v161
    %v280 = vunpack.c.h.b16 %v161
    %v281 = vunpack.c.l.b16 %v162
    %v282 = vunpack.c.h.b16 %v162
    %v283 = vunpack.c.l.b16 %v163
    %v284 = vunpack.c.h.b16 %v163
    %v285 = vunpack.c.l.b16 %v164
    %v286 = vunpack.c.h.b16 %v164
    %v287 = vunpack.c.l.b16 %v165
    %v288 = vunpack.c.h.b16 %v165
    %v289 = vunpack.c.l.b16 %v166
    %v290 = vunpack.c.h.b16 %v166
    %v291 = vunpack.c.l.b16 %v167
    %v292 = vunpack.c.h.b16 %v167
    %v293 = vunpack.c.l.b16 %v168
    %v294 = vunpack.c.h.b16 %v168
    %v295 = vunpack.c.l.b16 %v169
    %v296 = vunpack.c.h.b16 %v169
    %v297 = vunpack.c.l.b16 %v170
    %v298 = vunpack.c.h.b16 %v170
    %v299 = vunpack.c.l.b16 %v171
    %v300 = vunpack.c.h.b16 %v171
    %v301 = vunpack.c.l.b16 %v172
    %v302 = vunpack.c.h.b16 %v172
    %v303 = vunpack.c.l.b16 %v173
    %v304 = vunpack.c.h.b16 %v173
    %v305 = vunpack.c.l.b16 %v174
    %v306 = vunpack.c.h.b16 %v174
    %v307 = vunpack.c.l.b16 %v175
    %v308 = vunpack.c.h.b16 %v175
    %v309 = vunpack.c.l.b16 %v176
    %v310 = vunpack.c.h.b16 %v176
    %v311 = vunpack.c.l.b16 %v177
    %v312 = vunpack.c.h.b16 %v177
    %v313 = vunpack.c.l.b16 %v178
    %v314 = vunpack.c.h.b16 %v178
    %v315 = vunpack.c.l.b16 %v179
    %v316 = vunpack.c.h.b16 %v179
    %v317 = vunpack.c.l.b16 %v180
    %v318 = vunpack.c.h.b16 %v180
    %v319 = vunpack.c.l.b16 %v181
    %v320 = vunpack.c.h.b16 %v181
    %v321 = vunpack.c.l.b16 %v182
    %v322 = vunpack.c.h.b16 %v182
    %v323 = vunpack.c.l.b16 %v183
    %v324 = vunpack.c.h.b16 %v183
    %v325 = vunpack.c.l.b16 %v184
    %v326 = vunpack.c.h.b16 %v184
    %v327 = vunpack.c.l.b16 %v185
    %v328 = vunpack.c.h.b16 %v185
    %v329 = vunpack.c.l.b16 %v186
    %v330 = vunpack.c.h.b16 %v186
    %v331 = vunpack.c.l.b16 %v187
    %v332 = vunpack.c.h.b16 %v187
    %v333 = vunpack.c.l.b16 %v188
    %v334 = vunpack.c.h.b16 %v188
    %v335 = vunpack.c.l.b16 %v189
    %v336 = vunpack.c.h.b16 %v189
    %v337 = vunpack.c.l.b16 %v190
    %v338 = vunpack.c.h.b16 %v190
    %v339 = vunpack.c.l.b16 %v191
    %v340 = vunpack.c.h.b16 %v191
    %v341 = vunpack.c.l.b16 %v192
    %v342 = vunpack.c.h.b16 %v192
    %v343 = vunpack.c.l.b16 %v193
    %v344 = vunpack.c.h.b16 %v193
    %v345 = vunpack.c.l.b16 %v194
    %v346 = vunpack.c.h.b16 %v194
    %v347 = vunpack.c.l.b16 %v195
    %v348 = vunpack.c.h.b16 %v195
    %v349 = vunpack.c.l.b16 %v196
    %v350 = vunpack.c.h.b16 %v196
    %v351 = vunpack.c.l.b16 %v197
    %v352 = vunpack.c.h.b16 %v197
    %v353 = vunpack.c.l.b16 %v198
    %v354 = vunpack.c.h.b16 %v198
    %v355 = vpack.c.b16 %v261, %v259
    %v356 = vpack.c.b16 %v262, %v260
    %v357 = vpack.c.b16 %v265, %v263
    %v358 = vpack.c.b16 %v266, %v264
    %v359 = vpack.c.b16 %v269, %v267
    %v360 = vpack.c.b16 %v270, %v268
    %v361 = vpack.c.b16 %v273, %v271
    %v362 = vpack.c.b16 %v274, %v272
    %v363 = vpack.c.b16 %v277, %v275
    %v364 = vpack.c.b16 %v278, %v276
    %v365 = vpack.c.b16 %v281, %v279
    %v366 = vpack.c.b16 %v282, %v280
    %v367 = vpack.c.b16 %v285, %v283
    %v368 = vpack.c.b16 %v286, %v284
    %v369 = vpack.c.b16 %v289, %v287
    %v370 = vpack.c.b16 %v290, %v288
    %v371 = vpack.c.b16 %v293, %v291
    %v372 = vpack.c.b16 %v294, %v292
    %v373 = vpack.c.b16 %v297, %v295
    %v374 = vpack.c.b16 %v298, %v296
    %v375 = vpack.c.b16 %v301, %v299
    %v376 = vpack.c.b16 %v302, %v300
    %v377 = vpack.c.b16 %v305, %v303
    %v378 = vpack.c.b16 %v306, %v304
    %v379 = vpack.c.b16 %v309, %v307
    %v380 = vpack.c.b16 %v310, %v308
    %v381 = vpack.c.b16 %v313, %v311
    %v382 = vpack.c.b16 %v314, %v312
    %v383 = vpack.c.b16 %v317, %v315
    %v384 = vpack.c.b16 %v318, %v316
    %v385 = vpack.c.b16 %v321, %v319
    %v386 = vpack.c.b16 %v322, %v320
    %v387 = vpack.c.b16 %v325, %v323
    %v388 = vpack.c.b16 %v326, %v324
    %v389 = vpack.c.b16 %v329, %v327
    %v390 = vpack.c.b16 %v330, %v328
    %v391 = vpack.c.b16 %v333, %v331
    %v392 = vpack.c.b16 %v334, %v332
    %v393 = vpack.c.b16 %v337, %v335
    %v394 = vpack.c.b16 %v338, %v336
    %v395 = vpack.c.b16 %v341, %v339
    %v396 = vpack.c.b16 %v342, %v340
    %v397 = vpack.c.b16 %v345, %v343
    %v398 = vpack.c.b16 %v346, %v344
    %v399 = vpack.c.b16 %v349, %v347
    %v400 = vpack.c.b16 %v350, %v348
    %v401 = vpack.c.b16 %v353, %v351
    %v402 = vpack.c.b16 %v354, %v352
    %451 = vmatprep.subr.bf16.mxu0 %v356
    %452 = vmatpush1.bf16.msra.mxu0 %v355
    %453 = vmatprep.subr.bf16.mxu0 %v358
    %454 = vmatpush1.bf16.msra.mxu0 %v357
    %455 = vmatprep.subr.bf16.mxu0 %v360
    %456 = vmatpush1.bf16.msra.mxu0 %v359
    %457 = vmatprep.subr.bf16.mxu0 %v362
    %458 = vmatpush1.bf16.msra.mxu0 %v361
    %459 = vmatprep.subr.bf16.mxu0 %v364
    %460 = vmatpush1.bf16.msra.mxu0 %v363
    %461 = vmatprep.subr.bf16.mxu0 %v366
    %462 = vmatpush1.bf16.msra.mxu0 %v365
    %463 = vmatprep.subr.bf16.mxu0 %v368
    %464 = vmatpush1.bf16.msra.mxu0 %v367
    %465 = vmatprep.subr.bf16.mxu0 %v370
    %466 = vmatpush1.bf16.msra.mxu0 %v369
    %467 = vmatprep.subr.bf16.mxu0 %v372
    %468 = vmatpush1.bf16.msra.mxu0 %v371
    %469 = vmatprep.subr.bf16.mxu0 %v374
    %470 = vmatpush1.bf16.msra.mxu0 %v373
    %471 = vmatprep.subr.bf16.mxu0 %v376
    %472 = vmatpush1.bf16.msra.mxu0 %v375
    %473 = vmatprep.subr.bf16.mxu0 %v378
    %474 = vmatpush1.bf16.msra.mxu0 %v377
    %475 = vmatprep.subr.bf16.mxu0 %v380
    %476 = vmatpush1.bf16.msra.mxu0 %v379
    %477 = vmatprep.subr.bf16.mxu0 %v382
    %478 = vmatpush1.bf16.msra.mxu0 %v381
    %479 = vmatprep.subr.bf16.mxu0 %v384
    %480 = vmatpush1.bf16.msra.mxu0 %v383
    %481 = vmatprep.subr.bf16.mxu0 %v386
    %482 = vmatpush1.bf16.msra.mxu0 %v385
    %483 = vmatprep.mubr.bf16.mxu0 %v127
    %484 = vmatmul.mubr.bf16.gmra.mrb[0].mxu0 %v126
    %v485 = vpop.f32.mrb[0].mxu0
    %v486 = vadd.f32 %v204, %v485
    %v487 = vpop.f32.mrb[0].mxu0
    %v488 = vadd.f32 %v208, %v487
    %v489 = vpop.f32.mrb[0].mxu0
    %v490 = vadd.f32 %v204, %v489
    %v491 = vpop.f32.mrb[0].mxu0
    %v492 = vadd.f32 %v208, %v491
    %493 = vmatprep.mubr.bf16.mxu0 %v130
    %494 = vmatmul.mubr.bf16.gmra.mrb[0].mxu0 %v129
    %v495 = vpop.f32.mrb[0].mxu0
    %v496 = vadd.f32 %v204, %v495
    %v497 = vpop.f32.mrb[0].mxu0
    %v498 = vadd.f32 %v208, %v497
    %v499 = vpop.f32.mrb[0].mxu0
    %v500 = vadd.f32 %v204, %v499
    %v501 = vpop.f32.mrb[0].mxu0
    %v502 = vadd.f32 %v208, %v501
    %503 = vmatprep.mubr.bf16.mxu0 %v133
    %504 = vmatmul.mubr.bf16.gmra.mrb[0].mxu0 %v132
    %v505 = vpop.f32.mrb[0].mxu0
    %v506 = vadd.f32 %v204, %v505
    %v507 = vpop.f32.mrb[0].mxu0
    %v508 = vadd.f32 %v208, %v507
    %v509 = vpop.f32.mrb[0].mxu0
    %v510 = vadd.f32 %v204, %v509
    %v511 = vpop.f32.mrb[0].mxu0
    %v512 = vadd.f32 %v208, %v511
    %513 = vmatprep.mubr.bf16.mxu0 %v136
    %514 = vmatmul.mubr.bf16.gmra.mrb[0].mxu0 %v135
    %v515 = vpop.f32.mrb[0].mxu0
    %v516 = vadd.f32 %v204, %v515
    %v517 = vpop.f32.mrb[0].mxu0
    %v518 = vadd.f32 %v208, %v517
    %v519 = vpop.f32.mrb[0].mxu0
    %v520 = vadd.f32 %v204, %v519
    %v521 = vpop.f32.mrb[0].mxu0
    %v522 = vadd.f32 %v208, %v521
    %523 = vmatprep.mubr.bf16.mxu0 %v139
    %524 = vmatmul.mubr.bf16.gmra.mrb[0].mxu0 %v138
    %v525 = vpop.f32.mrb[0].mxu0
    %v526 = vadd.f32 %v204, %v525
    %v527 = vpop.f32.mrb[0].mxu0
    %v528 = vadd.f32 %v208, %v527
    %v529 = vpop.f32.mrb[0].mxu0
    %v530 = vadd.f32 %v204, %v529
    %v531 = vpop.f32.mrb[0].mxu0
    %v532 = vadd.f32 %v208, %v531
    %533 = vmatprep.mubr.bf16.mxu0 %v142
    %534 = vmatmul.mubr.bf16.gmra.mrb[0].mxu0 %v141
    %v535 = vpop.f32.mrb[0].mxu0
    %v536 = vadd.f32 %v204, %v535
    %v537 = vpop.f32.mrb[0].mxu0
    %v538 = vadd.f32 %v208, %v537
    %v539 = vpop.f32.mrb[0].mxu0
    %v540 = vadd.f32 %v204, %v539
    %v541 = vpop.f32.mrb[0].mxu0
    %v542 = vadd.f32 %v208, %v541
    %543 = vmatprep.mubr.bf16.mxu0 %v145
    %544 = vmatmul.mubr.bf16.gmra.mrb[0].mxu0 %v144
    %v545 = vpop.f32.mrb[0].mxu0
    %v546 = vadd.f32 %v204, %v545
    %v547 = vpop.f32.mrb[0].mxu0
    %v548 = vadd.f32 %v208, %v547
    %v549 = vpop.f32.mrb[0].mxu0
    %v550 = vadd.f32 %v204, %v549
    %v551 = vpop.f32.mrb[0].mxu0
    %v552 = vadd.f32 %v208, %v551
    %553 = vmatprep.mubr.bf16.mxu0 %v148
    %554 = vmatmul.mubr.bf16.gmra.mrb[0].mxu0 %v147
    %v555 = vpop.f32.mrb[0].mxu0
    %v556 = vadd.f32 %v204, %v555
    %v557 = vpop.f32.mrb[0].mxu0
    %v558 = vadd.f32 %v208, %v557
    %v559 = vpop.f32.mrb[0].mxu0
    %v560 = vadd.f32 %v204, %v559
    %v561 = vpop.f32.mrb[0].mxu0
    %v562 = vadd.f32 %v208, %v561
    %563 = vdwg.mxu0
    %564 = vmatprep.subr.bf16.mxu0 %v388
    %565 = vmatpush1.bf16.msra.mxu0 %v387
    %566 = vmatprep.subr.bf16.mxu0 %v390
    %567 = vmatpush1.bf16.msra.mxu0 %v389
    %568 = vmatprep.subr.bf16.mxu0 %v392
    %569 = vmatpush1.bf16.msra.mxu0 %v391
    %570 = vmatprep.subr.bf16.mxu0 %v394
    %571 = vmatpush1.bf16.msra.mxu0 %v393
    %572 = vmatprep.subr.bf16.mxu0 %v396
    %573 = vmatpush1.bf16.msra.mxu0 %v395
    %574 = vmatprep.subr.bf16.mxu0 %v398
    %575 = vmatpush1.bf16.msra.mxu0 %v397
    %576 = vmatprep.subr.bf16.mxu0 %v400
    %577 = vmatpush1.bf16.msra.mxu0 %v399
    %578 = vmatprep.subr.bf16.mxu0 %v402
    %579 = vmatpush1.bf16.msra.mxu0 %v401
    %580 = vmatprep.subr.bf16.mxu0 0
    %581 = vmatpush1.bf16.msra.mxu0 0
    %582 = vmatprep.subr.bf16.mxu0 0
    %583 = vmatpush1.bf16.msra.mxu0 0
    %584 = vmatprep.subr.bf16.mxu0 0
    %585 = vmatpush1.bf16.msra.mxu0 0
    %586 = vmatprep.subr.bf16.mxu0 0
    %587 = vmatpush1.bf16.msra.mxu0 0
    %588 = vmatprep.subr.bf16.mxu0 0
    %589 = vmatpush1.bf16.msra.mxu0 0
    %590 = vmatprep.subr.bf16.mxu0 0
    %591 = vmatpush1.bf16.msra.mxu0 0
    %592 = vmatprep.subr.bf16.mxu0 0
    %593 = vmatpush1.bf16.msra.mxu0 0
    %594 = vmatprep.subr.bf16.mxu0 0
    %595 = vmatpush1.bf16.msra.mxu0 0
    %596 = vmatprep.mubr.bf16.mxu0 0
    %597 = vmatmul.mubr.bf16.gmra.mrb[0].mxu0 %v128
    %v598 = vpop.f32.mrb[0].mxu0
    %v599 = vadd.f32 %v486, %v598
    %v600 = vpop.f32.mrb[0].mxu0
    %v601 = vadd.f32 %v488, %v600
    %v602 = vpop.f32.mrb[0].mxu0
    %v603 = vadd.f32 %v490, %v602
    %v604 = vpop.f32.mrb[0].mxu0
    %v605 = vadd.f32 %v492, %v604
    %606 = vmatprep.mubr.bf16.mxu0 0
    %607 = vmatmul.mubr.bf16.gmra.mrb[0].mxu0 %v131
    %v608 = vpop.f32.mrb[0].mxu0
    %v609 = vadd.f32 %v496, %v608
    %v610 = vpop.f32.mrb[0].mxu0
    %v611 = vadd.f32 %v498, %v610
    %v612 = vpop.f32.mrb[0].mxu0
    %v613 = vadd.f32 %v500, %v612
    %v614 = vpop.f32.mrb[0].mxu0
    %v615 = vadd.f32 %v502, %v614
    %616 = vmatprep.mubr.bf16.mxu0 0
    %617 = vmatmul.mubr.bf16.gmra.mrb[0].mxu0 %v134
    %v618 = vpop.f32.mrb[0].mxu0
    %v619 = vadd.f32 %v506, %v618
    %v620 = vpop.f32.mrb[0].mxu0
    %v621 = vadd.f32 %v508, %v620
    %v622 = vpop.f32.mrb[0].mxu0
    %v623 = vadd.f32 %v510, %v622
    %v624 = vpop.f32.mrb[0].mxu0
    %v625 = vadd.f32 %v512, %v624
    %626 = vmatprep.mubr.bf16.mxu0 0
    %627 = vmatmul.mubr.bf16.gmra.mrb[0].mxu0 %v137
    %v628 = vpop.f32.mrb[0].mxu0
    %v629 = vadd.f32 %v516, %v628
    %v630 = vpop.f32.mrb[0].mxu0
    %v631 = vadd.f32 %v518, %v630
    %v632 = vpop.f32.mrb[0].mxu0
    %v633 = vadd.f32 %v520, %v632
    %v634 = vpop.f32.mrb[0].mxu0
    %v635 = vadd.f32 %v522, %v634
    %636 = vmatprep.mubr.bf16.mxu0 0
    %637 = vmatmul.mubr.bf16.gmra.mrb[0].mxu0 %v140
    %v638 = vpop.f32.mrb[0].mxu0
    %v639 = vadd.f32 %v526, %v638
    %v640 = vpop.f32.mrb[0].mxu0
    %v641 = vadd.f32 %v528, %v640
    %v642 = vpop.f32.mrb[0].mxu0
    %v643 = vadd.f32 %v530, %v642
    %v644 = vpop.f32.mrb[0].mxu0
    %v645 = vadd.f32 %v532, %v644
    %646 = vmatprep.mubr.bf16.mxu0 0
    %647 = vmatmul.mubr.bf16.gmra.mrb[0].mxu0 %v143
    %v648 = vpop.f32.mrb[0].mxu0
    %v649 = vadd.f32 %v536, %v648
    %v650 = vpop.f32.mrb[0].mxu0
    %v651 = vadd.f32 %v538, %v650
    %v652 = vpop.f32.mrb[0].mxu0
    %v653 = vadd.f32 %v540, %v652
    %v654 = vpop.f32.mrb[0].mxu0
    %v655 = vadd.f32 %v542, %v654
    %656 = vmatprep.mubr.bf16.mxu0 0
    %657 = vmatmul.mubr.bf16.gmra.mrb[0].mxu0 %v146
    %v658 = vpop.f32.mrb[0].mxu0
    %v659 = vadd.f32 %v546, %v658
    %v660 = vpop.f32.mrb[0].mxu0
    %v661 = vadd.f32 %v548, %v660
    %v662 = vpop.f32.mrb[0].mxu0
    %v663 = vadd.f32 %v550, %v662
    %v664 = vpop.f32.mrb[0].mxu0
    %v665 = vadd.f32 %v552, %v664
    %666 = vmatprep.mubr.bf16.mxu0 0
    %667 = vmatmul.mubr.bf16.gmra.mrb[0].mxu0 %v149
    %v668 = vpop.f32.mrb[0].mxu0
    %v669 = vadd.f32 %v556, %v668
    %v670 = vpop.f32.mrb[0].mxu0
    %v671 = vadd.f32 %v558, %v670
    %v672 = vpop.f32.mrb[0].mxu0
    %v673 = vadd.f32 %v560, %v672
    %v674 = vpop.f32.mrb[0].mxu0
    %v675 = vadd.f32 %v562, %v674
    %676 = vdwg.mxu0
    %v677 = vsub.f32 0.0, %v599
    %v678 = vsub.f32 0.0, %v601
    %v679 = vsub.f32 0.0, %v603
    %v680 = vsub.f32 0.0, %v605
    %v681 = vsub.f32 0.0, %v609
    %v682 = vsub.f32 0.0, %v611
    %v683 = vsub.f32 0.0, %v613
    %v684 = vsub.f32 0.0, %v615
    %v685 = vsub.f32 0.0, %v619
    %v686 = vsub.f32 0.0, %v621
    %v687 = vsub.f32 0.0, %v623
    %v688 = vsub.f32 0.0, %v625
    %v689 = vsub.f32 0.0, %v629
    %v690 = vsub.f32 0.0, %v631
    %v691 = vsub.f32 0.0, %v633
    %v692 = vsub.f32 0.0, %v635
    %v693 = vsub.f32 0.0, %v639
    %v694 = vsub.f32 0.0, %v641
    %v695 = vsub.f32 0.0, %v643
    %v696 = vsub.f32 0.0, %v645
    %v697 = vsub.f32 0.0, %v649
    %v698 = vsub.f32 0.0, %v651
    %v699 = vsub.f32 0.0, %v653
    %v700 = vsub.f32 0.0, %v655
    %v701 = vsub.f32 0.0, %v659
    %v702 = vsub.f32 0.0, %v661
    %v703 = vsub.f32 0.0, %v663
    %v704 = vsub.f32 0.0, %v665
    %v705 = vsub.f32 0.0, %v669
    %v706 = vsub.f32 0.0, %v671
    %v707 = vsub.f32 0.0, %v673
    %v708 = vsub.f32 0.0, %v675
    %v709 = vpack.c.bf16 %v679, %v677
    %v710 = vpack.c.bf16 %v680, %v678
    %v711 = vpack.c.bf16 %v683, %v681
    %v712 = vpack.c.bf16 %v684, %v682
    %v713 = vpack.c.bf16 %v687, %v685
    %v714 = vpack.c.bf16 %v688, %v686
    %v715 = vpack.c.bf16 %v691, %v689
    %v716 = vpack.c.bf16 %v692, %v690
    %v717 = vpack.c.bf16 %v695, %v693
    %v718 = vpack.c.bf16 %v696, %v694
    %v719 = vpack.c.bf16 %v699, %v697
    %v720 = vpack.c.bf16 %v700, %v698
    %v721 = vpack.c.bf16 %v703, %v701
    %v722 = vpack.c.bf16 %v704, %v702
    %v723 = vpack.c.bf16 %v707, %v705
    %v724 = vpack.c.bf16 %v708, %v706
    %v726 = vmul.bf16 %v709, 1069105081
    %v727 = vpow.bf16.pop %v726
    %v729 = vmul.bf16 %v710, 1069105081
    %v730 = vpow.bf16.pop %v729
    %v732 = vmul.bf16 %v711, 1069105081
    %v733 = vpow.bf16.pop %v732
    %v735 = vmul.bf16 %v712, 1069105081
    %v736 = vpow.bf16.pop %v735
    %v738 = vmul.bf16 %v713, 1069105081
    %v739 = vpow.bf16.pop %v738
    %v741 = vmul.bf16 %v714, 1069105081
    %v742 = vpow.bf16.pop %v741
    %v744 = vmul.bf16 %v715, 1069105081
    %v745 = vpow.bf16.pop %v744
    %v747 = vmul.bf16 %v716, 1069105081
    %v748 = vpow.bf16.pop %v747
    %v750 = vmul.bf16 %v717, 1069105081
    %v751 = vpow.bf16.pop %v750
    %v753 = vmul.bf16 %v718, 1069105081
    %v754 = vpow.bf16.pop %v753
    %v756 = vmul.bf16 %v719, 1069105081
    %v757 = vpow.bf16.pop %v756
    %v759 = vmul.bf16 %v720, 1069105081
    %v760 = vpow.bf16.pop %v759
    %v762 = vmul.bf16 %v721, 1069105081
    %v763 = vpow.bf16.pop %v762
    %v765 = vmul.bf16 %v722, 1069105081
    %v766 = vpow.bf16.pop %v765
    %v768 = vmul.bf16 %v723, 1069105081
    %v769 = vpow.bf16.pop %v768
    %v771 = vmul.bf16 %v724, 1069105081
    %v772 = vpow.bf16.pop %v771
    %v773 = vunpack.c.l.bf16 %v727
    %v774 = vunpack.c.l.bf16 %v730
    %v775 = vunpack.c.h.bf16 %v727
    %v776 = vunpack.c.h.bf16 %v730
    %v777 = vunpack.c.l.bf16 %v733
    %v778 = vunpack.c.l.bf16 %v736
    %v779 = vunpack.c.h.bf16 %v733
    %v780 = vunpack.c.h.bf16 %v736
    %v781 = vunpack.c.l.bf16 %v739
    %v782 = vunpack.c.l.bf16 %v742
    %v783 = vunpack.c.h.bf16 %v739
    %v784 = vunpack.c.h.bf16 %v742
    %v785 = vunpack.c.l.bf16 %v745
    %v786 = vunpack.c.l.bf16 %v748
    %v787 = vunpack.c.h.bf16 %v745
    %v788 = vunpack.c.h.bf16 %v748
    %v789 = vunpack.c.l.bf16 %v751
    %v790 = vunpack.c.l.bf16 %v754
    %v791 = vunpack.c.h.bf16 %v751
    %v792 = vunpack.c.h.bf16 %v754
    %v793 = vunpack.c.l.bf16 %v757
    %v794 = vunpack.c.l.bf16 %v760
    %v795 = vunpack.c.h.bf16 %v757
    %v796 = vunpack.c.h.bf16 %v760
    %v797 = vunpack.c.l.bf16 %v763
    %v798 = vunpack.c.l.bf16 %v766
    %v799 = vunpack.c.h.bf16 %v763
    %v800 = vunpack.c.h.bf16 %v766
    %v801 = vunpack.c.l.bf16 %v769
    %v802 = vunpack.c.l.bf16 %v772
    %v803 = vunpack.c.h.bf16 %v769
    %v804 = vunpack.c.h.bf16 %v772
    %v805 = vadd.f32 %v773, 1.0
    %v806 = vadd.f32 %v774, 1.0
    %v807 = vadd.f32 %v775, 1.0
    %v808 = vadd.f32 %v776, 1.0
    %v809 = vadd.f32 %v777, 1.0
    %v810 = vadd.f32 %v778, 1.0
    %v811 = vadd.f32 %v779, 1.0
    %v812 = vadd.f32 %v780, 1.0
    %v813 = vadd.f32 %v781, 1.0
    %v814 = vadd.f32 %v782, 1.0
    %v815 = vadd.f32 %v783, 1.0
    %v816 = vadd.f32 %v784, 1.0
    %v817 = vadd.f32 %v785, 1.0
    %v818 = vadd.f32 %v786, 1.0
    %v819 = vadd.f32 %v787, 1.0
    %v820 = vadd.f32 %v788, 1.0
    %v821 = vadd.f32 %v789, 1.0
    %v822 = vadd.f32 %v790, 1.0
    %v823 = vadd.f32 %v791, 1.0
    %v824 = vadd.f32 %v792, 1.0
    %v825 = vadd.f32 %v793, 1.0
    %v826 = vadd.f32 %v794, 1.0
    %v827 = vadd.f32 %v795, 1.0
    %v828 = vadd.f32 %v796, 1.0
    %v829 = vadd.f32 %v797, 1.0
    %v830 = vadd.f32 %v798, 1.0
    %v831 = vadd.f32 %v799, 1.0
    %v832 = vadd.f32 %v800, 1.0
    %v833 = vadd.f32 %v801, 1.0
    %v834 = vadd.f32 %v802, 1.0
    %v835 = vadd.f32 %v803, 1.0
    %v836 = vadd.f32 %v804, 1.0
    %v837 = vrcp.pop %v805
    %v838 = vrcp.pop %v806
    %v839 = vrcp.pop %v807
    %v840 = vrcp.pop %v808
    %v841 = vrcp.pop %v809
    %v842 = vrcp.pop %v810
    %v843 = vrcp.pop %v811
    %v844 = vrcp.pop %v812
    %v845 = vrcp.pop %v813
    %v846 = vrcp.pop %v814
    %v847 = vrcp.pop %v815
    %v848 = vrcp.pop %v816
    %v849 = vrcp.pop %v817
    %v850 = vrcp.pop %v818
    %v851 = vrcp.pop %v819
    %v852 = vrcp.pop %v820
    %v853 = vrcp.pop %v821
    %v854 = vrcp.pop %v822
    %v855 = vrcp.pop %v823
    %v856 = vrcp.pop %v824
    %v857 = vrcp.pop %v825
    %v858 = vrcp.pop %v826
    %v859 = vrcp.pop %v827
    %v860 = vrcp.pop %v828
    %v861 = vrcp.pop %v829
    %v862 = vrcp.pop %v830
    %v863 = vrcp.pop %v831
    %v864 = vrcp.pop %v832
    %v865 = vrcp.pop %v833
    %v866 = vrcp.pop %v834
    %v867 = vrcp.pop %v835
    %v868 = vrcp.pop %v836
    %v869 = vmul.f32 %v599, %v837
    %v870 = vmul.f32 %v601, %v838
    %v871 = vmul.f32 %v603, %v839
    %v872 = vmul.f32 %v605, %v840
    %v873 = vmul.f32 %v609, %v841
    %v874 = vmul.f32 %v611, %v842
    %v875 = vmul.f32 %v613, %v843
    %v876 = vmul.f32 %v615, %v844
    %v877 = vmul.f32 %v619, %v845
    %v878 = vmul.f32 %v621, %v846
    %v879 = vmul.f32 %v623, %v847
    %v880 = vmul.f32 %v625, %v848
    %v881 = vmul.f32 %v629, %v849
    %v882 = vmul.f32 %v631, %v850
    %v883 = vmul.f32 %v633, %v851
    %v884 = vmul.f32 %v635, %v852
    %v885 = vmul.f32 %v639, %v853
    %v886 = vmul.f32 %v641, %v854
    %v887 = vmul.f32 %v643, %v855
    %v888 = vmul.f32 %v645, %v856
    %v889 = vmul.f32 %v649, %v857
    %v890 = vmul.f32 %v651, %v858
    %v891 = vmul.f32 %v653, %v859
    %v892 = vmul.f32 %v655, %v860
    %v893 = vmul.f32 %v659, %v861
    %v894 = vmul.f32 %v661, %v862
    %v895 = vmul.f32 %v663, %v863
    %v896 = vmul.f32 %v665, %v864
    %v897 = vmul.f32 %v669, %v865
    %v898 = vmul.f32 %v671, %v866
    %v899 = vmul.f32 %v673, %v867
    %v900 = vmul.f32 %v675, %v868
    %v901 = vpack.c.bf16 %v871, %v869
    %v902 = vpack.c.bf16 %v872, %v870
    %v903 = vpack.c.bf16 %v875, %v873
    %v904 = vpack.c.bf16 %v876, %v874
    %v905 = vpack.c.bf16 %v879, %v877
    %v906 = vpack.c.bf16 %v880, %v878
    %v907 = vpack.c.bf16 %v883, %v881
    %v908 = vpack.c.bf16 %v884, %v882
    %v909 = vpack.c.bf16 %v887, %v885
    %v910 = vpack.c.bf16 %v888, %v886
    %v911 = vpack.c.bf16 %v891, %v889
    %v912 = vpack.c.bf16 %v892, %v890
    %v913 = vpack.c.bf16 %v895, %v893
    %v914 = vpack.c.bf16 %v896, %v894
    %v915 = vpack.c.bf16 %v899, %v897
    %v916 = vpack.c.bf16 %v900, %v898
    %917 = vmatprep.subr.bf16.mxu0 %v902
    %918 = vmatpush1.bf16.msra.mxu0 %v901
    %919 = vmatprep.subr.bf16.mxu0 %v904
    %920 = vmatpush1.bf16.msra.mxu0 %v903
    %921 = vmatprep.subr.bf16.mxu0 %v906
    %922 = vmatpush1.bf16.msra.mxu0 %v905
    %923 = vmatprep.subr.bf16.mxu0 %v908
    %924 = vmatpush1.bf16.msra.mxu0 %v907
    %925 = vmatprep.subr.bf16.mxu0 %v910
    %926 = vmatpush1.bf16.msra.mxu0 %v909
    %927 = vmatprep.subr.bf16.mxu0 %v912
    %928 = vmatpush1.bf16.msra.mxu0 %v911
    %929 = vmatprep.subr.bf16.mxu0 %v914
    %930 = vmatpush1.bf16.msra.mxu0 %v913
    %931 = vmatprep.subr.bf16.mxu0 %v916
    %932 = vmatpush1.bf16.msra.mxu0 %v915
    %933 = vmatprep.subr.bf16.mxu0 0
    %934 = vmatpush1.bf16.msra.mxu0 0
    %935 = vmatprep.subr.bf16.mxu0 0
    %936 = vmatpush1.bf16.msra.mxu0 0
    %937 = vmatprep.subr.bf16.mxu0 0
    %938 = vmatpush1.bf16.msra.mxu0 0
    %939 = vmatprep.subr.bf16.mxu0 0
    %940 = vmatpush1.bf16.msra.mxu0 0
    %941 = vmatprep.subr.bf16.mxu0 0
    %942 = vmatpush1.bf16.msra.mxu0 0
    %943 = vmatprep.subr.bf16.mxu0 0
    %944 = vmatpush1.bf16.msra.mxu0 0
    %945 = vmatprep.subr.bf16.mxu0 0
    %946 = vmatpush1.bf16.msra.mxu0 0
    %947 = vmatprep.subr.bf16.mxu0 0
    %948 = vmatpush1.bf16.msra.mxu0 0
    %949 = vmatprep.mubr.bf16.mxu0 0
    %950 = vmatmul.mubr.bf16.gmra.mrb[0].mxu0 %v150
    %v951 = vpop.f32.mrb[0].mxu0
    %v952 = vadd.f32 0.0, %v951
    %v953 = vpop.f32.mrb[0].mxu0
    %v954 = vadd.f32 0.0, %v953
    %v955 = vpop.f32.mrb[0].mxu0
    %v956 = vpop.f32.mrb[0].mxu0
    %957 = vdwg.mxu0
    %v958 = vmul.f32 %v952, 0.015625
    %v959 = vmul.f32 %v954, 0.015625
    %v960 = vld [vmem:[#allocation5 + $0x8] sm:$0xff]
    %v961 = vld [vmem:[#allocation5 + $0x30] sm:$0xff]
    %v962 = vld [vmem:[#allocation5 + $0x58] sm:$0xff]
    %v963 = vld [vmem:[#allocation5 + $0x80] sm:$0xff]
    %v964 = vld [vmem:[#allocation5 + $0xa8] sm:$0xff]
    %v965 = vld [vmem:[#allocation5 + $0xd0] sm:$0xff]
    %v966 = vld [vmem:[#allocation5 + $0xf8] sm:$0xff]
    %v967 = vld [vmem:[#allocation5 + $0x120] sm:$0xff]
    %v968 = vld [vmem:[#allocation5 + $0x148] sm:$0xff]
    %v969 = vld [vmem:[#allocation5 + $0x170] sm:$0xff]
    %v970 = vld [vmem:[#allocation5 + $0x198] sm:$0xff]
    %v971 = vld [vmem:[#allocation5 + $0x1c0] sm:$0xff]
    %v972 = vld [vmem:[#allocation5 + $0x1e8] sm:$0xff]
    %v973 = vld [vmem:[#allocation5 + $0x210] sm:$0xff]
    %v974 = vld [vmem:[#allocation5 + $0x238] sm:$0xff]
    %v975 = vld [vmem:[#allocation5 + $0x260] sm:$0xff]
    %v976 = vld [vmem:[#allocation5 + $0x288] sm:$0xff]
    %v977 = vld [vmem:[#allocation5 + $0x2b0] sm:$0xff]
    %v978 = vld [vmem:[#allocation5 + $0x2d8] sm:$0xff]
    %v979 = vld [vmem:[#allocation5 + $0x300] sm:$0xff]
    %v980 = vld [vmem:[#allocation5 + $0x328] sm:$0xff]
    %v981 = vld [vmem:[#allocation5 + $0x350] sm:$0xff]
    %v982 = vld [vmem:[#allocation5 + $0x378] sm:$0xff]
    %v983 = vld [vmem:[#allocation5 + $0x3a0] sm:$0xff]
    %v984 = vld [vmem:[#allocation5 + $0x3c8] sm:$0xff]
    %v985 = vld [vmem:[#allocation5 + $0x3f0] sm:$0xff]
    %v986 = vld [vmem:[#allocation5 + $0x418] sm:$0xff]
    %v987 = vld [vmem:[#allocation5 + $0x440] sm:$0xff]
    %v988 = vld [vmem:[#allocation5 + $0x468] sm:$0xff]
    %v989 = vld [vmem:[#allocation5 + $0x490] sm:$0xff]
    %v990 = vld [vmem:[#allocation5 + $0x4b8] sm:$0xff]
    %v991 = vld [vmem:[#allocation5 + $0x4e0] sm:$0xff]
    %v992 = vld [vmem:[#allocation5 + $0x508] sm:$0xff]
    %v993 = vld [vmem:[#allocation5 + $0x530] sm:$0xff]
    %v994 = vld [vmem:[#allocation5 + $0x558] sm:$0xff]
    %v995 = vld [vmem:[#allocation5 + $0x580] sm:$0xff]
    %v996 = vld [vmem:[#allocation5 + $0x5a8] sm:$0xff]
    %v997 = vld [vmem:[#allocation5 + $0x5d0] sm:$0xff]
    %v998 = vld [vmem:[#allocation5 + $0x5f8] sm:$0xff]
    %v999 = vld [vmem:[#allocation5 + $0x620] sm:$0xff]
    %v1000 = vld [vmem:[#allocation5 + $0x648] sm:$0xff]
    %v1001 = vld [vmem:[#allocation5 + $0x670] sm:$0xff]
    %v1002 = vld [vmem:[#allocation5 + $0x698] sm:$0xff]
    %v1003 = vld [vmem:[#allocation5 + $0x6c0] sm:$0xff]
    %v1004 = vld [vmem:[#allocation5 + $0x6e8] sm:$0xff]
    %v1005 = vld [vmem:[#allocation5 + $0x710] sm:$0xff]
    %v1006 = vld [vmem:[#allocation5 + $0x738] sm:$0xff]
    %v1007 = vld [vmem:[#allocation5 + $0x760] sm:$0xff]
    %v1008 = vld [vmem:[#allocation7 + $0x2] sm:$0x3]
    %v1010 = vlaneseq
    %v1011 = vshrl.u32 %v1010, 7
    %v1012 = vsub.s32 0, %v1011
    %v1013 = vrot.slane %v1008, %v1012
    %v1014 = vlaneseq
    %v1015 = vshrl.u32 %v1014, 7
    %v1016 = vsub.s32 1, %v1015
    %v1017 = vrot.slane %v1008, %v1016
    %v1068 = vunpack.c.l.b16 %v960
    %v1069 = vunpack.c.h.b16 %v960
    %v1070 = vunpack.c.l.b16 %v961
    %v1071 = vunpack.c.h.b16 %v961
    %v1072 = vunpack.c.l.b16 %v962
    %v1073 = vunpack.c.h.b16 %v962
    %v1074 = vunpack.c.l.b16 %v963
    %v1075 = vunpack.c.h.b16 %v963
    %v1076 = vunpack.c.l.b16 %v964
    %v1077 = vunpack.c.h.b16 %v964
    %v1078 = vunpack.c.l.b16 %v965
    %v1079 = vunpack.c.h.b16 %v965
    %v1080 = vunpack.c.l.b16 %v966
    %v1081 = vunpack.c.h.b16 %v966
    %v1082 = vunpack.c.l.b16 %v967
    %v1083 = vunpack.c.h.b16 %v967
    %v1084 = vunpack.c.l.b16 %v968
    %v1085 = vunpack.c.h.b16 %v968
    %v1086 = vunpack.c.l.b16 %v969
    %v1087 = vunpack.c.h.b16 %v969
    %v1088 = vunpack.c.l.b16 %v970
    %v1089 = vunpack.c.h.b16 %v970
    %v1090 = vunpack.c.l.b16 %v971
    %v1091 = vunpack.c.h.b16 %v971
    %v1092 = vunpack.c.l.b16 %v972
    %v1093 = vunpack.c.h.b16 %v972
    %v1094 = vunpack.c.l.b16 %v973
    %v1095 = vunpack.c.h.b16 %v973
    %v1096 = vunpack.c.l.b16 %v974
    %v1097 = vunpack.c.h.b16 %v974
    %v1098 = vunpack.c.l.b16 %v975
    %v1099 = vunpack.c.h.b16 %v975
    %v1100 = vunpack.c.l.b16 %v976
    %v1101 = vunpack.c.h.b16 %v976
    %v1102 = vunpack.c.l.b16 %v977
    %v1103 = vunpack.c.h.b16 %v977
    %v1104 = vunpack.c.l.b16 %v978
    %v1105 = vunpack.c.h.b16 %v978
    %v1106 = vunpack.c.l.b16 %v979
    %v1107 = vunpack.c.h.b16 %v979
    %v1108 = vunpack.c.l.b16 %v980
    %v1109 = vunpack.c.h.b16 %v980
    %v1110 = vunpack.c.l.b16 %v981
    %v1111 = vunpack.c.h.b16 %v981
    %v1112 = vunpack.c.l.b16 %v982
    %v1113 = vunpack.c.h.b16 %v982
    %v1114 = vunpack.c.l.b16 %v983
    %v1115 = vunpack.c.h.b16 %v983
    %v1116 = vunpack.c.l.b16 %v984
    %v1117 = vunpack.c.h.b16 %v984
    %v1118 = vunpack.c.l.b16 %v985
    %v1119 = vunpack.c.h.b16 %v985
    %v1120 = vunpack.c.l.b16 %v986
    %v1121 = vunpack.c.h.b16 %v986
    %v1122 = vunpack.c.l.b16 %v987
    %v1123 = vunpack.c.h.b16 %v987
    %v1124 = vunpack.c.l.b16 %v988
    %v1125 = vunpack.c.h.b16 %v988
    %v1126 = vunpack.c.l.b16 %v989
    %v1127 = vunpack.c.h.b16 %v989
    %v1128 = vunpack.c.l.b16 %v990
    %v1129 = vunpack.c.h.b16 %v990
    %v1130 = vunpack.c.l.b16 %v991
    %v1131 = vunpack.c.h.b16 %v991
    %v1132 = vunpack.c.l.b16 %v992
    %v1133 = vunpack.c.h.b16 %v992
    %v1134 = vunpack.c.l.b16 %v993
    %v1135 = vunpack.c.h.b16 %v993
    %v1136 = vunpack.c.l.b16 %v994
    %v1137 = vunpack.c.h.b16 %v994
    %v1138 = vunpack.c.l.b16 %v995
    %v1139 = vunpack.c.h.b16 %v995
    %v1140 = vunpack.c.l.b16 %v996
    %v1141 = vunpack.c.h.b16 %v996
    %v1142 = vunpack.c.l.b16 %v997
    %v1143 = vunpack.c.h.b16 %v997
    %v1144 = vunpack.c.l.b16 %v998
    %v1145 = vunpack.c.h.b16 %v998
    %v1146 = vunpack.c.l.b16 %v999
    %v1147 = vunpack.c.h.b16 %v999
    %v1148 = vunpack.c.l.b16 %v1000
    %v1149 = vunpack.c.h.b16 %v1000
    %v1150 = vunpack.c.l.b16 %v1001
    %v1151 = vunpack.c.h.b16 %v1001
    %v1152 = vunpack.c.l.b16 %v1002
    %v1153 = vunpack.c.h.b16 %v1002
    %v1154 = vunpack.c.l.b16 %v1003
    %v1155 = vunpack.c.h.b16 %v1003
    %v1156 = vunpack.c.l.b16 %v1004
    %v1157 = vunpack.c.h.b16 %v1004
    %v1158 = vunpack.c.l.b16 %v1005
    %v1159 = vunpack.c.h.b16 %v1005
    %v1160 = vunpack.c.l.b16 %v1006
    %v1161 = vunpack.c.h.b16 %v1006
    %v1162 = vunpack.c.l.b16 %v1007
    %v1163 = vunpack.c.h.b16 %v1007
    %v1164 = vpack.c.b16 %v1070, %v1068
    %v1165 = vpack.c.b16 %v1071, %v1069
    %v1166 = vpack.c.b16 %v1074, %v1072
    %v1167 = vpack.c.b16 %v1075, %v1073
    %v1168 = vpack.c.b16 %v1078, %v1076
    %v1169 = vpack.c.b16 %v1079, %v1077
    %v1170 = vpack.c.b16 %v1082, %v1080
    %v1171 = vpack.c.b16 %v1083, %v1081
    %v1172 = vpack.c.b16 %v1086, %v1084
    %v1173 = vpack.c.b16 %v1087, %v1085
    %v1174 = vpack.c.b16 %v1090, %v1088
    %v1175 = vpack.c.b16 %v1091, %v1089
    %v1176 = vpack.c.b16 %v1094, %v1092
    %v1177 = vpack.c.b16 %v1095, %v1093
    %v1178 = vpack.c.b16 %v1098, %v1096
    %v1179 = vpack.c.b16 %v1099, %v1097
    %v1180 = vpack.c.b16 %v1102, %v1100
    %v1181 = vpack.c.b16 %v1103, %v1101
    %v1182 = vpack.c.b16 %v1106, %v1104
    %v1183 = vpack.c.b16 %v1107, %v1105
    %v1184 = vpack.c.b16 %v1110, %v1108
    %v1185 = vpack.c.b16 %v1111, %v1109
    %v1186 = vpack.c.b16 %v1114, %v1112
    %v1187 = vpack.c.b16 %v1115, %v1113
    %v1188 = vpack.c.b16 %v1118, %v1116
    %v1189 = vpack.c.b16 %v1119, %v1117
    %v1190 = vpack.c.b16 %v1122, %v1120
    %v1191 = vpack.c.b16 %v1123, %v1121
    %v1192 = vpack.c.b16 %v1126, %v1124
    %v1193 = vpack.c.b16 %v1127, %v1125
    %v1194 = vpack.c.b16 %v1130, %v1128
    %v1195 = vpack.c.b16 %v1131, %v1129
    %v1196 = vpack.c.b16 %v1134, %v1132
    %v1197 = vpack.c.b16 %v1135, %v1133
    %v1198 = vpack.c.b16 %v1138, %v1136
    %v1199 = vpack.c.b16 %v1139, %v1137
    %v1200 = vpack.c.b16 %v1142, %v1140
    %v1201 = vpack.c.b16 %v1143, %v1141
    %v1202 = vpack.c.b16 %v1146, %v1144
    %v1203 = vpack.c.b16 %v1147, %v1145
    %v1204 = vpack.c.b16 %v1150, %v1148
    %v1205 = vpack.c.b16 %v1151, %v1149
    %v1206 = vpack.c.b16 %v1154, %v1152
    %v1207 = vpack.c.b16 %v1155, %v1153
    %v1208 = vpack.c.b16 %v1158, %v1156
    %v1209 = vpack.c.b16 %v1159, %v1157
    %v1210 = vpack.c.b16 %v1162, %v1160
    %v1211 = vpack.c.b16 %v1163, %v1161
    %1260 = vmatprep.subr.bf16.mxu0 %v1165
    %1261 = vmatpush1.bf16.msra.mxu0 %v1164
    %1262 = vmatprep.subr.bf16.mxu0 %v1167
    %1263 = vmatpush1.bf16.msra.mxu0 %v1166
    %1264 = vmatprep.subr.bf16.mxu0 %v1169
    %1265 = vmatpush1.bf16.msra.mxu0 %v1168
    %1266 = vmatprep.subr.bf16.mxu0 %v1171
    %1267 = vmatpush1.bf16.msra.mxu0 %v1170
    %1268 = vmatprep.subr.bf16.mxu0 %v1173
    %1269 = vmatpush1.bf16.msra.mxu0 %v1172
    %1270 = vmatprep.subr.bf16.mxu0 %v1175
    %1271 = vmatpush1.bf16.msra.mxu0 %v1174
    %1272 = vmatprep.subr.bf16.mxu0 %v1177
    %1273 = vmatpush1.bf16.msra.mxu0 %v1176
    %1274 = vmatprep.subr.bf16.mxu0 %v1179
    %1275 = vmatpush1.bf16.msra.mxu0 %v1178
    %1276 = vmatprep.subr.bf16.mxu0 %v1181
    %1277 = vmatpush1.bf16.msra.mxu0 %v1180
    %1278 = vmatprep.subr.bf16.mxu0 %v1183
    %1279 = vmatpush1.bf16.msra.mxu0 %v1182
    %1280 = vmatprep.subr.bf16.mxu0 %v1185
    %1281 = vmatpush1.bf16.msra.mxu0 %v1184
    %1282 = vmatprep.subr.bf16.mxu0 %v1187
    %1283 = vmatpush1.bf16.msra.mxu0 %v1186
    %1284 = vmatprep.subr.bf16.mxu0 %v1189
    %1285 = vmatpush1.bf16.msra.mxu0 %v1188
    %1286 = vmatprep.subr.bf16.mxu0 %v1191
    %1287 = vmatpush1.bf16.msra.mxu0 %v1190
    %1288 = vmatprep.subr.bf16.mxu0 %v1193
    %1289 = vmatpush1.bf16.msra.mxu0 %v1192
    %1290 = vmatprep.subr.bf16.mxu0 %v1195
    %1291 = vmatpush1.bf16.msra.mxu0 %v1194
    %1292 = vmatprep.mubr.bf16.mxu0 %v127
    %1293 = vmatmul.mubr.bf16.gmra.mrb[0].mxu0 %v126
    %v1294 = vpop.f32.mrb[0].mxu0
    %v1295 = vadd.f32 %v1013, %v1294
    %v1296 = vpop.f32.mrb[0].mxu0
    %v1297 = vadd.f32 %v1017, %v1296
    %v1298 = vpop.f32.mrb[0].mxu0
    %v1299 = vadd.f32 %v1013, %v1298
    %v1300 = vpop.f32.mrb[0].mxu0
    %v1301 = vadd.f32 %v1017, %v1300
    %1302 = vmatprep.mubr.bf16.mxu0 %v130
    %1303 = vmatmul.mubr.bf16.gmra.mrb[0].mxu0 %v129
    %v1304 = vpop.f32.mrb[0].mxu0
    %v1305 = vadd.f32 %v1013, %v1304
    %v1306 = vpop.f32.mrb[0].mxu0
    %v1307 = vadd.f32 %v1017, %v1306
    %v1308 = vpop.f32.mrb[0].mxu0
    %v1309 = vadd.f32 %v1013, %v1308
    %v1310 = vpop.f32.mrb[0].mxu0
    %v1311 = vadd.f32 %v1017, %v1310
    %1312 = vmatprep.mubr.bf16.mxu0 %v133
    %1313 = vmatmul.mubr.bf16.gmra.mrb[0].mxu0 %v132
    %v1314 = vpop.f32.mrb[0].mxu0
    %v1315 = vadd.f32 %v1013, %v1314
    %v1316 = vpop.f32.mrb[0].mxu0
    %v1317 = vadd.f32 %v1017, %v1316
    %v1318 = vpop.f32.mrb[0].mxu0
    %v1319 = vadd.f32 %v1013, %v1318
    %v1320 = vpop.f32.mrb[0].mxu0
    %v1321 = vadd.f32 %v1017, %v1320
    %1322 = vmatprep.mubr.bf16.mxu0 %v136
    %1323 = vmatmul.mubr.bf16.gmra.mrb[0].mxu0 %v135
    %v1324 = vpop.f32.mrb[0].mxu0
    %v1325 = vadd.f32 %v1013, %v1324
    %v1326 = vpop.f32.mrb[0].mxu0
    %v1327 = vadd.f32 %v1017, %v1326
    %v1328 = vpop.f32.mrb[0].mxu0
    %v1329 = vadd.f32 %v1013, %v1328
    %v1330 = vpop.f32.mrb[0].mxu0
    %v1331 = vadd.f32 %v1017, %v1330
    %1332 = vmatprep.mubr.bf16.mxu0 %v139
    %1333 = vmatmul.mubr.bf16.gmra.mrb[0].mxu0 %v138
    %v1334 = vpop.f32.mrb[0].mxu0
    %v1335 = vadd.f32 %v1013, %v1334
    %v1336 = vpop.f32.mrb[0].mxu0
    %v1337 = vadd.f32 %v1017, %v1336
    %v1338 = vpop.f32.mrb[0].mxu0
    %v1339 = vadd.f32 %v1013, %v1338
    %v1340 = vpop.f32.mrb[0].mxu0
    %v1341 = vadd.f32 %v1017, %v1340
    %1342 = vmatprep.mubr.bf16.mxu0 %v142
    %1343 = vmatmul.mubr.bf16.gmra.mrb[0].mxu0 %v141
    %v1344 = vpop.f32.mrb[0].mxu0
    %v1345 = vadd.f32 %v1013, %v1344
    %v1346 = vpop.f32.mrb[0].mxu0
    %v1347 = vadd.f32 %v1017, %v1346
    %v1348 = vpop.f32.mrb[0].mxu0
    %v1349 = vadd.f32 %v1013, %v1348
    %v1350 = vpop.f32.mrb[0].mxu0
    %v1351 = vadd.f32 %v1017, %v1350
    %1352 = vmatprep.mubr.bf16.mxu0 %v145
    %1353 = vmatmul.mubr.bf16.gmra.mrb[0].mxu0 %v144
    %v1354 = vpop.f32.mrb[0].mxu0
    %v1355 = vadd.f32 %v1013, %v1354
    %v1356 = vpop.f32.mrb[0].mxu0
    %v1357 = vadd.f32 %v1017, %v1356
    %v1358 = vpop.f32.mrb[0].mxu0
    %v1359 = vadd.f32 %v1013, %v1358
    %v1360 = vpop.f32.mrb[0].mxu0
    %v1361 = vadd.f32 %v1017, %v1360
    %1362 = vmatprep.mubr.bf16.mxu0 %v148
    %1363 = vmatmul.mubr.bf16.gmra.mrb[0].mxu0 %v147
    %v1364 = vpop.f32.mrb[0].mxu0
    %v1365 = vadd.f32 %v1013, %v1364
    %v1366 = vpop.f32.mrb[0].mxu0
    %v1367 = vadd.f32 %v1017, %v1366
    %v1368 = vpop.f32.mrb[0].mxu0
    %v1369 = vadd.f32 %v1013, %v1368
    %v1370 = vpop.f32.mrb[0].mxu0
    %v1371 = vadd.f32 %v1017, %v1370
    %1372 = vdwg.mxu0
    %1373 = vmatprep.subr.bf16.mxu0 %v1197
    %1374 = vmatpush1.bf16.msra.mxu0 %v1196
    %1375 = vmatprep.subr.bf16.mxu0 %v1199
    %1376 = vmatpush1.bf16.msra.mxu0 %v1198
    %1377 = vmatprep.subr.bf16.mxu0 %v1201
    %1378 = vmatpush1.bf16.msra.mxu0 %v1200
    %1379 = vmatprep.subr.bf16.mxu0 %v1203
    %1380 = vmatpush1.bf16.msra.mxu0 %v1202
    %1381 = vmatprep.subr.bf16.mxu0 %v1205
    %1382 = vmatpush1.bf16.msra.mxu0 %v1204
    %1383 = vmatprep.subr.bf16.mxu0 %v1207
    %1384 = vmatpush1.bf16.msra.mxu0 %v1206
    %1385 = vmatprep.subr.bf16.mxu0 %v1209
    %1386 = vmatpush1.bf16.msra.mxu0 %v1208
    %1387 = vmatprep.subr.bf16.mxu0 %v1211
    %1388 = vmatpush1.bf16.msra.mxu0 %v1210
    %1389 = vmatprep.subr.bf16.mxu0 0
    %1390 = vmatpush1.bf16.msra.mxu0 0
    %1391 = vmatprep.subr.bf16.mxu0 0
    %1392 = vmatpush1.bf16.msra.mxu0 0
    %1393 = vmatprep.subr.bf16.mxu0 0
    %1394 = vmatpush1.bf16.msra.mxu0 0
    %1395 = vmatprep.subr.bf16.mxu0 0
    %1396 = vmatpush1.bf16.msra.mxu0 0
    %1397 = vmatprep.subr.bf16.mxu0 0
    %1398 = vmatpush1.bf16.msra.mxu0 0
    %1399 = vmatprep.subr.bf16.mxu0 0
    %1400 = vmatpush1.bf16.msra.mxu0 0
    %1401 = vmatprep.subr.bf16.mxu0 0
    %1402 = vmatpush1.bf16.msra.mxu0 0
    %1403 = vmatprep.subr.bf16.mxu0 0
    %1404 = vmatpush1.bf16.msra.mxu0 0
    %1405 = vmatprep.mubr.bf16.mxu0 0
    %1406 = vmatmul.mubr.bf16.gmra.mrb[0].mxu0 %v128
    %v1407 = vpop.f32.mrb[0].mxu0
    %v1408 = vadd.f32 %v1295, %v1407
    %v1409 = vpop.f32.mrb[0].mxu0
    %v1410 = vadd.f32 %v1297, %v1409
    %v1411 = vpop.f32.mrb[0].mxu0
    %v1412 = vadd.f32 %v1299, %v1411
    %v1413 = vpop.f32.mrb[0].mxu0
    %v1414 = vadd.f32 %v1301, %v1413
    %1415 = vmatprep.mubr.bf16.mxu0 0
    %1416 = vmatmul.mubr.bf16.gmra.mrb[0].mxu0 %v131
    %v1417 = vpop.f32.mrb[0].mxu0
    %v1418 = vadd.f32 %v1305, %v1417
    %v1419 = vpop.f32.mrb[0].mxu0
    %v1420 = vadd.f32 %v1307, %v1419
    %v1421 = vpop.f32.mrb[0].mxu0
    %v1422 = vadd.f32 %v1309, %v1421
    %v1423 = vpop.f32.mrb[0].mxu0
    %v1424 = vadd.f32 %v1311, %v1423
    %1425 = vmatprep.mubr.bf16.mxu0 0
    %1426 = vmatmul.mubr.bf16.gmra.mrb[0].mxu0 %v134
    %v1427 = vpop.f32.mrb[0].mxu0
    %v1428 = vadd.f32 %v1315, %v1427
    %v1429 = vpop.f32.mrb[0].mxu0
    %v1430 = vadd.f32 %v1317, %v1429
    %v1431 = vpop.f32.mrb[0].mxu0
    %v1432 = vadd.f32 %v1319, %v1431
    %v1433 = vpop.f32.mrb[0].mxu0
    %v1434 = vadd.f32 %v1321, %v1433
    %1435 = vmatprep.mubr.bf16.mxu0 0
    %1436 = vmatmul.mubr.bf16.gmra.mrb[0].mxu0 %v137
    %v1437 = vpop.f32.mrb[0].mxu0
    %v1438 = vadd.f32 %v1325, %v1437
    %v1439 = vpop.f32.mrb[0].mxu0
    %v1440 = vadd.f32 %v1327, %v1439
    %v1441 = vpop.f32.mrb[0].mxu0
    %v1442 = vadd.f32 %v1329, %v1441
    %v1443 = vpop.f32.mrb[0].mxu0
    %v1444 = vadd.f32 %v1331, %v1443
    %1445 = vmatprep.mubr.bf16.mxu0 0
    %1446 = vmatmul.mubr.bf16.gmra.mrb[0].mxu0 %v140
    %v1447 = vpop.f32.mrb[0].mxu0
    %v1448 = vadd.f32 %v1335, %v1447
    %v1449 = vpop.f32.mrb[0].mxu0
    %v1450 = vadd.f32 %v1337, %v1449
    %v1451 = vpop.f32.mrb[0].mxu0
    %v1452 = vadd.f32 %v1339, %v1451
    %v1453 = vpop.f32.mrb[0].mxu0
    %v1454 = vadd.f32 %v1341, %v1453
    %1455 = vmatprep.mubr.bf16.mxu0 0
    %1456 = vmatmul.mubr.bf16.gmra.mrb[0].mxu0 %v143
    %v1457 = vpop.f32.mrb[0].mxu0
    %v1458 = vadd.f32 %v1345, %v1457
    %v1459 = vpop.f32.mrb[0].mxu0
    %v1460 = vadd.f32 %v1347, %v1459
    %v1461 = vpop.f32.mrb[0].mxu0
    %v1462 = vadd.f32 %v1349, %v1461
    %v1463 = vpop.f32.mrb[0].mxu0
    %v1464 = vadd.f32 %v1351, %v1463
    %1465 = vmatprep.mubr.bf16.mxu0 0
    %1466 = vmatmul.mubr.bf16.gmra.mrb[0].mxu0 %v146
    %v1467 = vpop.f32.mrb[0].mxu0
    %v1468 = vadd.f32 %v1355, %v1467
    %v1469 = vpop.f32.mrb[0].mxu0
    %v1470 = vadd.f32 %v1357, %v1469
    %v1471 = vpop.f32.mrb[0].mxu0
    %v1472 = vadd.f32 %v1359, %v1471
    %v1473 = vpop.f32.mrb[0].mxu0
    %v1474 = vadd.f32 %v1361, %v1473
    %1475 = vmatprep.mubr.bf16.mxu0 0
    %1476 = vmatmul.mubr.bf16.gmra.mrb[0].mxu0 %v149
    %v1477 = vpop.f32.mrb[0].mxu0
    %v1478 = vadd.f32 %v1365, %v1477
    %v1479 = vpop.f32.mrb[0].mxu0
    %v1480 = vadd.f32 %v1367, %v1479
    %v1481 = vpop.f32.mrb[0].mxu0
    %v1482 = vadd.f32 %v1369, %v1481
    %v1483 = vpop.f32.mrb[0].mxu0
    %v1484 = vadd.f32 %v1371, %v1483
    %1485 = vdwg.mxu0
    %v1486 = vsub.f32 0.0, %v1408
    %v1487 = vsub.f32 0.0, %v1410
    %v1488 = vsub.f32 0.0, %v1412
    %v1489 = vsub.f32 0.0, %v1414
    %v1490 = vsub.f32 0.0, %v1418
    %v1491 = vsub.f32 0.0, %v1420
    %v1492 = vsub.f32 0.0, %v1422
    %v1493 = vsub.f32 0.0, %v1424
    %v1494 = vsub.f32 0.0, %v1428
    %v1495 = vsub.f32 0.0, %v1430
    %v1496 = vsub.f32 0.0, %v1432
    %v1497 = vsub.f32 0.0, %v1434
    %v1498 = vsub.f32 0.0, %v1438
    %v1499 = vsub.f32 0.0, %v1440
    %v1500 = vsub.f32 0.0, %v1442
    %v1501 = vsub.f32 0.0, %v1444
    %v1502 = vsub.f32 0.0, %v1448
    %v1503 = vsub.f32 0.0, %v1450
    %v1504 = vsub.f32 0.0, %v1452
    %v1505 = vsub.f32 0.0, %v1454
    %v1506 = vsub.f32 0.0, %v1458
    %v1507 = vsub.f32 0.0, %v1460
    %v1508 = vsub.f32 0.0, %v1462
    %v1509 = vsub.f32 0.0, %v1464
    %v1510 = vsub.f32 0.0, %v1468
    %v1511 = vsub.f32 0.0, %v1470
    %v1512 = vsub.f32 0.0, %v1472
    %v1513 = vsub.f32 0.0, %v1474
    %v1514 = vsub.f32 0.0, %v1478
    %v1515 = vsub.f32 0.0, %v1480
    %v1516 = vsub.f32 0.0, %v1482
    %v1517 = vsub.f32 0.0, %v1484
    %v1518 = vpack.c.bf16 %v1488, %v1486
    %v1519 = vpack.c.bf16 %v1489, %v1487
    %v1520 = vpack.c.bf16 %v1492, %v1490
    %v1521 = vpack.c.bf16 %v1493, %v1491
    %v1522 = vpack.c.bf16 %v1496, %v1494
    %v1523 = vpack.c.bf16 %v1497, %v1495
    %v1524 = vpack.c.bf16 %v1500, %v1498
    %v1525 = vpack.c.bf16 %v1501, %v1499
    %v1526 = vpack.c.bf16 %v1504, %v1502
    %v1527 = vpack.c.bf16 %v1505, %v1503
    %v1528 = vpack.c.bf16 %v1508, %v1506
    %v1529 = vpack.c.bf16 %v1509, %v1507
    %v1530 = vpack.c.bf16 %v1512, %v1510
    %v1531 = vpack.c.bf16 %v1513, %v1511
    %v1532 = vpack.c.bf16 %v1516, %v1514
    %v1533 = vpack.c.bf16 %v1517, %v1515
    %v1535 = vmul.bf16 %v1518, 1069105081
    %v1536 = vpow.bf16.pop %v1535
    %v1538 = vmul.bf16 %v1519, 1069105081
    %v1539 = vpow.bf16.pop %v1538
    %v1541 = vmul.bf16 %v1520, 1069105081
    %v1542 = vpow.bf16.pop %v1541
    %v1544 = vmul.bf16 %v1521, 1069105081
    %v1545 = vpow.bf16.pop %v1544
    %v1547 = vmul.bf16 %v1522, 1069105081
    %v1548 = vpow.bf16.pop %v1547
    %v1550 = vmul.bf16 %v1523, 1069105081
    %v1551 = vpow.bf16.pop %v1550
    %v1553 = vmul.bf16 %v1524, 1069105081
    %v1554 = vpow.bf16.pop %v1553
    %v1556 = vmul.bf16 %v1525, 1069105081
    %v1557 = vpow.bf16.pop %v1556
    %v1559 = vmul.bf16 %v1526, 1069105081
    %v1560 = vpow.bf16.pop %v1559
    %v1562 = vmul.bf16 %v1527, 1069105081
    %v1563 = vpow.bf16.pop %v1562
    %v1565 = vmul.bf16 %v1528, 1069105081
    %v1566 = vpow.bf16.pop %v1565
    %v1568 = vmul.bf16 %v1529, 1069105081
    %v1569 = vpow.bf16.pop %v1568
    %v1571 = vmul.bf16 %v1530, 1069105081
    %v1572 = vpow.bf16.pop %v1571
    %v1574 = vmul.bf16 %v1531, 1069105081
    %v1575 = vpow.bf16.pop %v1574
    %v1577 = vmul.bf16 %v1532, 1069105081
    %v1578 = vpow.bf16.pop %v1577
    %v1580 = vmul.bf16 %v1533, 1069105081
    %v1581 = vpow.bf16.pop %v1580
    %v1582 = vunpack.c.l.bf16 %v1536
    %v1583 = vunpack.c.l.bf16 %v1539
    %v1584 = vunpack.c.h.bf16 %v1536
    %v1585 = vunpack.c.h.bf16 %v1539
    %v1586 = vunpack.c.l.bf16 %v1542
    %v1587 = vunpack.c.l.bf16 %v1545
    %v1588 = vunpack.c.h.bf16 %v1542
    %v1589 = vunpack.c.h.bf16 %v1545
    %v1590 = vunpack.c.l.bf16 %v1548
    %v1591 = vunpack.c.l.bf16 %v1551
    %v1592 = vunpack.c.h.bf16 %v1548
    %v1593 = vunpack.c.h.bf16 %v1551
    %v1594 = vunpack.c.l.bf16 %v1554
    %v1595 = vunpack.c.l.bf16 %v1557
    %v1596 = vunpack.c.h.bf16 %v1554
    %v1597 = vunpack.c.h.bf16 %v1557
    %v1598 = vunpack.c.l.bf16 %v1560
    %v1599 = vunpack.c.l.bf16 %v1563
    %v1600 = vunpack.c.h.bf16 %v1560
    %v1601 = vunpack.c.h.bf16 %v1563
    %v1602 = vunpack.c.l.bf16 %v1566
    %v1603 = vunpack.c.l.bf16 %v1569
    %v1604 = vunpack.c.h.bf16 %v1566
    %v1605 = vunpack.c.h.bf16 %v1569
    %v1606 = vunpack.c.l.bf16 %v1572
    %v1607 = vunpack.c.l.bf16 %v1575
    %v1608 = vunpack.c.h.bf16 %v1572
    %v1609 = vunpack.c.h.bf16 %v1575
    %v1610 = vunpack.c.l.bf16 %v1578
    %v1611 = vunpack.c.l.bf16 %v1581
    %v1612 = vunpack.c.h.bf16 %v1578
    %v1613 = vunpack.c.h.bf16 %v1581
    %v1614 = vadd.f32 %v1582, 1.0
    %v1615 = vadd.f32 %v1583, 1.0
    %v1616 = vadd.f32 %v1584, 1.0
    %v1617 = vadd.f32 %v1585, 1.0
    %v1618 = vadd.f32 %v1586, 1.0
    %v1619 = vadd.f32 %v1587, 1.0
    %v1620 = vadd.f32 %v1588, 1.0
    %v1621 = vadd.f32 %v1589, 1.0
    %v1622 = vadd.f32 %v1590, 1.0
    %v1623 = vadd.f32 %v1591, 1.0
    %v1624 = vadd.f32 %v1592, 1.0
    %v1625 = vadd.f32 %v1593, 1.0
    %v1626 = vadd.f32 %v1594, 1.0
    %v1627 = vadd.f32 %v1595, 1.0
    %v1628 = vadd.f32 %v1596, 1.0
    %v1629 = vadd.f32 %v1597, 1.0
    %v1630 = vadd.f32 %v1598, 1.0
    %v1631 = vadd.f32 %v1599, 1.0
    %v1632 = vadd.f32 %v1600, 1.0
    %v1633 = vadd.f32 %v1601, 1.0
    %v1634 = vadd.f32 %v1602, 1.0
    %v1635 = vadd.f32 %v1603, 1.0
    %v1636 = vadd.f32 %v1604, 1.0
    %v1637 = vadd.f32 %v1605, 1.0
    %v1638 = vadd.f32 %v1606, 1.0
    %v1639 = vadd.f32 %v1607, 1.0
    %v1640 = vadd.f32 %v1608, 1.0
    %v1641 = vadd.f32 %v1609, 1.0
    %v1642 = vadd.f32 %v1610, 1.0
    %v1643 = vadd.f32 %v1611, 1.0
    %v1644 = vadd.f32 %v1612, 1.0
    %v1645 = vadd.f32 %v1613, 1.0
    %v1646 = vrcp.pop %v1614
    %v1647 = vrcp.pop %v1615
    %v1648 = vrcp.pop %v1616
    %v1649 = vrcp.pop %v1617
    %v1650 = vrcp.pop %v1618
    %v1651 = vrcp.pop %v1619
    %v1652 = vrcp.pop %v1620
    %v1653 = vrcp.pop %v1621
    %v1654 = vrcp.pop %v1622
    %v1655 = vrcp.pop %v1623
    %v1656 = vrcp.pop %v1624
    %v1657 = vrcp.pop %v1625
    %v1658 = vrcp.pop %v1626
    %v1659 = vrcp.pop %v1627
    %v1660 = vrcp.pop %v1628
    %v1661 = vrcp.pop %v1629
    %v1662 = vrcp.pop %v1630
    %v1663 = vrcp.pop %v1631
    %v1664 = vrcp.pop %v1632
    %v1665 = vrcp.pop %v1633
    %v1666 = vrcp.pop %v1634
    %v1667 = vrcp.pop %v1635
    %v1668 = vrcp.pop %v1636
    %v1669 = vrcp.pop %v1637
    %v1670 = vrcp.pop %v1638
    %v1671 = vrcp.pop %v1639
    %v1672 = vrcp.pop %v1640
    %v1673 = vrcp.pop %v1641
    %v1674 = vrcp.pop %v1642
    %v1675 = vrcp.pop %v1643
    %v1676 = vrcp.pop %v1644
    %v1677 = vrcp.pop %v1645
    %v1678 = vmul.f32 %v1408, %v1646
    %v1679 = vmul.f32 %v1410, %v1647
    %v1680 = vmul.f32 %v1412, %v1648
    %v1681 = vmul.f32 %v1414, %v1649
    %v1682 = vmul.f32 %v1418, %v1650
    %v1683 = vmul.f32 %v1420, %v1651
    %v1684 = vmul.f32 %v1422, %v1652
    %v1685 = vmul.f32 %v1424, %v1653
    %v1686 = vmul.f32 %v1428, %v1654
    %v1687 = vmul.f32 %v1430, %v1655
    %v1688 = vmul.f32 %v1432, %v1656
    %v1689 = vmul.f32 %v1434, %v1657
    %v1690 = vmul.f32 %v1438, %v1658
    %v1691 = vmul.f32 %v1440, %v1659
    %v1692 = vmul.f32 %v1442, %v1660
    %v1693 = vmul.f32 %v1444, %v1661
    %v1694 = vmul.f32 %v1448, %v1662
    %v1695 = vmul.f32 %v1450, %v1663
    %v1696 = vmul.f32 %v1452, %v1664
    %v1697 = vmul.f32 %v1454, %v1665
    %v1698 = vmul.f32 %v1458, %v1666
    %v1699 = vmul.f32 %v1460, %v1667
    %v1700 = vmul.f32 %v1462, %v1668
    %v1701 = vmul.f32 %v1464, %v1669
    %v1702 = vmul.f32 %v1468, %v1670
    %v1703 = vmul.f32 %v1470, %v1671
    %v1704 = vmul.f32 %v1472, %v1672
    %v1705 = vmul.f32 %v1474, %v1673
    %v1706 = vmul.f32 %v1478, %v1674
    %v1707 = vmul.f32 %v1480, %v1675
    %v1708 = vmul.f32 %v1482, %v1676
    %v1709 = vmul.f32 %v1484, %v1677
    %v1710 = vpack.c.bf16 %v1680, %v1678
    %v1711 = vpack.c.bf16 %v1681, %v1679
    %v1712 = vpack.c.bf16 %v1684, %v1682
    %v1713 = vpack.c.bf16 %v1685, %v1683
    %v1714 = vpack.c.bf16 %v1688, %v1686
    %v1715 = vpack.c.bf16 %v1689, %v1687
    %v1716 = vpack.c.bf16 %v1692, %v1690
    %v1717 = vpack.c.bf16 %v1693, %v1691
    %v1718 = vpack.c.bf16 %v1696, %v1694
    %v1719 = vpack.c.bf16 %v1697, %v1695
    %v1720 = vpack.c.bf16 %v1700, %v1698
    %v1721 = vpack.c.bf16 %v1701, %v1699
    %v1722 = vpack.c.bf16 %v1704, %v1702
    %v1723 = vpack.c.bf16 %v1705, %v1703
    %v1724 = vpack.c.bf16 %v1708, %v1706
    %v1725 = vpack.c.bf16 %v1709, %v1707
    %1726 = vmatprep.subr.bf16.mxu0 %v1711
    %1727 = vmatpush1.bf16.msra.mxu0 %v1710
    %1728 = vmatprep.subr.bf16.mxu0 %v1713
    %1729 = vmatpush1.bf16.msra.mxu0 %v1712
    %1730 = vmatprep.subr.bf16.mxu0 %v1715
    %1731 = vmatpush1.bf16.msra.mxu0 %v1714
    %1732 = vmatprep.subr.bf16.mxu0 %v1717
    %1733 = vmatpush1.bf16.msra.mxu0 %v1716
    %1734 = vmatprep.subr.bf16.mxu0 %v1719
    %1735 = vmatpush1.bf16.msra.mxu0 %v1718
    %1736 = vmatprep.subr.bf16.mxu0 %v1721
    %1737 = vmatpush1.bf16.msra.mxu0 %v1720
    %1738 = vmatprep.subr.bf16.mxu0 %v1723
    %1739 = vmatpush1.bf16.msra.mxu0 %v1722
    %1740 = vmatprep.subr.bf16.mxu0 %v1725
    %1741 = vmatpush1.bf16.msra.mxu0 %v1724
    %1742 = vmatprep.subr.bf16.mxu0 0
    %1743 = vmatpush1.bf16.msra.mxu0 0
    %1744 = vmatprep.subr.bf16.mxu0 0
    %1745 = vmatpush1.bf16.msra.mxu0 0
    %1746 = vmatprep.subr.bf16.mxu0 0
    %1747 = vmatpush1.bf16.msra.mxu0 0
    %1748 = vmatprep.subr.bf16.mxu0 0
    %1749 = vmatpush1.bf16.msra.mxu0 0
    %1750 = vmatprep.subr.bf16.mxu0 0
    %1751 = vmatpush1.bf16.msra.mxu0 0
    %1752 = vmatprep.subr.bf16.mxu0 0
    %1753 = vmatpush1.bf16.msra.mxu0 0
    %1754 = vmatprep.subr.bf16.mxu0 0
    %1755 = vmatpush1.bf16.msra.mxu0 0
    %1756 = vmatprep.subr.bf16.mxu0 0
    %1757 = vmatpush1.bf16.msra.mxu0 0
    %1758 = vmatprep.mubr.bf16.mxu0 0
    %1759 = vmatmul.mubr.bf16.gmra.mrb[0].mxu0 %v150
    %v1760 = vpop.f32.mrb[0].mxu0
    %v1761 = vadd.f32 0.0, %v1760
    %v1762 = vpop.f32.mrb[0].mxu0
    %v1763 = vadd.f32 0.0, %v1762
    %v1764 = vpop.f32.mrb[0].mxu0
    %v1765 = vpop.f32.mrb[0].mxu0
    %1766 = vdwg.mxu0
    %v1767 = vmul.f32 %v1761, 0.015625
    %v1768 = vmul.f32 %v1763, 0.015625
    %v1769 = vld [vmem:[#allocation5 + $0x10] sm:$0xff]
    %v1770 = vld [vmem:[#allocation5 + $0x38] sm:$0xff]
    %v1771 = vld [vmem:[#allocation5 + $0x60] sm:$0xff]
    %v1772 = vld [vmem:[#allocation5 + $0x88] sm:$0xff]
    %v1773 = vld [vmem:[#allocation5 + $0xb0] sm:$0xff]
    %v1774 = vld [vmem:[#allocation5 + $0xd8] sm:$0xff]
    %v1775 = vld [vmem:[#allocation5 + $0x100] sm:$0xff]
    %v1776 = vld [vmem:[#allocation5 + $0x128] sm:$0xff]
    %v1777 = vld [vmem:[#allocation5 + $0x150] sm:$0xff]
    %v1778 = vld [vmem:[#allocation5 + $0x178] sm:$0xff]
    %v1779 = vld [vmem:[#allocation5 + $0x1a0] sm:$0xff]
    %v1780 = vld [vmem:[#allocation5 + $0x1c8] sm:$0xff]
    %v1781 = vld [vmem:[#allocation5 + $0x1f0] sm:$0xff]
    %v1782 = vld [vmem:[#allocation5 + $0x218] sm:$0xff]
    %v1783 = vld [vmem:[#allocation5 + $0x240] sm:$0xff]
    %v1784 = vld [vmem:[#allocation5 + $0x268] sm:$0xff]
    %v1785 = vld [vmem:[#allocation5 + $0x290] sm:$0xff]
    %v1786 = vld [vmem:[#allocation5 + $0x2b8] sm:$0xff]
    %v1787 = vld [vmem:[#allocation5 + $0x2e0] sm:$0xff]
    %v1788 = vld [vmem:[#allocation5 + $0x308] sm:$0xff]
    %v1789 = vld [vmem:[#allocation5 + $0x330] sm:$0xff]
    %v1790 = vld [vmem:[#allocation5 + $0x358] sm:$0xff]
    %v1791 = vld [vmem:[#allocation5 + $0x380] sm:$0xff]
    %v1792 = vld [vmem:[#allocation5 + $0x3a8] sm:$0xff]
    %v1793 = vld [vmem:[#allocation5 + $0x3d0] sm:$0xff]
    %v1794 = vld [vmem:[#allocation5 + $0x3f8] sm:$0xff]
    %v1795 = vld [vmem:[#allocation5 + $0x420] sm:$0xff]
    %v1796 = vld [vmem:[#allocation5 + $0x448] sm:$0xff]
    %v1797 = vld [vmem:[#allocation5 + $0x470] sm:$0xff]
    %v1798 = vld [vmem:[#allocation5 + $0x498] sm:$0xff]
    %v1799 = vld [vmem:[#allocation5 + $0x4c0] sm:$0xff]
    %v1800 = vld [vmem:[#allocation5 + $0x4e8] sm:$0xff]
    %v1801 = vld [vmem:[#allocation5 + $0x510] sm:$0xff]
    %v1802 = vld [vmem:[#allocation5 + $0x538] sm:$0xff]
    %v1803 = vld [vmem:[#allocation5 + $0x560] sm:$0xff]
    %v1804 = vld [vmem:[#allocation5 + $0x588] sm:$0xff]
    %v1805 = vld [vmem:[#allocation5 + $0x5b0] sm:$0xff]
    %v1806 = vld [vmem:[#allocation5 + $0x5d8] sm:$0xff]
    %v1807 = vld [vmem:[#allocation5 + $0x600] sm:$0xff]
    %v1808 = vld [vmem:[#allocation5 + $0x628] sm:$0xff]
    %v1809 = vld [vmem:[#allocation5 + $0x650] sm:$0xff]
    %v1810 = vld [vmem:[#allocation5 + $0x678] sm:$0xff]
    %v1811 = vld [vmem:[#allocation5 + $0x6a0] sm:$0xff]
    %v1812 = vld [vmem:[#allocation5 + $0x6c8] sm:$0xff]
    %v1813 = vld [vmem:[#allocation5 + $0x6f0] sm:$0xff]
    %v1814 = vld [vmem:[#allocation5 + $0x718] sm:$0xff]
    %v1815 = vld [vmem:[#allocation5 + $0x740] sm:$0xff]
    %v1816 = vld [vmem:[#allocation5 + $0x768] sm:$0xff]
    %v1817 = vld [vmem:[#allocation7 + $0x4] sm:$0x3]
    %v1819 = vlaneseq
    %v1820 = vshrl.u32 %v1819, 7
    %v1821 = vsub.s32 0, %v1820
    %v1822 = vrot.slane %v1817, %v1821
    %v1823 = vlaneseq
    %v1824 = vshrl.u32 %v1823, 7
    %v1825 = vsub.s32 1, %v1824
    %v1826 = vrot.slane %v1817, %v1825
    %v1877 = vunpack.c.l.b16 %v1769
    %v1878 = vunpack.c.h.b16 %v1769
    %v1879 = vunpack.c.l.b16 %v1770
    %v1880 = vunpack.c.h.b16 %v1770
    %v1881 = vunpack.c.l.b16 %v1771
    %v1882 = vunpack.c.h.b16 %v1771
    %v1883 = vunpack.c.l.b16 %v1772
    %v1884 = vunpack.c.h.b16 %v1772
    %v1885 = vunpack.c.l.b16 %v1773
    %v1886 = vunpack.c.h.b16 %v1773
    %v1887 = vunpack.c.l.b16 %v1774
    %v1888 = vunpack.c.h.b16 %v1774
    %v1889 = vunpack.c.l.b16 %v1775
    %v1890 = vunpack.c.h.b16 %v1775
    %v1891 = vunpack.c.l.b16 %v1776
    %v1892 = vunpack.c.h.b16 %v1776
    %v1893 = vunpack.c.l.b16 %v1777
    %v1894 = vunpack.c.h.b16 %v1777
    %v1895 = vunpack.c.l.b16 %v1778
    %v1896 = vunpack.c.h.b16 %v1778
    %v1897 = vunpack.c.l.b16 %v1779
    %v1898 = vunpack.c.h.b16 %v1779
    %v1899 = vunpack.c.l.b16 %v1780
    %v1900 = vunpack.c.h.b16 %v1780
    %v1901 = vunpack.c.l.b16 %v1781
    %v1902 = vunpack.c.h.b16 %v1781
    %v1903 = vunpack.c.l.b16 %v1782
    %v1904 = vunpack.c.h.b16 %v1782
    %v1905 = vunpack.c.l.b16 %v1783
    %v1906 = vunpack.c.h.b16 %v1783
    %v1907 = vunpack.c.l.b16 %v1784
    %v1908 = vunpack.c.h.b16 %v1784
    %v1909 = vunpack.c.l.b16 %v1785
    %v1910 = vunpack.c.h.b16 %v1785
    %v1911 = vunpack.c.l.b16 %v1786
    %v1912 = vunpack.c.h.b16 %v1786
    %v1913 = vunpack.c.l.b16 %v1787
    %v1914 = vunpack.c.h.b16 %v1787
    %v1915 = vunpack.c.l.b16 %v1788
    %v1916 = vunpack.c.h.b16 %v1788
    %v1917 = vunpack.c.l.b16 %v1789
    %v1918 = vunpack.c.h.b16 %v1789
    %v1919 = vunpack.c.l.b16 %v1790
    %v1920 = vunpack.c.h.b16 %v1790
    %v1921 = vunpack.c.l.b16 %v1791
    %v1922 = vunpack.c.h.b16 %v1791
    %v1923 = vunpack.c.l.b16 %v1792
    %v1924 = vunpack.c.h.b16 %v1792
    %v1925 = vunpack.c.l.b16 %v1793
    %v1926 = vunpack.c.h.b16 %v1793
    %v1927 = vunpack.c.l.b16 %v1794
    %v1928 = vunpack.c.h.b16 %v1794
    %v1929 = vunpack.c.l.b16 %v1795
    %v1930 = vunpack.c.h.b16 %v1795
    %v1931 = vunpack.c.l.b16 %v1796
    %v1932 = vunpack.c.h.b16 %v1796
    %v1933 = vunpack.c.l.b16 %v1797
    %v1934 = vunpack.c.h.b16 %v1797
    %v1935 = vunpack.c.l.b16 %v1798
    %v1936 = vunpack.c.h.b16 %v1798
    %v1937 = vunpack.c.l.b16 %v1799
    %v1938 = vunpack.c.h.b16 %v1799
    %v1939 = vunpack.c.l.b16 %v1800
    %v1940 = vunpack.c.h.b16 %v1800
    %v1941 = vunpack.c.l.b16 %v1801
    %v1942 = vunpack.c.h.b16 %v1801
    %v1943 = vunpack.c.l.b16 %v1802
    %v1944 = vunpack.c.h.b16 %v1802
    %v1945 = vunpack.c.l.b16 %v1803
    %v1946 = vunpack.c.h.b16 %v1803
    %v1947 = vunpack.c.l.b16 %v1804
    %v1948 = vunpack.c.h.b16 %v1804
    %v1949 = vunpack.c.l.b16 %v1805
    %v1950 = vunpack.c.h.b16 %v1805
    %v1951 = vunpack.c.l.b16 %v1806
    %v1952 = vunpack.c.h.b16 %v1806
    %v1953 = vunpack.c.l.b16 %v1807
    %v1954 = vunpack.c.h.b16 %v1807
    %v1955 = vunpack.c.l.b16 %v1808
    %v1956 = vunpack.c.h.b16 %v1808
    %v1957 = vunpack.c.l.b16 %v1809
    %v1958 = vunpack.c.h.b16 %v1809
    %v1959 = vunpack.c.l.b16 %v1810
    %v1960 = vunpack.c.h.b16 %v1810
    %v1961 = vunpack.c.l.b16 %v1811
    %v1962 = vunpack.c.h.b16 %v1811
    %v1963 = vunpack.c.l.b16 %v1812
    %v1964 = vunpack.c.h.b16 %v1812
    %v1965 = vunpack.c.l.b16 %v1813
    %v1966 = vunpack.c.h.b16 %v1813
    %v1967 = vunpack.c.l.b16 %v1814
    %v1968 = vunpack.c.h.b16 %v1814
    %v1969 = vunpack.c.l.b16 %v1815
    %v1970 = vunpack.c.h.b16 %v1815
    %v1971 = vunpack.c.l.b16 %v1816
    %v1972 = vunpack.c.h.b16 %v1816
    %v1973 = vpack.c.b16 %v1879, %v1877
    %v1974 = vpack.c.b16 %v1880, %v1878
    %v1975 = vpack.c.b16 %v1883, %v1881
    %v1976 = vpack.c.b16 %v1884, %v1882
    %v1977 = vpack.c.b16 %v1887, %v1885
    %v1978 = vpack.c.b16 %v1888, %v1886
    %v1979 = vpack.c.b16 %v1891, %v1889
    %v1980 = vpack.c.b16 %v1892, %v1890
    %v1981 = vpack.c.b16 %v1895, %v1893
    %v1982 = vpack.c.b16 %v1896, %v1894
    %v1983 = vpack.c.b16 %v1899, %v1897
    %v1984 = vpack.c.b16 %v1900, %v1898
    %v1985 = vpack.c.b16 %v1903, %v1901
    %v1986 = vpack.c.b16 %v1904, %v1902
    %v1987 = vpack.c.b16 %v1907, %v1905
    %v1988 = vpack.c.b16 %v1908, %v1906
    %v1989 = vpack.c.b16 %v1911, %v1909
    %v1990 = vpack.c.b16 %v1912, %v1910
    %v1991 = vpack.c.b16 %v1915, %v1913
    %v1992 = vpack.c.b16 %v1916, %v1914
    %v1993 = vpack.c.b16 %v1919, %v1917
    %v1994 = vpack.c.b16 %v1920, %v1918
    %v1995 = vpack.c.b16 %v1923, %v1921
    %v1996 = vpack.c.b16 %v1924, %v1922
    %v1997 = vpack.c.b16 %v1927, %v1925
    %v1998 = vpack.c.b16 %v1928, %v1926
    %v1999 = vpack.c.b16 %v1931, %v1929
    %v2000 = vpack.c.b16 %v1932, %v1930
    %v2001 = vpack.c.b16 %v1935, %v1933
    %v2002 = vpack.c.b16 %v1936, %v1934
    %v2003 = vpack.c.b16 %v1939, %v1937
    %v2004 = vpack.c.b16 %v1940, %v1938
    %v2005 = vpack.c.b16 %v1943, %v1941
    %v2006 = vpack.c.b16 %v1944, %v1942
    %v2007 = vpack.c.b16 %v1947, %v1945
    %v2008 = vpack.c.b16 %v1948, %v1946
    %v2009 = vpack.c.b16 %v1951, %v1949
    %v2010 = vpack.c.b16 %v1952, %v1950
    %v2011 = vpack.c.b16 %v1955, %v1953
    %v2012 = vpack.c.b16 %v1956, %v1954
    %v2013 = vpack.c.b16 %v1959, %v1957
    %v2014 = vpack.c.b16 %v1960, %v1958
    %v2015 = vpack.c.b16 %v1963, %v1961
    %v2016 = vpack.c.b16 %v1964, %v1962
    %v2017 = vpack.c.b16 %v1967, %v1965
    %v2018 = vpack.c.b16 %v1968, %v1966
    %v2019 = vpack.c.b16 %v1971, %v1969
    %v2020 = vpack.c.b16 %v1972, %v1970
    %2069 = vmatprep.subr.bf16.mxu0 %v1974
    %2070 = vmatpush1.bf16.msra.mxu0 %v1973
    %2071 = vmatprep.subr.bf16.mxu0 %v1976
    %2072 = vmatpush1.bf16.msra.mxu0 %v1975
    %2073 = vmatprep.subr.bf16.mxu0 %v1978
    %2074 = vmatpush1.bf16.msra.mxu0 %v1977
    %2075 = vmatprep.subr.bf16.mxu0 %v1980
    %2076 = vmatpush1.bf16.msra.mxu0 %v1979
    %2077 = vmatprep.subr.bf16.mxu0 %v1982
    %2078 = vmatpush1.bf16.msra.mxu0 %v1981
    %2079 = vmatprep.subr.bf16.mxu0 %v1984
    %2080 = vmatpush1.bf16.msra.mxu0 %v1983
    %2081 = vmatprep.subr.bf16.mxu0 %v1986
    %2082 = vmatpush1.bf16.msra.mxu0 %v1985
    %2083 = vmatprep.subr.bf16.mxu0 %v1988
    %2084 = vmatpush1.bf16.msra.mxu0 %v1987
    %2085 = vmatprep.subr.bf16.mxu0 %v1990
    %2086 = vmatpush1.bf16.msra.mxu0 %v1989
    %2087 = vmatprep.subr.bf16.mxu0 %v1992
    %2088 = vmatpush1.bf16.msra.mxu0 %v1991
    %2089 = vmatprep.subr.bf16.mxu0 %v1994
    %2090 = vmatpush1.bf16.msra.mxu0 %v1993
    %2091 = vmatprep.subr.bf16.mxu0 %v1996
    %2092 = vmatpush1.bf16.msra.mxu0 %v1995
    %2093 = vmatprep.subr.bf16.mxu0 %v1998
    %2094 = vmatpush1.bf16.msra.mxu0 %v1997
    %2095 = vmatprep.subr.bf16.mxu0 %v2000
    %2096 = vmatpush1.bf16.msra.mxu0 %v1999
    %2097 = vmatprep.subr.bf16.mxu0 %v2002
    %2098 = vmatpush1.bf16.msra.mxu0 %v2001
    %2099 = vmatprep.subr.bf16.mxu0 %v2004
    %2100 = vmatpush1.bf16.msra.mxu0 %v2003
    %2101 = vmatprep.mubr.bf16.mxu0 %v127
    %2102 = vmatmul.mubr.bf16.gmra.mrb[0].mxu0 %v126
    %v2103 = vpop.f32.mrb[0].mxu0
    %v2104 = vadd.f32 %v1822, %v2103
    %v2105 = vpop.f32.mrb[0].mxu0
    %v2106 = vadd.f32 %v1826, %v2105
    %v2107 = vpop.f32.mrb[0].mxu0
    %v2108 = vadd.f32 %v1822, %v2107
    %v2109 = vpop.f32.mrb[0].mxu0
    %v2110 = vadd.f32 %v1826, %v2109
    %2111 = vmatprep.mubr.bf16.mxu0 %v130
    %2112 = vmatmul.mubr.bf16.gmra.mrb[0].mxu0 %v129
    %v2113 = vpop.f32.mrb[0].mxu0
    %v2114 = vadd.f32 %v1822, %v2113
    %v2115 = vpop.f32.mrb[0].mxu0
    %v2116 = vadd.f32 %v1826, %v2115
    %v2117 = vpop.f32.mrb[0].mxu0
    %v2118 = vadd.f32 %v1822, %v2117
    %v2119 = vpop.f32.mrb[0].mxu0
    %v2120 = vadd.f32 %v1826, %v2119
    %2121 = vmatprep.mubr.bf16.mxu0 %v133
    %2122 = vmatmul.mubr.bf16.gmra.mrb[0].mxu0 %v132
    %v2123 = vpop.f32.mrb[0].mxu0
    %v2124 = vadd.f32 %v1822, %v2123
    %v2125 = vpop.f32.mrb[0].mxu0
    %v2126 = vadd.f32 %v1826, %v2125
    %v2127 = vpop.f32.mrb[0].mxu0
    %v2128 = vadd.f32 %v1822, %v2127
    %v2129 = vpop.f32.mrb[0].mxu0
    %v2130 = vadd.f32 %v1826, %v2129
    %2131 = vmatprep.mubr.bf16.mxu0 %v136
    %2132 = vmatmul.mubr.bf16.gmra.mrb[0].mxu0 %v135
    %v2133 = vpop.f32.mrb[0].mxu0
    %v2134 = vadd.f32 %v1822, %v2133
    %v2135 = vpop.f32.mrb[0].mxu0
    %v2136 = vadd.f32 %v1826, %v2135
    %v2137 = vpop.f32.mrb[0].mxu0
    %v2138 = vadd.f32 %v1822, %v2137
    %v2139 = vpop.f32.mrb[0].mxu0
    %v2140 = vadd.f32 %v1826, %v2139
    %2141 = vmatprep.mubr.bf16.mxu0 %v139
    %2142 = vmatmul.mubr.bf16.gmra.mrb[0].mxu0 %v138
    %v2143 = vpop.f32.mrb[0].mxu0
    %v2144 = vadd.f32 %v1822, %v2143
    %v2145 = vpop.f32.mrb[0].mxu0
    %v2146 = vadd.f32 %v1826, %v2145
    %v2147 = vpop.f32.mrb[0].mxu0
    %v2148 = vadd.f32 %v1822, %v2147
    %v2149 = vpop.f32.mrb[0].mxu0
    %v2150 = vadd.f32 %v1826, %v2149
    %2151 = vmatprep.mubr.bf16.mxu0 %v142
    %2152 = vmatmul.mubr.bf16.gmra.mrb[0].mxu0 %v141
    %v2153 = vpop.f32.mrb[0].mxu0
    %v2154 = vadd.f32 %v1822, %v2153
    %v2155 = vpop.f32.mrb[0].mxu0
    %v2156 = vadd.f32 %v1826, %v2155
    %v2157 = vpop.f32.mrb[0].mxu0
    %v2158 = vadd.f32 %v1822, %v2157
    %v2159 = vpop.f32.mrb[0].mxu0
    %v2160 = vadd.f32 %v1826, %v2159
    %2161 = vmatprep.mubr.bf16.mxu0 %v145
    %2162 = vmatmul.mubr.bf16.gmra.mrb[0].mxu0 %v144
    %v2163 = vpop.f32.mrb[0].mxu0
    %v2164 = vadd.f32 %v1822, %v2163
    %v2165 = vpop.f32.mrb[0].mxu0
    %v2166 = vadd.f32 %v1826, %v2165
    %v2167 = vpop.f32.mrb[0].mxu0
    %v2168 = vadd.f32 %v1822, %v2167
    %v2169 = vpop.f32.mrb[0].mxu0
    %v2170 = vadd.f32 %v1826, %v2169
    %2171 = vmatprep.mubr.bf16.mxu0 %v148
    %2172 = vmatmul.mubr.bf16.gmra.mrb[0].mxu0 %v147
    %v2173 = vpop.f32.mrb[0].mxu0
    %v2174 = vadd.f32 %v1822, %v2173
    %v2175 = vpop.f32.mrb[0].mxu0
    %v2176 = vadd.f32 %v1826, %v2175
    %v2177 = vpop.f32.mrb[0].mxu0
    %v2178 = vadd.f32 %v1822, %v2177
    %v2179 = vpop.f32.mrb[0].mxu0
    %v2180 = vadd.f32 %v1826, %v2179
    %2181 = vdwg.mxu0
    %2182 = vmatprep.subr.bf16.mxu0 %v2006
    %2183 = vmatpush1.bf16.msra.mxu0 %v2005
    %2184 = vmatprep.subr.bf16.mxu0 %v2008
    %2185 = vmatpush1.bf16.msra.mxu0 %v2007
    %2186 = vmatprep.subr.bf16.mxu0 %v2010
    %2187 = vmatpush1.bf16.msra.mxu0 %v2009
    %2188 = vmatprep.subr.bf16.mxu0 %v2012
    %2189 = vmatpush1.bf16.msra.mxu0 %v2011
    %2190 = vmatprep.subr.bf16.mxu0 %v2014
    %2191 = vmatpush1.bf16.msra.mxu0 %v2013
    %2192 = vmatprep.subr.bf16.mxu0 %v2016
    %2193 = vmatpush1.bf16.msra.mxu0 %v2015
    %2194 = vmatprep.subr.bf16.mxu0 %v2018
    %2195 = vmatpush1.bf16.msra.mxu0 %v2017
    %2196 = vmatprep.subr.bf16.mxu0 %v2020
    %2197 = vmatpush1.bf16.msra.mxu0 %v2019
    %2198 = vmatprep.subr.bf16.mxu0 0
    %2199 = vmatpush1.bf16.msra.mxu0 0
    %2200 = vmatprep.subr.bf16.mxu0 0
    %2201 = vmatpush1.bf16.msra.mxu0 0
    %2202 = vmatprep.subr.bf16.mxu0 0
    %2203 = vmatpush1.bf16.msra.mxu0 0
    %2204 = vmatprep.subr.bf16.mxu0 0
    %2205 = vmatpush1.bf16.msra.mxu0 0
    %2206 = vmatprep.subr.bf16.mxu0 0
    %2207 = vmatpush1.bf16.msra.mxu0 0
    %2208 = vmatprep.subr.bf16.mxu0 0
    %2209 = vmatpush1.bf16.msra.mxu0 0
    %2210 = vmatprep.subr.bf16.mxu0 0
    %2211 = vmatpush1.bf16.msra.mxu0 0
    %2212 = vmatprep.subr.bf16.mxu0 0
    %2213 = vmatpush1.bf16.msra.mxu0 0
    %2214 = vmatprep.mubr.bf16.mxu0 0
    %2215 = vmatmul.mubr.bf16.gmra.mrb[0].mxu0 %v128
    %v2216 = vpop.f32.mrb[0].mxu0
    %v2217 = vadd.f32 %v2104, %v2216
    %v2218 = vpop.f32.mrb[0].mxu0
    %v2219 = vadd.f32 %v2106, %v2218
    %v2220 = vpop.f32.mrb[0].mxu0
    %v2221 = vadd.f32 %v2108, %v2220
    %v2222 = vpop.f32.mrb[0].mxu0
    %v2223 = vadd.f32 %v2110, %v2222
    %2224 = vmatprep.mubr.bf16.mxu0 0
    %2225 = vmatmul.mubr.bf16.gmra.mrb[0].mxu0 %v131
    %v2226 = vpop.f32.mrb[0].mxu0
    %v2227 = vadd.f32 %v2114, %v2226
    %v2228 = vpop.f32.mrb[0].mxu0
    %v2229 = vadd.f32 %v2116, %v2228
    %v2230 = vpop.f32.mrb[0].mxu0
    %v2231 = vadd.f32 %v2118, %v2230
    %v2232 = vpop.f32.mrb[0].mxu0
    %v2233 = vadd.f32 %v2120, %v2232
    %2234 = vmatprep.mubr.bf16.mxu0 0
    %2235 = vmatmul.mubr.bf16.gmra.mrb[0].mxu0 %v134
    %v2236 = vpop.f32.mrb[0].mxu0
    %v2237 = vadd.f32 %v2124, %v2236
    %v2238 = vpop.f32.mrb[0].mxu0
    %v2239 = vadd.f32 %v2126, %v2238
    %v2240 = vpop.f32.mrb[0].mxu0
    %v2241 = vadd.f32 %v2128, %v2240
    %v2242 = vpop.f32.mrb[0].mxu0
    %v2243 = vadd.f32 %v2130, %v2242
    %2244 = vmatprep.mubr.bf16.mxu0 0
    %2245 = vmatmul.mubr.bf16.gmra.mrb[0].mxu0 %v137
    %v2246 = vpop.f32.mrb[0].mxu0
    %v2247 = vadd.f32 %v2134, %v2246
    %v2248 = vpop.f32.mrb[0].mxu0
    %v2249 = vadd.f32 %v2136, %v2248
    %v2250 = vpop.f32.mrb[0].mxu0
    %v2251 = vadd.f32 %v2138, %v2250
    %v2252 = vpop.f32.mrb[0].mxu0
    %v2253 = vadd.f32 %v2140, %v2252
    %2254 = vmatprep.mubr.bf16.mxu0 0
    %2255 = vmatmul.mubr.bf16.gmra.mrb[0].mxu0 %v140
    %v2256 = vpop.f32.mrb[0].mxu0
    %v2257 = vadd.f32 %v2144, %v2256
    %v2258 = vpop.f32.mrb[0].mxu0
    %v2259 = vadd.f32 %v2146, %v2258
    %v2260 = vpop.f32.mrb[0].mxu0
    %v2261 = vadd.f32 %v2148, %v2260
    %v2262 = vpop.f32.mrb[0].mxu0
    %v2263 = vadd.f32 %v2150, %v2262
    %2264 = vmatprep.mubr.bf16.mxu0 0
    %2265 = vmatmul.mubr.bf16.gmra.mrb[0].mxu0 %v143
    %v2266 = vpop.f32.mrb[0].mxu0
    %v2267 = vadd.f32 %v2154, %v2266
    %v2268 = vpop.f32.mrb[0].mxu0
    %v2269 = vadd.f32 %v2156, %v2268
    %v2270 = vpop.f32.mrb[0].mxu0
    %v2271 = vadd.f32 %v2158, %v2270
    %v2272 = vpop.f32.mrb[0].mxu0
    %v2273 = vadd.f32 %v2160, %v2272
    %2274 = vmatprep.mubr.bf16.mxu0 0
    %2275 = vmatmul.mubr.bf16.gmra.mrb[0].mxu0 %v146
    %v2276 = vpop.f32.mrb[0].mxu0
    %v2277 = vadd.f32 %v2164, %v2276
    %v2278 = vpop.f32.mrb[0].mxu0
    %v2279 = vadd.f32 %v2166, %v2278
    %v2280 = vpop.f32.mrb[0].mxu0
    %v2281 = vadd.f32 %v2168, %v2280
    %v2282 = vpop.f32.mrb[0].mxu0
    %v2283 = vadd.f32 %v2170, %v2282
    %2284 = vmatprep.mubr.bf16.mxu0 0
    %2285 = vmatmul.mubr.bf16.gmra.mrb[0].mxu0 %v149
    %v2286 = vpop.f32.mrb[0].mxu0
    %v2287 = vadd.f32 %v2174, %v2286
    %v2288 = vpop.f32.mrb[0].mxu0
    %v2289 = vadd.f32 %v2176, %v2288
    %v2290 = vpop.f32.mrb[0].mxu0
    %v2291 = vadd.f32 %v2178, %v2290
    %v2292 = vpop.f32.mrb[0].mxu0
    %v2293 = vadd.f32 %v2180, %v2292
    %2294 = vdwg.mxu0
    %v2295 = vsub.f32 0.0, %v2217
    %v2296 = vsub.f32 0.0, %v2219
    %v2297 = vsub.f32 0.0, %v2221
    %v2298 = vsub.f32 0.0, %v2223
    %v2299 = vsub.f32 0.0, %v2227
    %v2300 = vsub.f32 0.0, %v2229
    %v2301 = vsub.f32 0.0, %v2231
    %v2302 = vsub.f32 0.0, %v2233
    %v2303 = vsub.f32 0.0, %v2237
    %v2304 = vsub.f32 0.0, %v2239
    %v2305 = vsub.f32 0.0, %v2241
    %v2306 = vsub.f32 0.0, %v2243
    %v2307 = vsub.f32 0.0, %v2247
    %v2308 = vsub.f32 0.0, %v2249
    %v2309 = vsub.f32 0.0, %v2251
    %v2310 = vsub.f32 0.0, %v2253
    %v2311 = vsub.f32 0.0, %v2257
    %v2312 = vsub.f32 0.0, %v2259
    %v2313 = vsub.f32 0.0, %v2261
    %v2314 = vsub.f32 0.0, %v2263
    %v2315 = vsub.f32 0.0, %v2267
    %v2316 = vsub.f32 0.0, %v2269
    %v2317 = vsub.f32 0.0, %v2271
    %v2318 = vsub.f32 0.0, %v2273
    %v2319 = vsub.f32 0.0, %v2277
    %v2320 = vsub.f32 0.0, %v2279
    %v2321 = vsub.f32 0.0, %v2281
    %v2322 = vsub.f32 0.0, %v2283
    %v2323 = vsub.f32 0.0, %v2287
    %v2324 = vsub.f32 0.0, %v2289
    %v2325 = vsub.f32 0.0, %v2291
    %v2326 = vsub.f32 0.0, %v2293
    %v2327 = vpack.c.bf16 %v2297, %v2295
    %v2328 = vpack.c.bf16 %v2298, %v2296
    %v2329 = vpack.c.bf16 %v2301, %v2299
    %v2330 = vpack.c.bf16 %v2302, %v2300
    %v2331 = vpack.c.bf16 %v2305, %v2303
    %v2332 = vpack.c.bf16 %v2306, %v2304
    %v2333 = vpack.c.bf16 %v2309, %v2307
    %v2334 = vpack.c.bf16 %v2310, %v2308
    %v2335 = vpack.c.bf16 %v2313, %v2311
    %v2336 = vpack.c.bf16 %v2314, %v2312
    %v2337 = vpack.c.bf16 %v2317, %v2315
    %v2338 = vpack.c.bf16 %v2318, %v2316
    %v2339 = vpack.c.bf16 %v2321, %v2319
    %v2340 = vpack.c.bf16 %v2322, %v2320
    %v2341 = vpack.c.bf16 %v2325, %v2323
    %v2342 = vpack.c.bf16 %v2326, %v2324
    %v2344 = vmul.bf16 %v2327, 1069105081
    %v2345 = vpow.bf16.pop %v2344
    %v2347 = vmul.bf16 %v2328, 1069105081
    %v2348 = vpow.bf16.pop %v2347
    %v2350 = vmul.bf16 %v2329, 1069105081
    %v2351 = vpow.bf16.pop %v2350
    %v2353 = vmul.bf16 %v2330, 1069105081
    %v2354 = vpow.bf16.pop %v2353
    %v2356 = vmul.bf16 %v2331, 1069105081
    %v2357 = vpow.bf16.pop %v2356
    %v2359 = vmul.bf16 %v2332, 1069105081
    %v2360 = vpow.bf16.pop %v2359
    %v2362 = vmul.bf16 %v2333, 1069105081
    %v2363 = vpow.bf16.pop %v2362
    %v2365 = vmul.bf16 %v2334, 1069105081
    %v2366 = vpow.bf16.pop %v2365
    %v2368 = vmul.bf16 %v2335, 1069105081
    %v2369 = vpow.bf16.pop %v2368
    %v2371 = vmul.bf16 %v2336, 1069105081
    %v2372 = vpow.bf16.pop %v2371
    %v2374 = vmul.bf16 %v2337, 1069105081
    %v2375 = vpow.bf16.pop %v2374
    %v2377 = vmul.bf16 %v2338, 1069105081
    %v2378 = vpow.bf16.pop %v2377
    %v2380 = vmul.bf16 %v2339, 1069105081
    %v2381 = vpow.bf16.pop %v2380
    %v2383 = vmul.bf16 %v2340, 1069105081
    %v2384 = vpow.bf16.pop %v2383
    %v2386 = vmul.bf16 %v2341, 1069105081
    %v2387 = vpow.bf16.pop %v2386
    %v2389 = vmul.bf16 %v2342, 1069105081
    %v2390 = vpow.bf16.pop %v2389
    %v2391 = vunpack.c.l.bf16 %v2345
    %v2392 = vunpack.c.l.bf16 %v2348
    %v2393 = vunpack.c.h.bf16 %v2345
    %v2394 = vunpack.c.h.bf16 %v2348
    %v2395 = vunpack.c.l.bf16 %v2351
    %v2396 = vunpack.c.l.bf16 %v2354
    %v2397 = vunpack.c.h.bf16 %v2351
    %v2398 = vunpack.c.h.bf16 %v2354
    %v2399 = vunpack.c.l.bf16 %v2357
    %v2400 = vunpack.c.l.bf16 %v2360
    %v2401 = vunpack.c.h.bf16 %v2357
    %v2402 = vunpack.c.h.bf16 %v2360
    %v2403 = vunpack.c.l.bf16 %v2363
    %v2404 = vunpack.c.l.bf16 %v2366
    %v2405 = vunpack.c.h.bf16 %v2363
    %v2406 = vunpack.c.h.bf16 %v2366
    %v2407 = vunpack.c.l.bf16 %v2369
    %v2408 = vunpack.c.l.bf16 %v2372
    %v2409 = vunpack.c.h.bf16 %v2369
    %v2410 = vunpack.c.h.bf16 %v2372
    %v2411 = vunpack.c.l.bf16 %v2375
    %v2412 = vunpack.c.l.bf16 %v2378
    %v2413 = vunpack.c.h.bf16 %v2375
    %v2414 = vunpack.c.h.bf16 %v2378
    %v2415 = vunpack.c.l.bf16 %v2381
    %v2416 = vunpack.c.l.bf16 %v2384
    %v2417 = vunpack.c.h.bf16 %v2381
    %v2418 = vunpack.c.h.bf16 %v2384
    %v2419 = vunpack.c.l.bf16 %v2387
    %v2420 = vunpack.c.l.bf16 %v2390
    %v2421 = vunpack.c.h.bf16 %v2387
    %v2422 = vunpack.c.h.bf16 %v2390
    %v2423 = vadd.f32 %v2391, 1.0
    %v2424 = vadd.f32 %v2392, 1.0
    %v2425 = vadd.f32 %v2393, 1.0
    %v2426 = vadd.f32 %v2394, 1.0
    %v2427 = vadd.f32 %v2395, 1.0
    %v2428 = vadd.f32 %v2396, 1.0
    %v2429 = vadd.f32 %v2397, 1.0
    %v2430 = vadd.f32 %v2398, 1.0
    %v2431 = vadd.f32 %v2399, 1.0
    %v2432 = vadd.f32 %v2400, 1.0
    %v2433 = vadd.f32 %v2401, 1.0
    %v2434 = vadd.f32 %v2402, 1.0
    %v2435 = vadd.f32 %v2403, 1.0
    %v2436 = vadd.f32 %v2404, 1.0
    %v2437 = vadd.f32 %v2405, 1.0
    %v2438 = vadd.f32 %v2406, 1.0
    %v2439 = vadd.f32 %v2407, 1.0
    %v2440 = vadd.f32 %v2408, 1.0
    %v2441 = vadd.f32 %v2409, 1.0
    %v2442 = vadd.f32 %v2410, 1.0
    %v2443 = vadd.f32 %v2411, 1.0
    %v2444 = vadd.f32 %v2412, 1.0
    %v2445 = vadd.f32 %v2413, 1.0
    %v2446 = vadd.f32 %v2414, 1.0
    %v2447 = vadd.f32 %v2415, 1.0
    %v2448 = vadd.f32 %v2416, 1.0
    %v2449 = vadd.f32 %v2417, 1.0
    %v2450 = vadd.f32 %v2418, 1.0
    %v2451 = vadd.f32 %v2419, 1.0
    %v2452 = vadd.f32 %v2420, 1.0
    %v2453 = vadd.f32 %v2421, 1.0
    %v2454 = vadd.f32 %v2422, 1.0
    %v2455 = vrcp.pop %v2423
    %v2456 = vrcp.pop %v2424
    %v2457 = vrcp.pop %v2425
    %v2458 = vrcp.pop %v2426
    %v2459 = vrcp.pop %v2427
    %v2460 = vrcp.pop %v2428
    %v2461 = vrcp.pop %v2429
    %v2462 = vrcp.pop %v2430
    %v2463 = vrcp.pop %v2431
    %v2464 = vrcp.pop %v2432
    %v2465 = vrcp.pop %v2433
    %v2466 = vrcp.pop %v2434
    %v2467 = vrcp.pop %v2435
    %v2468 = vrcp.pop %v2436
    %v2469 = vrcp.pop %v2437
    %v2470 = vrcp.pop %v2438
    %v2471 = vrcp.pop %v2439
    %v2472 = vrcp.pop %v2440
    %v2473 = vrcp.pop %v2441
    %v2474 = vrcp.pop %v2442
    %v2475 = vrcp.pop %v2443
    %v2476 = vrcp.pop %v2444
    %v2477 = vrcp.pop %v2445
    %v2478 = vrcp.pop %v2446
    %v2479 = vrcp.pop %v2447
    %v2480 = vrcp.pop %v2448
    %v2481 = vrcp.pop %v2449
    %v2482 = vrcp.pop %v2450
    %v2483 = vrcp.pop %v2451
    %v2484 = vrcp.pop %v2452
    %v2485 = vrcp.pop %v2453
    %v2486 = vrcp.pop %v2454
    %v2487 = vmul.f32 %v2217, %v2455
    %v2488 = vmul.f32 %v2219, %v2456
    %v2489 = vmul.f32 %v2221, %v2457
    %v2490 = vmul.f32 %v2223, %v2458
    %v2491 = vmul.f32 %v2227, %v2459
    %v2492 = vmul.f32 %v2229, %v2460
    %v2493 = vmul.f32 %v2231, %v2461
    %v2494 = vmul.f32 %v2233, %v2462
    %v2495 = vmul.f32 %v2237, %v2463
    %v2496 = vmul.f32 %v2239, %v2464
    %v2497 = vmul.f32 %v2241, %v2465
    %v2498 = vmul.f32 %v2243, %v2466
    %v2499 = vmul.f32 %v2247, %v2467
    %v2500 = vmul.f32 %v2249, %v2468
    %v2501 = vmul.f32 %v2251, %v2469
    %v2502 = vmul.f32 %v2253, %v2470
    %v2503 = vmul.f32 %v2257, %v2471
    %v2504 = vmul.f32 %v2259, %v2472
    %v2505 = vmul.f32 %v2261, %v2473
    %v2506 = vmul.f32 %v2263, %v2474
    %v2507 = vmul.f32 %v2267, %v2475
    %v2508 = vmul.f32 %v2269, %v2476
    %v2509 = vmul.f32 %v2271, %v2477
    %v2510 = vmul.f32 %v2273, %v2478
    %v2511 = vmul.f32 %v2277, %v2479
    %v2512 = vmul.f32 %v2279, %v2480
    %v2513 = vmul.f32 %v2281, %v2481
    %v2514 = vmul.f32 %v2283, %v2482
    %v2515 = vmul.f32 %v2287, %v2483
    %v2516 = vmul.f32 %v2289, %v2484
    %v2517 = vmul.f32 %v2291, %v2485
    %v2518 = vmul.f32 %v2293, %v2486
    %v2519 = vpack.c.bf16 %v2489, %v2487
    %v2520 = vpack.c.bf16 %v2490, %v2488
    %v2521 = vpack.c.bf16 %v2493, %v2491
    %v2522 = vpack.c.bf16 %v2494, %v2492
    %v2523 = vpack.c.bf16 %v2497, %v2495
    %v2524 = vpack.c.bf16 %v2498, %v2496
    %v2525 = vpack.c.bf16 %v2501, %v2499
    %v2526 = vpack.c.bf16 %v2502, %v2500
    %v2527 = vpack.c.bf16 %v2505, %v2503
    %v2528 = vpack.c.bf16 %v2506, %v2504
    %v2529 = vpack.c.bf16 %v2509, %v2507
    %v2530 = vpack.c.bf16 %v2510, %v2508
    %v2531 = vpack.c.bf16 %v2513, %v2511
    %v2532 = vpack.c.bf16 %v2514, %v2512
    %v2533 = vpack.c.bf16 %v2517, %v2515
    %v2534 = vpack.c.bf16 %v2518, %v2516
    %2535 = vmatprep.subr.bf16.mxu0 %v2520
    %2536 = vmatpush1.bf16.msra.mxu0 %v2519
    %2537 = vmatprep.subr.bf16.mxu0 %v2522
    %2538 = vmatpush1.bf16.msra.mxu0 %v2521
    %2539 = vmatprep.subr.bf16.mxu0 %v2524
    %2540 = vmatpush1.bf16.msra.mxu0 %v2523
    %2541 = vmatprep.subr.bf16.mxu0 %v2526
    %2542 = vmatpush1.bf16.msra.mxu0 %v2525
    %2543 = vmatprep.subr.bf16.mxu0 %v2528
    %2544 = vmatpush1.bf16.msra.mxu0 %v2527
    %2545 = vmatprep.subr.bf16.mxu0 %v2530
    %2546 = vmatpush1.bf16.msra.mxu0 %v2529
    %2547 = vmatprep.subr.bf16.mxu0 %v2532
    %2548 = vmatpush1.bf16.msra.mxu0 %v2531
    %2549 = vmatprep.subr.bf16.mxu0 %v2534
    %2550 = vmatpush1.bf16.msra.mxu0 %v2533
    %2551 = vmatprep.subr.bf16.mxu0 0
    %2552 = vmatpush1.bf16.msra.mxu0 0
    %2553 = vmatprep.subr.bf16.mxu0 0
    %2554 = vmatpush1.bf16.msra.mxu0 0
    %2555 = vmatprep.subr.bf16.mxu0 0
    %2556 = vmatpush1.bf16.msra.mxu0 0
    %2557 = vmatprep.subr.bf16.mxu0 0
    %2558 = vmatpush1.bf16.msra.mxu0 0
    %2559 = vmatprep.subr.bf16.mxu0 0
    %2560 = vmatpush1.bf16.msra.mxu0 0
    %2561 = vmatprep.subr.bf16.mxu0 0
    %2562 = vmatpush1.bf16.msra.mxu0 0
    %2563 = vmatprep.subr.bf16.mxu0 0
    %2564 = vmatpush1.bf16.msra.mxu0 0
    %2565 = vmatprep.subr.bf16.mxu0 0
    %2566 = vmatpush1.bf16.msra.mxu0 0
    %2567 = vmatprep.mubr.bf16.mxu0 0
    %2568 = vmatmul.mubr.bf16.gmra.mrb[0].mxu0 %v150
    %v2569 = vpop.f32.mrb[0].mxu0
    %v2570 = vadd.f32 0.0, %v2569
    %v2571 = vpop.f32.mrb[0].mxu0
    %v2572 = vadd.f32 0.0, %v2571
    %v2573 = vpop.f32.mrb[0].mxu0
    %v2574 = vpop.f32.mrb[0].mxu0
    %2575 = vdwg.mxu0
    %v2576 = vmul.f32 %v2570, 0.015625
    %v2577 = vmul.f32 %v2572, 0.015625
    %v2578 = vld [vmem:[#allocation5 + $0x18] sm:$0xff]
    %v2579 = vld [vmem:[#allocation5 + $0x40] sm:$0xff]
    %v2580 = vld [vmem:[#allocation5 + $0x68] sm:$0xff]
    %v2581 = vld [vmem:[#allocation5 + $0x90] sm:$0xff]
    %v2582 = vld [vmem:[#allocation5 + $0xb8] sm:$0xff]
    %v2583 = vld [vmem:[#allocation5 + $0xe0] sm:$0xff]
    %v2584 = vld [vmem:[#allocation5 + $0x108] sm:$0xff]
    %v2585 = vld [vmem:[#allocation5 + $0x130] sm:$0xff]
    %v2586 = vld [vmem:[#allocation5 + $0x158] sm:$0xff]
    %v2587 = vld [vmem:[#allocation5 + $0x180] sm:$0xff]
    %v2588 = vld [vmem:[#allocation5 + $0x1a8] sm:$0xff]
    %v2589 = vld [vmem:[#allocation5 + $0x1d0] sm:$0xff]
    %v2590 = vld [vmem:[#allocation5 + $0x1f8] sm:$0xff]
    %v2591 = vld [vmem:[#allocation5 + $0x220] sm:$0xff]
    %v2592 = vld [vmem:[#allocation5 + $0x248] sm:$0xff]
    %v2593 = vld [vmem:[#allocation5 + $0x270] sm:$0xff]
    %v2594 = vld [vmem:[#allocation5 + $0x298] sm:$0xff]
    %v2595 = vld [vmem:[#allocation5 + $0x2c0] sm:$0xff]
    %v2596 = vld [vmem:[#allocation5 + $0x2e8] sm:$0xff]
    %v2597 = vld [vmem:[#allocation5 + $0x310] sm:$0xff]
    %v2598 = vld [vmem:[#allocation5 + $0x338] sm:$0xff]
    %v2599 = vld [vmem:[#allocation5 + $0x360] sm:$0xff]
    %v2600 = vld [vmem:[#allocation5 + $0x388] sm:$0xff]
    %v2601 = vld [vmem:[#allocation5 + $0x3b0] sm:$0xff]
    %v2602 = vld [vmem:[#allocation5 + $0x3d8] sm:$0xff]
    %v2603 = vld [vmem:[#allocation5 + $0x400] sm:$0xff]
    %v2604 = vld [vmem:[#allocation5 + $0x428] sm:$0xff]
    %v2605 = vld [vmem:[#allocation5 + $0x450] sm:$0xff]
    %v2606 = vld [vmem:[#allocation5 + $0x478] sm:$0xff]
    %v2607 = vld [vmem:[#allocation5 + $0x4a0] sm:$0xff]
    %v2608 = vld [vmem:[#allocation5 + $0x4c8] sm:$0xff]
    %v2609 = vld [vmem:[#allocation5 + $0x4f0] sm:$0xff]
    %v2610 = vld [vmem:[#allocation5 + $0x518] sm:$0xff]
    %v2611 = vld [vmem:[#allocation5 + $0x540] sm:$0xff]
    %v2612 = vld [vmem:[#allocation5 + $0x568] sm:$0xff]
    %v2613 = vld [vmem:[#allocation5 + $0x590] sm:$0xff]
    %v2614 = vld [vmem:[#allocation5 + $0x5b8] sm:$0xff]
    %v2615 = vld [vmem:[#allocation5 + $0x5e0] sm:$0xff]
    %v2616 = vld [vmem:[#allocation5 + $0x608] sm:$0xff]
    %v2617 = vld [vmem:[#allocation5 + $0x630] sm:$0xff]
    %v2618 = vld [vmem:[#allocation5 + $0x658] sm:$0xff]
    %v2619 = vld [vmem:[#allocation5 + $0x680] sm:$0xff]
    %v2620 = vld [vmem:[#allocation5 + $0x6a8] sm:$0xff]
    %v2621 = vld [vmem:[#allocation5 + $0x6d0] sm:$0xff]
    %v2622 = vld [vmem:[#allocation5 + $0x6f8] sm:$0xff]
    %v2623 = vld [vmem:[#allocation5 + $0x720] sm:$0xff]
    %v2624 = vld [vmem:[#allocation5 + $0x748] sm:$0xff]
    %v2625 = vld [vmem:[#allocation5 + $0x770] sm:$0xff]
    %v2626 = vld [vmem:[#allocation7 + $0x6] sm:$0x3]
    %v2628 = vlaneseq
    %v2629 = vshrl.u32 %v2628, 7
    %v2630 = vsub.s32 0, %v2629
    %v2631 = vrot.slane %v2626, %v2630
    %v2632 = vlaneseq
    %v2633 = vshrl.u32 %v2632, 7
    %v2634 = vsub.s32 1, %v2633
    %v2635 = vrot.slane %v2626, %v2634
    %v2686 = vunpack.c.l.b16 %v2578
    %v2687 = vunpack.c.h.b16 %v2578
    %v2688 = vunpack.c.l.b16 %v2579
    %v2689 = vunpack.c.h.b16 %v2579
    %v2690 = vunpack.c.l.b16 %v2580
    %v2691 = vunpack.c.h.b16 %v2580
    %v2692 = vunpack.c.l.b16 %v2581
    %v2693 = vunpack.c.h.b16 %v2581
    %v2694 = vunpack.c.l.b16 %v2582
    %v2695 = vunpack.c.h.b16 %v2582
    %v2696 = vunpack.c.l.b16 %v2583
    %v2697 = vunpack.c.h.b16 %v2583
    %v2698 = vunpack.c.l.b16 %v2584
    %v2699 = vunpack.c.h.b16 %v2584
    %v2700 = vunpack.c.l.b16 %v2585
    %v2701 = vunpack.c.h.b16 %v2585
    %v2702 = vunpack.c.l.b16 %v2586
    %v2703 = vunpack.c.h.b16 %v2586
    %v2704 = vunpack.c.l.b16 %v2587
    %v2705 = vunpack.c.h.b16 %v2587
    %v2706 = vunpack.c.l.b16 %v2588
    %v2707 = vunpack.c.h.b16 %v2588
    %v2708 = vunpack.c.l.b16 %v2589
    %v2709 = vunpack.c.h.b16 %v2589
    %v2710 = vunpack.c.l.b16 %v2590
    %v2711 = vunpack.c.h.b16 %v2590
    %v2712 = vunpack.c.l.b16 %v2591
    %v2713 = vunpack.c.h.b16 %v2591
    %v2714 = vunpack.c.l.b16 %v2592
    %v2715 = vunpack.c.h.b16 %v2592
    %v2716 = vunpack.c.l.b16 %v2593
    %v2717 = vunpack.c.h.b16 %v2593
    %v2718 = vunpack.c.l.b16 %v2594
    %v2719 = vunpack.c.h.b16 %v2594
    %v2720 = vunpack.c.l.b16 %v2595
    %v2721 = vunpack.c.h.b16 %v2595
    %v2722 = vunpack.c.l.b16 %v2596
    %v2723 = vunpack.c.h.b16 %v2596
    %v2724 = vunpack.c.l.b16 %v2597
    %v2725 = vunpack.c.h.b16 %v2597
    %v2726 = vunpack.c.l.b16 %v2598
    %v2727 = vunpack.c.h.b16 %v2598
    %v2728 = vunpack.c.l.b16 %v2599
    %v2729 = vunpack.c.h.b16 %v2599
    %v2730 = vunpack.c.l.b16 %v2600
    %v2731 = vunpack.c.h.b16 %v2600
    %v2732 = vunpack.c.l.b16 %v2601
    %v2733 = vunpack.c.h.b16 %v2601
    %v2734 = vunpack.c.l.b16 %v2602
    %v2735 = vunpack.c.h.b16 %v2602
    %v2736 = vunpack.c.l.b16 %v2603
    %v2737 = vunpack.c.h.b16 %v2603
    %v2738 = vunpack.c.l.b16 %v2604
    %v2739 = vunpack.c.h.b16 %v2604
    %v2740 = vunpack.c.l.b16 %v2605
    %v2741 = vunpack.c.h.b16 %v2605
    %v2742 = vunpack.c.l.b16 %v2606
    %v2743 = vunpack.c.h.b16 %v2606
    %v2744 = vunpack.c.l.b16 %v2607
    %v2745 = vunpack.c.h.b16 %v2607
    %v2746 = vunpack.c.l.b16 %v2608
    %v2747 = vunpack.c.h.b16 %v2608
    %v2748 = vunpack.c.l.b16 %v2609
    %v2749 = vunpack.c.h.b16 %v2609
    %v2750 = vunpack.c.l.b16 %v2610
    %v2751 = vunpack.c.h.b16 %v2610
    %v2752 = vunpack.c.l.b16 %v2611
    %v2753 = vunpack.c.h.b16 %v2611
    %v2754 = vunpack.c.l.b16 %v2612
    %v2755 = vunpack.c.h.b16 %v2612
    %v2756 = vunpack.c.l.b16 %v2613
    %v2757 = vunpack.c.h.b16 %v2613
    %v2758 = vunpack.c.l.b16 %v2614
    %v2759 = vunpack.c.h.b16 %v2614
    %v2760 = vunpack.c.l.b16 %v2615
    %v2761 = vunpack.c.h.b16 %v2615
    %v2762 = vunpack.c.l.b16 %v2616
    %v2763 = vunpack.c.h.b16 %v2616
    %v2764 = vunpack.c.l.b16 %v2617
    %v2765 = vunpack.c.h.b16 %v2617
    %v2766 = vunpack.c.l.b16 %v2618
    %v2767 = vunpack.c.h.b16 %v2618
    %v2768 = vunpack.c.l.b16 %v2619
    %v2769 = vunpack.c.h.b16 %v2619
    %v2770 = vunpack.c.l.b16 %v2620
    %v2771 = vunpack.c.h.b16 %v2620
    %v2772 = vunpack.c.l.b16 %v2621
    %v2773 = vunpack.c.h.b16 %v2621
    %v2774 = vunpack.c.l.b16 %v2622
    %v2775 = vunpack.c.h.b16 %v2622
    %v2776 = vunpack.c.l.b16 %v2623
    %v2777 = vunpack.c.h.b16 %v2623
    %v2778 = vunpack.c.l.b16 %v2624
    %v2779 = vunpack.c.h.b16 %v2624
    %v2780 = vunpack.c.l.b16 %v2625
    %v2781 = vunpack.c.h.b16 %v2625
    %v2782 = vpack.c.b16 %v2688, %v2686
    %v2783 = vpack.c.b16 %v2689, %v2687
    %v2784 = vpack.c.b16 %v2692, %v2690
    %v2785 = vpack.c.b16 %v2693, %v2691
    %v2786 = vpack.c.b16 %v2696, %v2694
    %v2787 = vpack.c.b16 %v2697, %v2695
    %v2788 = vpack.c.b16 %v2700, %v2698
    %v2789 = vpack.c.b16 %v2701, %v2699
    %v2790 = vpack.c.b16 %v2704, %v2702
    %v2791 = vpack.c.b16 %v2705, %v2703
    %v2792 = vpack.c.b16 %v2708, %v2706
    %v2793 = vpack.c.b16 %v2709, %v2707
    %v2794 = vpack.c.b16 %v2712, %v2710
    %v2795 = vpack.c.b16 %v2713, %v2711
    %v2796 = vpack.c.b16 %v2716, %v2714
    %v2797 = vpack.c.b16 %v2717, %v2715
    %v2798 = vpack.c.b16 %v2720, %v2718
    %v2799 = vpack.c.b16 %v2721, %v2719
    %v2800 = vpack.c.b16 %v2724, %v2722
    %v2801 = vpack.c.b16 %v2725, %v2723
    %v2802 = vpack.c.b16 %v2728, %v2726
    %v2803 = vpack.c.b16 %v2729, %v2727
    %v2804 = vpack.c.b16 %v2732, %v2730
    %v2805 = vpack.c.b16 %v2733, %v2731
    %v2806 = vpack.c.b16 %v2736, %v2734
    %v2807 = vpack.c.b16 %v2737, %v2735
    %v2808 = vpack.c.b16 %v2740, %v2738
    %v2809 = vpack.c.b16 %v2741, %v2739
    %v2810 = vpack.c.b16 %v2744, %v2742
    %v2811 = vpack.c.b16 %v2745, %v2743
    %v2812 = vpack.c.b16 %v2748, %v2746
    %v2813 = vpack.c.b16 %v2749, %v2747
    %v2814 = vpack.c.b16 %v2752, %v2750
    %v2815 = vpack.c.b16 %v2753, %v2751
    %v2816 = vpack.c.b16 %v2756, %v2754
    %v2817 = vpack.c.b16 %v2757, %v2755
    %v2818 = vpack.c.b16 %v2760, %v2758
    %v2819 = vpack.c.b16 %v2761, %v2759
    %v2820 = vpack.c.b16 %v2764, %v2762
    %v2821 = vpack.c.b16 %v2765, %v2763
    %v2822 = vpack.c.b16 %v2768, %v2766
    %v2823 = vpack.c.b16 %v2769, %v2767
    %v2824 = vpack.c.b16 %v2772, %v2770
    %v2825 = vpack.c.b16 %v2773, %v2771
    %v2826 = vpack.c.b16 %v2776, %v2774
    %v2827 = vpack.c.b16 %v2777, %v2775
    %v2828 = vpack.c.b16 %v2780, %v2778
    %v2829 = vpack.c.b16 %v2781, %v2779
    %2878 = vmatprep.subr.bf16.mxu0 %v2783
    %2879 = vmatpush1.bf16.msra.mxu0 %v2782
    %2880 = vmatprep.subr.bf16.mxu0 %v2785
    %2881 = vmatpush1.bf16.msra.mxu0 %v2784
    %2882 = vmatprep.subr.bf16.mxu0 %v2787
    %2883 = vmatpush1.bf16.msra.mxu0 %v2786
    %2884 = vmatprep.subr.bf16.mxu0 %v2789
    %2885 = vmatpush1.bf16.msra.mxu0 %v2788
    %2886 = vmatprep.subr.bf16.mxu0 %v2791
    %2887 = vmatpush1.bf16.msra.mxu0 %v2790
    %2888 = vmatprep.subr.bf16.mxu0 %v2793
    %2889 = vmatpush1.bf16.msra.mxu0 %v2792
    %2890 = vmatprep.subr.bf16.mxu0 %v2795
    %2891 = vmatpush1.bf16.msra.mxu0 %v2794
    %2892 = vmatprep.subr.bf16.mxu0 %v2797
    %2893 = vmatpush1.bf16.msra.mxu0 %v2796
    %2894 = vmatprep.subr.bf16.mxu0 %v2799
    %2895 = vmatpush1.bf16.msra.mxu0 %v2798
    %2896 = vmatprep.subr.bf16.mxu0 %v2801
    %2897 = vmatpush1.bf16.msra.mxu0 %v2800
    %2898 = vmatprep.subr.bf16.mxu0 %v2803
    %2899 = vmatpush1.bf16.msra.mxu0 %v2802
    %2900 = vmatprep.subr.bf16.mxu0 %v2805
    %2901 = vmatpush1.bf16.msra.mxu0 %v2804
    %2902 = vmatprep.subr.bf16.mxu0 %v2807
    %2903 = vmatpush1.bf16.msra.mxu0 %v2806
    %2904 = vmatprep.subr.bf16.mxu0 %v2809
    %2905 = vmatpush1.bf16.msra.mxu0 %v2808
    %2906 = vmatprep.subr.bf16.mxu0 %v2811
    %2907 = vmatpush1.bf16.msra.mxu0 %v2810
    %2908 = vmatprep.subr.bf16.mxu0 %v2813
    %2909 = vmatpush1.bf16.msra.mxu0 %v2812
    %2910 = vmatprep.mubr.bf16.mxu0 %v127
    %2911 = vmatmul.mubr.bf16.gmra.mrb[0].mxu0 %v126
    %v2912 = vpop.f32.mrb[0].mxu0
    %v2913 = vadd.f32 %v2631, %v2912
    %v2914 = vpop.f32.mrb[0].mxu0
    %v2915 = vadd.f32 %v2635, %v2914
    %v2916 = vpop.f32.mrb[0].mxu0
    %v2917 = vadd.f32 %v2631, %v2916
    %v2918 = vpop.f32.mrb[0].mxu0
    %v2919 = vadd.f32 %v2635, %v2918
    %2920 = vmatprep.mubr.bf16.mxu0 %v130
    %2921 = vmatmul.mubr.bf16.gmra.mrb[0].mxu0 %v129
    %v2922 = vpop.f32.mrb[0].mxu0
    %v2923 = vadd.f32 %v2631, %v2922
    %v2924 = vpop.f32.mrb[0].mxu0
    %v2925 = vadd.f32 %v2635, %v2924
    %v2926 = vpop.f32.mrb[0].mxu0
    %v2927 = vadd.f32 %v2631, %v2926
    %v2928 = vpop.f32.mrb[0].mxu0
    %v2929 = vadd.f32 %v2635, %v2928
    %2930 = vmatprep.mubr.bf16.mxu0 %v133
    %2931 = vmatmul.mubr.bf16.gmra.mrb[0].mxu0 %v132
    %v2932 = vpop.f32.mrb[0].mxu0
    %v2933 = vadd.f32 %v2631, %v2932
    %v2934 = vpop.f32.mrb[0].mxu0
    %v2935 = vadd.f32 %v2635, %v2934
    %v2936 = vpop.f32.mrb[0].mxu0
    %v2937 = vadd.f32 %v2631, %v2936
    %v2938 = vpop.f32.mrb[0].mxu0
    %v2939 = vadd.f32 %v2635, %v2938
    %2940 = vmatprep.mubr.bf16.mxu0 %v136
    %2941 = vmatmul.mubr.bf16.gmra.mrb[0].mxu0 %v135
    %v2942 = vpop.f32.mrb[0].mxu0
    %v2943 = vadd.f32 %v2631, %v2942
    %v2944 = vpop.f32.mrb[0].mxu0
    %v2945 = vadd.f32 %v2635, %v2944
    %v2946 = vpop.f32.mrb[0].mxu0
    %v2947 = vadd.f32 %v2631, %v2946
    %v2948 = vpop.f32.mrb[0].mxu0
    %v2949 = vadd.f32 %v2635, %v2948
    %2950 = vmatprep.mubr.bf16.mxu0 %v139
    %2951 = vmatmul.mubr.bf16.gmra.mrb[0].mxu0 %v138
    %v2952 = vpop.f32.mrb[0].mxu0
    %v2953 = vadd.f32 %v2631, %v2952
    %v2954 = vpop.f32.mrb[0].mxu0
    %v2955 = vadd.f32 %v2635, %v2954
    %v2956 = vpop.f32.mrb[0].mxu0
    %v2957 = vadd.f32 %v2631, %v2956
    %v2958 = vpop.f32.mrb[0].mxu0
    %v2959 = vadd.f32 %v2635, %v2958
    %2960 = vmatprep.mubr.bf16.mxu0 %v142
    %2961 = vmatmul.mubr.bf16.gmra.mrb[0].mxu0 %v141
    %v2962 = vpop.f32.mrb[0].mxu0
    %v2963 = vadd.f32 %v2631, %v2962
    %v2964 = vpop.f32.mrb[0].mxu0
    %v2965 = vadd.f32 %v2635, %v2964
    %v2966 = vpop.f32.mrb[0].mxu0
    %v2967 = vadd.f32 %v2631, %v2966
    %v2968 = vpop.f32.mrb[0].mxu0
    %v2969 = vadd.f32 %v2635, %v2968
    %2970 = vmatprep.mubr.bf16.mxu0 %v145
    %2971 = vmatmul.mubr.bf16.gmra.mrb[0].mxu0 %v144
    %v2972 = vpop.f32.mrb[0].mxu0
    %v2973 = vadd.f32 %v2631, %v2972
    %v2974 = vpop.f32.mrb[0].mxu0
    %v2975 = vadd.f32 %v2635, %v2974
    %v2976 = vpop.f32.mrb[0].mxu0
    %v2977 = vadd.f32 %v2631, %v2976
    %v2978 = vpop.f32.mrb[0].mxu0
    %v2979 = vadd.f32 %v2635, %v2978
    %2980 = vmatprep.mubr.bf16.mxu0 %v148
    %2981 = vmatmul.mubr.bf16.gmra.mrb[0].mxu0 %v147
    %v2982 = vpop.f32.mrb[0].mxu0
    %v2983 = vadd.f32 %v2631, %v2982
    %v2984 = vpop.f32.mrb[0].mxu0
    %v2985 = vadd.f32 %v2635, %v2984
    %v2986 = vpop.f32.mrb[0].mxu0
    %v2987 = vadd.f32 %v2631, %v2986
    %v2988 = vpop.f32.mrb[0].mxu0
    %v2989 = vadd.f32 %v2635, %v2988
    %2990 = vdwg.mxu0
    %2991 = vmatprep.subr.bf16.mxu0 %v2815
    %2992 = vmatpush1.bf16.msra.mxu0 %v2814
    %2993 = vmatprep.subr.bf16.mxu0 %v2817
    %2994 = vmatpush1.bf16.msra.mxu0 %v2816
    %2995 = vmatprep.subr.bf16.mxu0 %v2819
    %2996 = vmatpush1.bf16.msra.mxu0 %v2818
    %2997 = vmatprep.subr.bf16.mxu0 %v2821
    %2998 = vmatpush1.bf16.msra.mxu0 %v2820
    %2999 = vmatprep.subr.bf16.mxu0 %v2823
    %3000 = vmatpush1.bf16.msra.mxu0 %v2822
    %3001 = vmatprep.subr.bf16.mxu0 %v2825
    %3002 = vmatpush1.bf16.msra.mxu0 %v2824
    %3003 = vmatprep.subr.bf16.mxu0 %v2827
    %3004 = vmatpush1.bf16.msra.mxu0 %v2826
    %3005 = vmatprep.subr.bf16.mxu0 %v2829
    %3006 = vmatpush1.bf16.msra.mxu0 %v2828
    %3007 = vmatprep.subr.bf16.mxu0 0
    %3008 = vmatpush1.bf16.msra.mxu0 0
    %3009 = vmatprep.subr.bf16.mxu0 0
    %3010 = vmatpush1.bf16.msra.mxu0 0
    %3011 = vmatprep.subr.bf16.mxu0 0
    %3012 = vmatpush1.bf16.msra.mxu0 0
    %3013 = vmatprep.subr.bf16.mxu0 0
    %3014 = vmatpush1.bf16.msra.mxu0 0
    %3015 = vmatprep.subr.bf16.mxu0 0
    %3016 = vmatpush1.bf16.msra.mxu0 0
    %3017 = vmatprep.subr.bf16.mxu0 0
    %3018 = vmatpush1.bf16.msra.mxu0 0
    %3019 = vmatprep.subr.bf16.mxu0 0
    %3020 = vmatpush1.bf16.msra.mxu0 0
    %3021 = vmatprep.subr.bf16.mxu0 0
    %3022 = vmatpush1.bf16.msra.mxu0 0
    %3023 = vmatprep.mubr.bf16.mxu0 0
    %3024 = vmatmul.mubr.bf16.gmra.mrb[0].mxu0 %v128
    %v3025 = vpop.f32.mrb[0].mxu0
    %v3026 = vadd.f32 %v2913, %v3025
    %v3027 = vpop.f32.mrb[0].mxu0
    %v3028 = vadd.f32 %v2915, %v3027
    %v3029 = vpop.f32.mrb[0].mxu0
    %v3030 = vadd.f32 %v2917, %v3029
    %v3031 = vpop.f32.mrb[0].mxu0
    %v3032 = vadd.f32 %v2919, %v3031
    %3033 = vmatprep.mubr.bf16.mxu0 0
    %3034 = vmatmul.mubr.bf16.gmra.mrb[0].mxu0 %v131
    %v3035 = vpop.f32.mrb[0].mxu0
    %v3036 = vadd.f32 %v2923, %v3035
    %v3037 = vpop.f32.mrb[0].mxu0
    %v3038 = vadd.f32 %v2925, %v3037
    %v3039 = vpop.f32.mrb[0].mxu0
    %v3040 = vadd.f32 %v2927, %v3039
    %v3041 = vpop.f32.mrb[0].mxu0
    %v3042 = vadd.f32 %v2929, %v3041
    %3043 = vmatprep.mubr.bf16.mxu0 0
    %3044 = vmatmul.mubr.bf16.gmra.mrb[0].mxu0 %v134
    %v3045 = vpop.f32.mrb[0].mxu0
    %v3046 = vadd.f32 %v2933, %v3045
    %v3047 = vpop.f32.mrb[0].mxu0
    %v3048 = vadd.f32 %v2935, %v3047
    %v3049 = vpop.f32.mrb[0].mxu0
    %v3050 = vadd.f32 %v2937, %v3049
    %v3051 = vpop.f32.mrb[0].mxu0
    %v3052 = vadd.f32 %v2939, %v3051
    %3053 = vmatprep.mubr.bf16.mxu0 0
    %3054 = vmatmul.mubr.bf16.gmra.mrb[0].mxu0 %v137
    %v3055 = vpop.f32.mrb[0].mxu0
    %v3056 = vadd.f32 %v2943, %v3055
    %v3057 = vpop.f32.mrb[0].mxu0
    %v3058 = vadd.f32 %v2945, %v3057
    %v3059 = vpop.f32.mrb[0].mxu0
    %v3060 = vadd.f32 %v2947, %v3059
    %v3061 = vpop.f32.mrb[0].mxu0
    %v3062 = vadd.f32 %v2949, %v3061
    %3063 = vmatprep.mubr.bf16.mxu0 0
    %3064 = vmatmul.mubr.bf16.gmra.mrb[0].mxu0 %v140
    %v3065 = vpop.f32.mrb[0].mxu0
    %v3066 = vadd.f32 %v2953, %v3065
    %v3067 = vpop.f32.mrb[0].mxu0
    %v3068 = vadd.f32 %v2955, %v3067
    %v3069 = vpop.f32.mrb[0].mxu0
    %v3070 = vadd.f32 %v2957, %v3069
    %v3071 = vpop.f32.mrb[0].mxu0
    %v3072 = vadd.f32 %v2959, %v3071
    %3073 = vmatprep.mubr.bf16.mxu0 0
    %3074 = vmatmul.mubr.bf16.gmra.mrb[0].mxu0 %v143
    %v3075 = vpop.f32.mrb[0].mxu0
    %v3076 = vadd.f32 %v2963, %v3075
    %v3077 = vpop.f32.mrb[0].mxu0
    %v3078 = vadd.f32 %v2965, %v3077
    %v3079 = vpop.f32.mrb[0].mxu0
    %v3080 = vadd.f32 %v2967, %v3079
    %v3081 = vpop.f32.mrb[0].mxu0
    %v3082 = vadd.f32 %v2969, %v3081
    %3083 = vmatprep.mubr.bf16.mxu0 0
    %3084 = vmatmul.mubr.bf16.gmra.mrb[0].mxu0 %v146
    %v3085 = vpop.f32.mrb[0].mxu0
    %v3086 = vadd.f32 %v2973, %v3085
    %v3087 = vpop.f32.mrb[0].mxu0
    %v3088 = vadd.f32 %v2975, %v3087
    %v3089 = vpop.f32.mrb[0].mxu0
    %v3090 = vadd.f32 %v2977, %v3089
    %v3091 = vpop.f32.mrb[0].mxu0
    %v3092 = vadd.f32 %v2979, %v3091
    %3093 = vmatprep.mubr.bf16.mxu0 0
    %3094 = vmatmul.mubr.bf16.gmra.mrb[0].mxu0 %v149
    %v3095 = vpop.f32.mrb[0].mxu0
    %v3096 = vadd.f32 %v2983, %v3095
    %v3097 = vpop.f32.mrb[0].mxu0
    %v3098 = vadd.f32 %v2985, %v3097
    %v3099 = vpop.f32.mrb[0].mxu0
    %v3100 = vadd.f32 %v2987, %v3099
    %v3101 = vpop.f32.mrb[0].mxu0
    %v3102 = vadd.f32 %v2989, %v3101
    %3103 = vdwg.mxu0
    %v3104 = vsub.f32 0.0, %v3026
    %v3105 = vsub.f32 0.0, %v3028
    %v3106 = vsub.f32 0.0, %v3030
    %v3107 = vsub.f32 0.0, %v3032
    %v3108 = vsub.f32 0.0, %v3036
    %v3109 = vsub.f32 0.0, %v3038
    %v3110 = vsub.f32 0.0, %v3040
    %v3111 = vsub.f32 0.0, %v3042
    %v3112 = vsub.f32 0.0, %v3046
    %v3113 = vsub.f32 0.0, %v3048
    %v3114 = vsub.f32 0.0, %v3050
    %v3115 = vsub.f32 0.0, %v3052
    %v3116 = vsub.f32 0.0, %v3056
    %v3117 = vsub.f32 0.0, %v3058
    %v3118 = vsub.f32 0.0, %v3060
    %v3119 = vsub.f32 0.0, %v3062
    %v3120 = vsub.f32 0.0, %v3066
    %v3121 = vsub.f32 0.0, %v3068
    %v3122 = vsub.f32 0.0, %v3070
    %v3123 = vsub.f32 0.0, %v3072
    %v3124 = vsub.f32 0.0, %v3076
    %v3125 = vsub.f32 0.0, %v3078
    %v3126 = vsub.f32 0.0, %v3080
    %v3127 = vsub.f32 0.0, %v3082
    %v3128 = vsub.f32 0.0, %v3086
    %v3129 = vsub.f32 0.0, %v3088
    %v3130 = vsub.f32 0.0, %v3090
    %v3131 = vsub.f32 0.0, %v3092
    %v3132 = vsub.f32 0.0, %v3096
    %v3133 = vsub.f32 0.0, %v3098
    %v3134 = vsub.f32 0.0, %v3100
    %v3135 = vsub.f32 0.0, %v3102
    %v3136 = vpack.c.bf16 %v3106, %v3104
    %v3137 = vpack.c.bf16 %v3107, %v3105
    %v3138 = vpack.c.bf16 %v3110, %v3108
    %v3139 = vpack.c.bf16 %v3111, %v3109
    %v3140 = vpack.c.bf16 %v3114, %v3112
    %v3141 = vpack.c.bf16 %v3115, %v3113
    %v3142 = vpack.c.bf16 %v3118, %v3116
    %v3143 = vpack.c.bf16 %v3119, %v3117
    %v3144 = vpack.c.bf16 %v3122, %v3120
    %v3145 = vpack.c.bf16 %v3123, %v3121
    %v3146 = vpack.c.bf16 %v3126, %v3124
    %v3147 = vpack.c.bf16 %v3127, %v3125
    %v3148 = vpack.c.bf16 %v3130, %v3128
    %v3149 = vpack.c.bf16 %v3131, %v3129
    %v3150 = vpack.c.bf16 %v3134, %v3132
    %v3151 = vpack.c.bf16 %v3135, %v3133
    %v3153 = vmul.bf16 %v3136, 1069105081
    %v3154 = vpow.bf16.pop %v3153
    %v3156 = vmul.bf16 %v3137, 1069105081
    %v3157 = vpow.bf16.pop %v3156
    %v3159 = vmul.bf16 %v3138, 1069105081
    %v3160 = vpow.bf16.pop %v3159
    %v3162 = vmul.bf16 %v3139, 1069105081
    %v3163 = vpow.bf16.pop %v3162
    %v3165 = vmul.bf16 %v3140, 1069105081
    %v3166 = vpow.bf16.pop %v3165
    %v3168 = vmul.bf16 %v3141, 1069105081
    %v3169 = vpow.bf16.pop %v3168
    %v3171 = vmul.bf16 %v3142, 1069105081
    %v3172 = vpow.bf16.pop %v3171
    %v3174 = vmul.bf16 %v3143, 1069105081
    %v3175 = vpow.bf16.pop %v3174
    %v3177 = vmul.bf16 %v3144, 1069105081
    %v3178 = vpow.bf16.pop %v3177
    %v3180 = vmul.bf16 %v3145, 1069105081
    %v3181 = vpow.bf16.pop %v3180
    %v3183 = vmul.bf16 %v3146, 1069105081
    %v3184 = vpow.bf16.pop %v3183
    %v3186 = vmul.bf16 %v3147, 1069105081
    %v3187 = vpow.bf16.pop %v3186
    %v3189 = vmul.bf16 %v3148, 1069105081
    %v3190 = vpow.bf16.pop %v3189
    %v3192 = vmul.bf16 %v3149, 1069105081
    %v3193 = vpow.bf16.pop %v3192
    %v3195 = vmul.bf16 %v3150, 1069105081
    %v3196 = vpow.bf16.pop %v3195
    %v3198 = vmul.bf16 %v3151, 1069105081
    %v3199 = vpow.bf16.pop %v3198
    %v3200 = vunpack.c.l.bf16 %v3154
    %v3201 = vunpack.c.l.bf16 %v3157
    %v3202 = vunpack.c.h.bf16 %v3154
    %v3203 = vunpack.c.h.bf16 %v3157
    %v3204 = vunpack.c.l.bf16 %v3160
    %v3205 = vunpack.c.l.bf16 %v3163
    %v3206 = vunpack.c.h.bf16 %v3160
    %v3207 = vunpack.c.h.bf16 %v3163
    %v3208 = vunpack.c.l.bf16 %v3166
    %v3209 = vunpack.c.l.bf16 %v3169
    %v3210 = vunpack.c.h.bf16 %v3166
    %v3211 = vunpack.c.h.bf16 %v3169
    %v3212 = vunpack.c.l.bf16 %v3172
    %v3213 = vunpack.c.l.bf16 %v3175
    %v3214 = vunpack.c.h.bf16 %v3172
    %v3215 = vunpack.c.h.bf16 %v3175
    %v3216 = vunpack.c.l.bf16 %v3178
    %v3217 = vunpack.c.l.bf16 %v3181
    %v3218 = vunpack.c.h.bf16 %v3178
    %v3219 = vunpack.c.h.bf16 %v3181
    %v3220 = vunpack.c.l.bf16 %v3184
    %v3221 = vunpack.c.l.bf16 %v3187
    %v3222 = vunpack.c.h.bf16 %v3184
    %v3223 = vunpack.c.h.bf16 %v3187
    %v3224 = vunpack.c.l.bf16 %v3190
    %v3225 = vunpack.c.l.bf16 %v3193
    %v3226 = vunpack.c.h.bf16 %v3190
    %v3227 = vunpack.c.h.bf16 %v3193
    %v3228 = vunpack.c.l.bf16 %v3196
    %v3229 = vunpack.c.l.bf16 %v3199
    %v3230 = vunpack.c.h.bf16 %v3196
    %v3231 = vunpack.c.h.bf16 %v3199
    %v3232 = vadd.f32 %v3200, 1.0
    %v3233 = vadd.f32 %v3201, 1.0
    %v3234 = vadd.f32 %v3202, 1.0
    %v3235 = vadd.f32 %v3203, 1.0
    %v3236 = vadd.f32 %v3204, 1.0
    %v3237 = vadd.f32 %v3205, 1.0
    %v3238 = vadd.f32 %v3206, 1.0
    %v3239 = vadd.f32 %v3207, 1.0
    %v3240 = vadd.f32 %v3208, 1.0
    %v3241 = vadd.f32 %v3209, 1.0
    %v3242 = vadd.f32 %v3210, 1.0
    %v3243 = vadd.f32 %v3211, 1.0
    %v3244 = vadd.f32 %v3212, 1.0
    %v3245 = vadd.f32 %v3213, 1.0
    %v3246 = vadd.f32 %v3214, 1.0
    %v3247 = vadd.f32 %v3215, 1.0
    %v3248 = vadd.f32 %v3216, 1.0
    %v3249 = vadd.f32 %v3217, 1.0
    %v3250 = vadd.f32 %v3218, 1.0
    %v3251 = vadd.f32 %v3219, 1.0
    %v3252 = vadd.f32 %v3220, 1.0
    %v3253 = vadd.f32 %v3221, 1.0
    %v3254 = vadd.f32 %v3222, 1.0
    %v3255 = vadd.f32 %v3223, 1.0
    %v3256 = vadd.f32 %v3224, 1.0
    %v3257 = vadd.f32 %v3225, 1.0
    %v3258 = vadd.f32 %v3226, 1.0
    %v3259 = vadd.f32 %v3227, 1.0
    %v3260 = vadd.f32 %v3228, 1.0
    %v3261 = vadd.f32 %v3229, 1.0
    %v3262 = vadd.f32 %v3230, 1.0
    %v3263 = vadd.f32 %v3231, 1.0
    %v3264 = vrcp.pop %v3232
    %v3265 = vrcp.pop %v3233
    %v3266 = vrcp.pop %v3234
    %v3267 = vrcp.pop %v3235
    %v3268 = vrcp.pop %v3236
    %v3269 = vrcp.pop %v3237
    %v3270 = vrcp.pop %v3238
    %v3271 = vrcp.pop %v3239
    %v3272 = vrcp.pop %v3240
    %v3273 = vrcp.pop %v3241
    %v3274 = vrcp.pop %v3242
    %v3275 = vrcp.pop %v3243
    %v3276 = vrcp.pop %v3244
    %v3277 = vrcp.pop %v3245
    %v3278 = vrcp.pop %v3246
    %v3279 = vrcp.pop %v3247
    %v3280 = vrcp.pop %v3248
    %v3281 = vrcp.pop %v3249
    %v3282 = vrcp.pop %v3250
    %v3283 = vrcp.pop %v3251
    %v3284 = vrcp.pop %v3252
    %v3285 = vrcp.pop %v3253
    %v3286 = vrcp.pop %v3254
    %v3287 = vrcp.pop %v3255
    %v3288 = vrcp.pop %v3256
    %v3289 = vrcp.pop %v3257
    %v3290 = vrcp.pop %v3258
    %v3291 = vrcp.pop %v3259
    %v3292 = vrcp.pop %v3260
    %v3293 = vrcp.pop %v3261
    %v3294 = vrcp.pop %v3262
    %v3295 = vrcp.pop %v3263
    %v3296 = vmul.f32 %v3026, %v3264
    %v3297 = vmul.f32 %v3028, %v3265
    %v3298 = vmul.f32 %v3030, %v3266
    %v3299 = vmul.f32 %v3032, %v3267
    %v3300 = vmul.f32 %v3036, %v3268
    %v3301 = vmul.f32 %v3038, %v3269
    %v3302 = vmul.f32 %v3040, %v3270
    %v3303 = vmul.f32 %v3042, %v3271
    %v3304 = vmul.f32 %v3046, %v3272
    %v3305 = vmul.f32 %v3048, %v3273
    %v3306 = vmul.f32 %v3050, %v3274
    %v3307 = vmul.f32 %v3052, %v3275
    %v3308 = vmul.f32 %v3056, %v3276
    %v3309 = vmul.f32 %v3058, %v3277
    %v3310 = vmul.f32 %v3060, %v3278
    %v3311 = vmul.f32 %v3062, %v3279
    %v3312 = vmul.f32 %v3066, %v3280
    %v3313 = vmul.f32 %v3068, %v3281
    %v3314 = vmul.f32 %v3070, %v3282
    %v3315 = vmul.f32 %v3072, %v3283
    %v3316 = vmul.f32 %v3076, %v3284
    %v3317 = vmul.f32 %v3078, %v3285
    %v3318 = vmul.f32 %v3080, %v3286
    %v3319 = vmul.f32 %v3082, %v3287
    %v3320 = vmul.f32 %v3086, %v3288
    %v3321 = vmul.f32 %v3088, %v3289
    %v3322 = vmul.f32 %v3090, %v3290
    %v3323 = vmul.f32 %v3092, %v3291
    %v3324 = vmul.f32 %v3096, %v3292
    %v3325 = vmul.f32 %v3098, %v3293
    %v3326 = vmul.f32 %v3100, %v3294
    %v3327 = vmul.f32 %v3102, %v3295
    %v3328 = vpack.c.bf16 %v3298, %v3296
    %v3329 = vpack.c.bf16 %v3299, %v3297
    %v3330 = vpack.c.bf16 %v3302, %v3300
    %v3331 = vpack.c.bf16 %v3303, %v3301
    %v3332 = vpack.c.bf16 %v3306, %v3304
    %v3333 = vpack.c.bf16 %v3307, %v3305
    %v3334 = vpack.c.bf16 %v3310, %v3308
    %v3335 = vpack.c.bf16 %v3311, %v3309
    %v3336 = vpack.c.bf16 %v3314, %v3312
    %v3337 = vpack.c.bf16 %v3315, %v3313
    %v3338 = vpack.c.bf16 %v3318, %v3316
    %v3339 = vpack.c.bf16 %v3319, %v3317
    %v3340 = vpack.c.bf16 %v3322, %v3320
    %v3341 = vpack.c.bf16 %v3323, %v3321
    %v3342 = vpack.c.bf16 %v3326, %v3324
    %v3343 = vpack.c.bf16 %v3327, %v3325
    %3344 = vmatprep.subr.bf16.mxu0 %v3329
    %3345 = vmatpush1.bf16.msra.mxu0 %v3328
    %3346 = vmatprep.subr.bf16.mxu0 %v3331
    %3347 = vmatpush1.bf16.msra.mxu0 %v3330
    %3348 = vmatprep.subr.bf16.mxu0 %v3333
    %3349 = vmatpush1.bf16.msra.mxu0 %v3332
    %3350 = vmatprep.subr.bf16.mxu0 %v3335
    %3351 = vmatpush1.bf16.msra.mxu0 %v3334
    %3352 = vmatprep.subr.bf16.mxu0 %v3337
    %3353 = vmatpush1.bf16.msra.mxu0 %v3336
    %3354 = vmatprep.subr.bf16.mxu0 %v3339
    %3355 = vmatpush1.bf16.msra.mxu0 %v3338
    %3356 = vmatprep.subr.bf16.mxu0 %v3341
    %3357 = vmatpush1.bf16.msra.mxu0 %v3340
    %3358 = vmatprep.subr.bf16.mxu0 %v3343
    %3359 = vmatpush1.bf16.msra.mxu0 %v3342
    %3360 = vmatprep.subr.bf16.mxu0 0
    %3361 = vmatpush1.bf16.msra.mxu0 0
    %3362 = vmatprep.subr.bf16.mxu0 0
    %3363 = vmatpush1.bf16.msra.mxu0 0
    %3364 = vmatprep.subr.bf16.mxu0 0
    %3365 = vmatpush1.bf16.msra.mxu0 0
    %3366 = vmatprep.subr.bf16.mxu0 0
    %3367 = vmatpush1.bf16.msra.mxu0 0
    %3368 = vmatprep.subr.bf16.mxu0 0
    %3369 = vmatpush1.bf16.msra.mxu0 0
    %3370 = vmatprep.subr.bf16.mxu0 0
    %3371 = vmatpush1.bf16.msra.mxu0 0
    %3372 = vmatprep.subr.bf16.mxu0 0
    %3373 = vmatpush1.bf16.msra.mxu0 0
    %3374 = vmatprep.subr.bf16.mxu0 0
    %3375 = vmatpush1.bf16.msra.mxu0 0
    %3376 = vmatprep.mubr.bf16.mxu0 0
    %3377 = vmatmul.mubr.bf16.gmra.mrb[0].mxu0 %v150
    %v3378 = vpop.f32.mrb[0].mxu0
    %v3379 = vadd.f32 0.0, %v3378
    %v3380 = vpop.f32.mrb[0].mxu0
    %v3381 = vadd.f32 0.0, %v3380
    %v3382 = vpop.f32.mrb[0].mxu0
    %v3383 = vpop.f32.mrb[0].mxu0
    %3384 = vdwg.mxu0
    %v3385 = vmul.f32 %v3379, 0.015625
    %v3386 = vmul.f32 %v3381, 0.015625
    %v3387 = vld [vmem:[#allocation5 + $0x20] sm:$0xff]
    %v3388 = vld [vmem:[#allocation5 + $0x48] sm:$0xff]
    %v3389 = vld [vmem:[#allocation5 + $0x70] sm:$0xff]
    %v3390 = vld [vmem:[#allocation5 + $0x98] sm:$0xff]
    %v3391 = vld [vmem:[#allocation5 + $0xc0] sm:$0xff]
    %v3392 = vld [vmem:[#allocation5 + $0xe8] sm:$0xff]
    %v3393 = vld [vmem:[#allocation5 + $0x110] sm:$0xff]
    %v3394 = vld [vmem:[#allocation5 + $0x138] sm:$0xff]
    %v3395 = vld [vmem:[#allocation5 + $0x160] sm:$0xff]
    %v3396 = vld [vmem:[#allocation5 + $0x188] sm:$0xff]
    %v3397 = vld [vmem:[#allocation5 + $0x1b0] sm:$0xff]
    %v3398 = vld [vmem:[#allocation5 + $0x1d8] sm:$0xff]
    %v3399 = vld [vmem:[#allocation5 + $0x200] sm:$0xff]
    %v3400 = vld [vmem:[#allocation5 + $0x228] sm:$0xff]
    %v3401 = vld [vmem:[#allocation5 + $0x250] sm:$0xff]
    %v3402 = vld [vmem:[#allocation5 + $0x278] sm:$0xff]
    %v3403 = vld [vmem:[#allocation5 + $0x2a0] sm:$0xff]
    %v3404 = vld [vmem:[#allocation5 + $0x2c8] sm:$0xff]
    %v3405 = vld [vmem:[#allocation5 + $0x2f0] sm:$0xff]
    %v3406 = vld [vmem:[#allocation5 + $0x318] sm:$0xff]
    %v3407 = vld [vmem:[#allocation5 + $0x340] sm:$0xff]
    %v3408 = vld [vmem:[#allocation5 + $0x368] sm:$0xff]
    %v3409 = vld [vmem:[#allocation5 + $0x390] sm:$0xff]
    %v3410 = vld [vmem:[#allocation5 + $0x3b8] sm:$0xff]
    %v3411 = vld [vmem:[#allocation5 + $0x3e0] sm:$0xff]
    %v3412 = vld [vmem:[#allocation5 + $0x408] sm:$0xff]
    %v3413 = vld [vmem:[#allocation5 + $0x430] sm:$0xff]
    %v3414 = vld [vmem:[#allocation5 + $0x458] sm:$0xff]
    %v3415 = vld [vmem:[#allocation5 + $0x480] sm:$0xff]
    %v3416 = vld [vmem:[#allocation5 + $0x4a8] sm:$0xff]
    %v3417 = vld [vmem:[#allocation5 + $0x4d0] sm:$0xff]
    %v3418 = vld [vmem:[#allocation5 + $0x4f8] sm:$0xff]
    %v3419 = vld [vmem:[#allocation5 + $0x520] sm:$0xff]
    %v3420 = vld [vmem:[#allocation5 + $0x548] sm:$0xff]
    %v3421 = vld [vmem:[#allocation5 + $0x570] sm:$0xff]
    %v3422 = vld [vmem:[#allocation5 + $0x598] sm:$0xff]
    %v3423 = vld [vmem:[#allocation5 + $0x5c0] sm:$0xff]
    %v3424 = vld [vmem:[#allocation5 + $0x5e8] sm:$0xff]
    %v3425 = vld [vmem:[#allocation5 + $0x610] sm:$0xff]
    %v3426 = vld [vmem:[#allocation5 + $0x638] sm:$0xff]
    %v3427 = vld [vmem:[#allocation5 + $0x660] sm:$0xff]
    %v3428 = vld [vmem:[#allocation5 + $0x688] sm:$0xff]
    %v3429 = vld [vmem:[#allocation5 + $0x6b0] sm:$0xff]
    %v3430 = vld [vmem:[#allocation5 + $0x6d8] sm:$0xff]
    %v3431 = vld [vmem:[#allocation5 + $0x700] sm:$0xff]
    %v3432 = vld [vmem:[#allocation5 + $0x728] sm:$0xff]
    %v3433 = vld [vmem:[#allocation5 + $0x750] sm:$0xff]
    %v3434 = vld [vmem:[#allocation5 + $0x778] sm:$0xff]
    %v3435 = vld [vmem:[#allocation7 + $0x8] sm:$0x3]
    %v3437 = vlaneseq
    %v3438 = vshrl.u32 %v3437, 7
    %v3439 = vsub.s32 0, %v3438
    %v3440 = vrot.slane %v3435, %v3439
    %v3441 = vlaneseq
    %v3442 = vshrl.u32 %v3441, 7
    %v3443 = vsub.s32 1, %v3442
    %v3444 = vrot.slane %v3435, %v3443
    %v3495 = vunpack.c.l.b16 %v3387
    %v3496 = vunpack.c.h.b16 %v3387
    %v3497 = vunpack.c.l.b16 %v3388
    %v3498 = vunpack.c.h.b16 %v3388
    %v3499 = vunpack.c.l.b16 %v3389
    %v3500 = vunpack.c.h.b16 %v3389
    %v3501 = vunpack.c.l.b16 %v3390
    %v3502 = vunpack.c.h.b16 %v3390
    %v3503 = vunpack.c.l.b16 %v3391
    %v3504 = vunpack.c.h.b16 %v3391
    %v3505 = vunpack.c.l.b16 %v3392
    %v3506 = vunpack.c.h.b16 %v3392
    %v3507 = vunpack.c.l.b16 %v3393
    %v3508 = vunpack.c.h.b16 %v3393
    %v3509 = vunpack.c.l.b16 %v3394
    %v3510 = vunpack.c.h.b16 %v3394
    %v3511 = vunpack.c.l.b16 %v3395
    %v3512 = vunpack.c.h.b16 %v3395
    %v3513 = vunpack.c.l.b16 %v3396
    %v3514 = vunpack.c.h.b16 %v3396
    %v3515 = vunpack.c.l.b16 %v3397
    %v3516 = vunpack.c.h.b16 %v3397
    %v3517 = vunpack.c.l.b16 %v3398
    %v3518 = vunpack.c.h.b16 %v3398
    %v3519 = vunpack.c.l.b16 %v3399
    %v3520 = vunpack.c.h.b16 %v3399
    %v3521 = vunpack.c.l.b16 %v3400
    %v3522 = vunpack.c.h.b16 %v3400
    %v3523 = vunpack.c.l.b16 %v3401
    %v3524 = vunpack.c.h.b16 %v3401
    %v3525 = vunpack.c.l.b16 %v3402
    %v3526 = vunpack.c.h.b16 %v3402
    %v3527 = vunpack.c.l.b16 %v3403
    %v3528 = vunpack.c.h.b16 %v3403
    %v3529 = vunpack.c.l.b16 %v3404
    %v3530 = vunpack.c.h.b16 %v3404
    %v3531 = vunpack.c.l.b16 %v3405
    %v3532 = vunpack.c.h.b16 %v3405
    %v3533 = vunpack.c.l.b16 %v3406
    %v3534 = vunpack.c.h.b16 %v3406
    %v3535 = vunpack.c.l.b16 %v3407
    %v3536 = vunpack.c.h.b16 %v3407
    %v3537 = vunpack.c.l.b16 %v3408
    %v3538 = vunpack.c.h.b16 %v3408
    %v3539 = vunpack.c.l.b16 %v3409
    %v3540 = vunpack.c.h.b16 %v3409
    %v3541 = vunpack.c.l.b16 %v3410
    %v3542 = vunpack.c.h.b16 %v3410
    %v3543 = vunpack.c.l.b16 %v3411
    %v3544 = vunpack.c.h.b16 %v3411
    %v3545 = vunpack.c.l.b16 %v3412
    %v3546 = vunpack.c.h.b16 %v3412
    %v3547 = vunpack.c.l.b16 %v3413
    %v3548 = vunpack.c.h.b16 %v3413
    %v3549 = vunpack.c.l.b16 %v3414
    %v3550 = vunpack.c.h.b16 %v3414
    %v3551 = vunpack.c.l.b16 %v3415
    %v3552 = vunpack.c.h.b16 %v3415
    %v3553 = vunpack.c.l.b16 %v3416
    %v3554 = vunpack.c.h.b16 %v3416
    %v3555 = vunpack.c.l.b16 %v3417
    %v3556 = vunpack.c.h.b16 %v3417
    %v3557 = vunpack.c.l.b16 %v3418
    %v3558 = vunpack.c.h.b16 %v3418
    %v3559 = vunpack.c.l.b16 %v3419
    %v3560 = vunpack.c.h.b16 %v3419
    %v3561 = vunpack.c.l.b16 %v3420
    %v3562 = vunpack.c.h.b16 %v3420
    %v3563 = vunpack.c.l.b16 %v3421
    %v3564 = vunpack.c.h.b16 %v3421
    %v3565 = vunpack.c.l.b16 %v3422
    %v3566 = vunpack.c.h.b16 %v3422
    %v3567 = vunpack.c.l.b16 %v3423
    %v3568 = vunpack.c.h.b16 %v3423
    %v3569 = vunpack.c.l.b16 %v3424
    %v3570 = vunpack.c.h.b16 %v3424
    %v3571 = vunpack.c.l.b16 %v3425
    %v3572 = vunpack.c.h.b16 %v3425
    %v3573 = vunpack.c.l.b16 %v3426
    %v3574 = vunpack.c.h.b16 %v3426
    %v3575 = vunpack.c.l.b16 %v3427
    %v3576 = vunpack.c.h.b16 %v3427
    %v3577 = vunpack.c.l.b16 %v3428
    %v3578 = vunpack.c.h.b16 %v3428
    %v3579 = vunpack.c.l.b16 %v3429
    %v3580 = vunpack.c.h.b16 %v3429
    %v3581 = vunpack.c.l.b16 %v3430
    %v3582 = vunpack.c.h.b16 %v3430
    %v3583 = vunpack.c.l.b16 %v3431
    %v3584 = vunpack.c.h.b16 %v3431
    %v3585 = vunpack.c.l.b16 %v3432
    %v3586 = vunpack.c.h.b16 %v3432
    %v3587 = vunpack.c.l.b16 %v3433
    %v3588 = vunpack.c.h.b16 %v3433
    %v3589 = vunpack.c.l.b16 %v3434
    %v3590 = vunpack.c.h.b16 %v3434
    %v3591 = vpack.c.b16 %v3497, %v3495
    %v3592 = vpack.c.b16 %v3498, %v3496
    %v3593 = vpack.c.b16 %v3501, %v3499
    %v3594 = vpack.c.b16 %v3502, %v3500
    %v3595 = vpack.c.b16 %v3505, %v3503
    %v3596 = vpack.c.b16 %v3506, %v3504
    %v3597 = vpack.c.b16 %v3509, %v3507
    %v3598 = vpack.c.b16 %v3510, %v3508
    %v3599 = vpack.c.b16 %v3513, %v3511
    %v3600 = vpack.c.b16 %v3514, %v3512
    %v3601 = vpack.c.b16 %v3517, %v3515
    %v3602 = vpack.c.b16 %v3518, %v3516
    %v3603 = vpack.c.b16 %v3521, %v3519
    %v3604 = vpack.c.b16 %v3522, %v3520
    %v3605 = vpack.c.b16 %v3525, %v3523
    %v3606 = vpack.c.b16 %v3526, %v3524
    %v3607 = vpack.c.b16 %v3529, %v3527
    %v3608 = vpack.c.b16 %v3530, %v3528
    %v3609 = vpack.c.b16 %v3533, %v3531
    %v3610 = vpack.c.b16 %v3534, %v3532
    %v3611 = vpack.c.b16 %v3537, %v3535
    %v3612 = vpack.c.b16 %v3538, %v3536
    %v3613 = vpack.c.b16 %v3541, %v3539
    %v3614 = vpack.c.b16 %v3542, %v3540
    %v3615 = vpack.c.b16 %v3545, %v3543
    %v3616 = vpack.c.b16 %v3546, %v3544
    %v3617 = vpack.c.b16 %v3549, %v3547
    %v3618 = vpack.c.b16 %v3550, %v3548
    %v3619 = vpack.c.b16 %v3553, %v3551
    %v3620 = vpack.c.b16 %v3554, %v3552
    %v3621 = vpack.c.b16 %v3557, %v3555
    %v3622 = vpack.c.b16 %v3558, %v3556
    %v3623 = vpack.c.b16 %v3561, %v3559
    %v3624 = vpack.c.b16 %v3562, %v3560
    %v3625 = vpack.c.b16 %v3565, %v3563
    %v3626 = vpack.c.b16 %v3566, %v3564
    %v3627 = vpack.c.b16 %v3569, %v3567
    %v3628 = vpack.c.b16 %v3570, %v3568
    %v3629 = vpack.c.b16 %v3573, %v3571
    %v3630 = vpack.c.b16 %v3574, %v3572
    %v3631 = vpack.c.b16 %v3577, %v3575
    %v3632 = vpack.c.b16 %v3578, %v3576
    %v3633 = vpack.c.b16 %v3581, %v3579
    %v3634 = vpack.c.b16 %v3582, %v3580
    %v3635 = vpack.c.b16 %v3585, %v3583
    %v3636 = vpack.c.b16 %v3586, %v3584
    %v3637 = vpack.c.b16 %v3589, %v3587
    %v3638 = vpack.c.b16 %v3590, %v3588
    %3687 = vmatprep.subr.bf16.mxu0 %v3592
    %3688 = vmatpush1.bf16.msra.mxu0 %v3591
    %3689 = vmatprep.subr.bf16.mxu0 %v3594
    %3690 = vmatpush1.bf16.msra.mxu0 %v3593
    %3691 = vmatprep.subr.bf16.mxu0 %v3596
    %3692 = vmatpush1.bf16.msra.mxu0 %v3595
    %3693 = vmatprep.subr.bf16.mxu0 %v3598
    %3694 = vmatpush1.bf16.msra.mxu0 %v3597
    %3695 = vmatprep.subr.bf16.mxu0 %v3600
    %3696 = vmatpush1.bf16.msra.mxu0 %v3599
    %3697 = vmatprep.subr.bf16.mxu0 %v3602
    %3698 = vmatpush1.bf16.msra.mxu0 %v3601
    %3699 = vmatprep.subr.bf16.mxu0 %v3604
    %3700 = vmatpush1.bf16.msra.mxu0 %v3603
    %3701 = vmatprep.subr.bf16.mxu0 %v3606
    %3702 = vmatpush1.bf16.msra.mxu0 %v3605
    %3703 = vmatprep.subr.bf16.mxu0 %v3608
    %3704 = vmatpush1.bf16.msra.mxu0 %v3607
    %3705 = vmatprep.subr.bf16.mxu0 %v3610
    %3706 = vmatpush1.bf16.msra.mxu0 %v3609
    %3707 = vmatprep.subr.bf16.mxu0 %v3612
    %3708 = vmatpush1.bf16.msra.mxu0 %v3611
    %3709 = vmatprep.subr.bf16.mxu0 %v3614
    %3710 = vmatpush1.bf16.msra.mxu0 %v3613
    %3711 = vmatprep.subr.bf16.mxu0 %v3616
    %3712 = vmatpush1.bf16.msra.mxu0 %v3615
    %3713 = vmatprep.subr.bf16.mxu0 %v3618
    %3714 = vmatpush1.bf16.msra.mxu0 %v3617
    %3715 = vmatprep.subr.bf16.mxu0 %v3620
    %3716 = vmatpush1.bf16.msra.mxu0 %v3619
    %3717 = vmatprep.subr.bf16.mxu0 %v3622
    %3718 = vmatpush1.bf16.msra.mxu0 %v3621
    %3719 = vmatprep.mubr.bf16.mxu0 %v127
    %3720 = vmatmul.mubr.bf16.gmra.mrb[0].mxu0 %v126
    %v3721 = vpop.f32.mrb[0].mxu0
    %v3722 = vadd.f32 %v3440, %v3721
    %v3723 = vpop.f32.mrb[0].mxu0
    %v3724 = vadd.f32 %v3444, %v3723
    %v3725 = vpop.f32.mrb[0].mxu0
    %v3726 = vadd.f32 %v3440, %v3725
    %v3727 = vpop.f32.mrb[0].mxu0
    %v3728 = vadd.f32 %v3444, %v3727
    %3729 = vmatprep.mubr.bf16.mxu0 %v130
    %3730 = vmatmul.mubr.bf16.gmra.mrb[0].mxu0 %v129
    %v3731 = vpop.f32.mrb[0].mxu0
    %v3732 = vadd.f32 %v3440, %v3731
    %v3733 = vpop.f32.mrb[0].mxu0
    %v3734 = vadd.f32 %v3444, %v3733
    %v3735 = vpop.f32.mrb[0].mxu0
    %v3736 = vadd.f32 %v3440, %v3735
    %v3737 = vpop.f32.mrb[0].mxu0
    %v3738 = vadd.f32 %v3444, %v3737
    %3739 = vmatprep.mubr.bf16.mxu0 %v133
    %3740 = vmatmul.mubr.bf16.gmra.mrb[0].mxu0 %v132
    %v3741 = vpop.f32.mrb[0].mxu0
    %v3742 = vadd.f32 %v3440, %v3741
    %v3743 = vpop.f32.mrb[0].mxu0
    %v3744 = vadd.f32 %v3444, %v3743
    %v3745 = vpop.f32.mrb[0].mxu0
    %v3746 = vadd.f32 %v3440, %v3745
    %v3747 = vpop.f32.mrb[0].mxu0
    %v3748 = vadd.f32 %v3444, %v3747
    %3749 = vmatprep.mubr.bf16.mxu0 %v136
    %3750 = vmatmul.mubr.bf16.gmra.mrb[0].mxu0 %v135
    %v3751 = vpop.f32.mrb[0].mxu0
    %v3752 = vadd.f32 %v3440, %v3751
    %v3753 = vpop.f32.mrb[0].mxu0
    %v3754 = vadd.f32 %v3444, %v3753
    %v3755 = vpop.f32.mrb[0].mxu0
    %v3756 = vadd.f32 %v3440, %v3755
    %v3757 = vpop.f32.mrb[0].mxu0
    %v3758 = vadd.f32 %v3444, %v3757
    %3759 = vmatprep.mubr.bf16.mxu0 %v139
    %3760 = vmatmul.mubr.bf16.gmra.mrb[0].mxu0 %v138
    %v3761 = vpop.f32.mrb[0].mxu0
    %v3762 = vadd.f32 %v3440, %v3761
    %v3763 = vpop.f32.mrb[0].mxu0
    %v3764 = vadd.f32 %v3444, %v3763
    %v3765 = vpop.f32.mrb[0].mxu0
    %v3766 = vadd.f32 %v3440, %v3765
    %v3767 = vpop.f32.mrb[0].mxu0
    %v3768 = vadd.f32 %v3444, %v3767
    %3769 = vmatprep.mubr.bf16.mxu0 %v142
    %3770 = vmatmul.mubr.bf16.gmra.mrb[0].mxu0 %v141
    %v3771 = vpop.f32.mrb[0].mxu0
    %v3772 = vadd.f32 %v3440, %v3771
    %v3773 = vpop.f32.mrb[0].mxu0
    %v3774 = vadd.f32 %v3444, %v3773
    %v3775 = vpop.f32.mrb[0].mxu0
    %v3776 = vadd.f32 %v3440, %v3775
    %v3777 = vpop.f32.mrb[0].mxu0
    %v3778 = vadd.f32 %v3444, %v3777
    %3779 = vmatprep.mubr.bf16.mxu0 %v145
    %3780 = vmatmul.mubr.bf16.gmra.mrb[0].mxu0 %v144
    %v3781 = vpop.f32.mrb[0].mxu0
    %v3782 = vadd.f32 %v3440, %v3781
    %v3783 = vpop.f32.mrb[0].mxu0
    %v3784 = vadd.f32 %v3444, %v3783
    %v3785 = vpop.f32.mrb[0].mxu0
    %v3786 = vadd.f32 %v3440, %v3785
    %v3787 = vpop.f32.mrb[0].mxu0
    %v3788 = vadd.f32 %v3444, %v3787
    %3789 = vmatprep.mubr.bf16.mxu0 %v148
    %3790 = vmatmul.mubr.bf16.gmra.mrb[0].mxu0 %v147
    %v3791 = vpop.f32.mrb[0].mxu0
    %v3792 = vadd.f32 %v3440, %v3791
    %v3793 = vpop.f32.mrb[0].mxu0
    %v3794 = vadd.f32 %v3444, %v3793
    %v3795 = vpop.f32.mrb[0].mxu0
    %v3796 = vadd.f32 %v3440, %v3795
    %v3797 = vpop.f32.mrb[0].mxu0
    %v3798 = vadd.f32 %v3444, %v3797
    %3799 = vdwg.mxu0
    %3800 = vmatprep.subr.bf16.mxu0 %v3624
    %3801 = vmatpush1.bf16.msra.mxu0 %v3623
    %3802 = vmatprep.subr.bf16.mxu0 %v3626
    %3803 = vmatpush1.bf16.msra.mxu0 %v3625
    %3804 = vmatprep.subr.bf16.mxu0 %v3628
    %3805 = vmatpush1.bf16.msra.mxu0 %v3627
    %3806 = vmatprep.subr.bf16.mxu0 %v3630
    %3807 = vmatpush1.bf16.msra.mxu0 %v3629
    %3808 = vmatprep.subr.bf16.mxu0 %v3632
    %3809 = vmatpush1.bf16.msra.mxu0 %v3631
    %3810 = vmatprep.subr.bf16.mxu0 %v3634
    %3811 = vmatpush1.bf16.msra.mxu0 %v3633
    %3812 = vmatprep.subr.bf16.mxu0 %v3636
    %3813 = vmatpush1.bf16.msra.mxu0 %v3635
    %3814 = vmatprep.subr.bf16.mxu0 %v3638
    %3815 = vmatpush1.bf16.msra.mxu0 %v3637
    %3816 = vmatprep.subr.bf16.mxu0 0
    %3817 = vmatpush1.bf16.msra.mxu0 0
    %3818 = vmatprep.subr.bf16.mxu0 0
    %3819 = vmatpush1.bf16.msra.mxu0 0
    %3820 = vmatprep.subr.bf16.mxu0 0
    %3821 = vmatpush1.bf16.msra.mxu0 0
    %3822 = vmatprep.subr.bf16.mxu0 0
    %3823 = vmatpush1.bf16.msra.mxu0 0
    %3824 = vmatprep.subr.bf16.mxu0 0
    %3825 = vmatpush1.bf16.msra.mxu0 0
    %3826 = vmatprep.subr.bf16.mxu0 0
    %3827 = vmatpush1.bf16.msra.mxu0 0
    %3828 = vmatprep.subr.bf16.mxu0 0
    %3829 = vmatpush1.bf16.msra.mxu0 0
    %3830 = vmatprep.subr.bf16.mxu0 0
    %3831 = vmatpush1.bf16.msra.mxu0 0
    %3832 = vmatprep.mubr.bf16.mxu0 0
    %3833 = vmatmul.mubr.bf16.gmra.mrb[0].mxu0 %v128
    %v3834 = vpop.f32.mrb[0].mxu0
    %v3835 = vadd.f32 %v3722, %v3834
    %v3836 = vpop.f32.mrb[0].mxu0
    %v3837 = vadd.f32 %v3724, %v3836
    %v3838 = vpop.f32.mrb[0].mxu0
    %v3839 = vadd.f32 %v3726, %v3838
    %v3840 = vpop.f32.mrb[0].mxu0
    %v3841 = vadd.f32 %v3728, %v3840
    %3842 = vmatprep.mubr.bf16.mxu0 0
    %3843 = vmatmul.mubr.bf16.gmra.mrb[0].mxu0 %v131
    %v3844 = vpop.f32.mrb[0].mxu0
    %v3845 = vadd.f32 %v3732, %v3844
    %v3846 = vpop.f32.mrb[0].mxu0
    %v3847 = vadd.f32 %v3734, %v3846
    %v3848 = vpop.f32.mrb[0].mxu0
    %v3849 = vadd.f32 %v3736, %v3848
    %v3850 = vpop.f32.mrb[0].mxu0
    %v3851 = vadd.f32 %v3738, %v3850
    %3852 = vmatprep.mubr.bf16.mxu0 0
    %3853 = vmatmul.mubr.bf16.gmra.mrb[0].mxu0 %v134
    %v3854 = vpop.f32.mrb[0].mxu0
    %v3855 = vadd.f32 %v3742, %v3854
    %v3856 = vpop.f32.mrb[0].mxu0
    %v3857 = vadd.f32 %v3744, %v3856
    %v3858 = vpop.f32.mrb[0].mxu0
    %v3859 = vadd.f32 %v3746, %v3858
    %v3860 = vpop.f32.mrb[0].mxu0
    %v3861 = vadd.f32 %v3748, %v3860
    %3862 = vmatprep.mubr.bf16.mxu0 0
    %3863 = vmatmul.mubr.bf16.gmra.mrb[0].mxu0 %v137
    %v3864 = vpop.f32.mrb[0].mxu0
    %v3865 = vadd.f32 %v3752, %v3864
    %v3866 = vpop.f32.mrb[0].mxu0
    %v3867 = vadd.f32 %v3754, %v3866
    %v3868 = vpop.f32.mrb[0].mxu0
    %v3869 = vadd.f32 %v3756, %v3868
    %v3870 = vpop.f32.mrb[0].mxu0
    %v3871 = vadd.f32 %v3758, %v3870
    %3872 = vmatprep.mubr.bf16.mxu0 0
    %3873 = vmatmul.mubr.bf16.gmra.mrb[0].mxu0 %v140
    %v3874 = vpop.f32.mrb[0].mxu0
    %v3875 = vadd.f32 %v3762, %v3874
    %v3876 = vpop.f32.mrb[0].mxu0
    %v3877 = vadd.f32 %v3764, %v3876
    %v3878 = vpop.f32.mrb[0].mxu0
    %v3879 = vadd.f32 %v3766, %v3878
    %v3880 = vpop.f32.mrb[0].mxu0
    %v3881 = vadd.f32 %v3768, %v3880
    %3882 = vmatprep.mubr.bf16.mxu0 0
    %3883 = vmatmul.mubr.bf16.gmra.mrb[0].mxu0 %v143
    %v3884 = vpop.f32.mrb[0].mxu0
    %v3885 = vadd.f32 %v3772, %v3884
    %v3886 = vpop.f32.mrb[0].mxu0
    %v3887 = vadd.f32 %v3774, %v3886
    %v3888 = vpop.f32.mrb[0].mxu0
    %v3889 = vadd.f32 %v3776, %v3888
    %v3890 = vpop.f32.mrb[0].mxu0
    %v3891 = vadd.f32 %v3778, %v3890
    %3892 = vmatprep.mubr.bf16.mxu0 0
    %3893 = vmatmul.mubr.bf16.gmra.mrb[0].mxu0 %v146
    %v3894 = vpop.f32.mrb[0].mxu0
    %v3895 = vadd.f32 %v3782, %v3894
    %v3896 = vpop.f32.mrb[0].mxu0
    %v3897 = vadd.f32 %v3784, %v3896
    %v3898 = vpop.f32.mrb[0].mxu0
    %v3899 = vadd.f32 %v3786, %v3898
    %v3900 = vpop.f32.mrb[0].mxu0
    %v3901 = vadd.f32 %v3788, %v3900
    %3902 = vmatprep.mubr.bf16.mxu0 0
    %3903 = vmatmul.mubr.bf16.gmra.mrb[0].mxu0 %v149
    %v3904 = vpop.f32.mrb[0].mxu0
    %v3905 = vadd.f32 %v3792, %v3904
    %v3906 = vpop.f32.mrb[0].mxu0
    %v3907 = vadd.f32 %v3794, %v3906
    %v3908 = vpop.f32.mrb[0].mxu0
    %v3909 = vadd.f32 %v3796, %v3908
    %v3910 = vpop.f32.mrb[0].mxu0
    %v3911 = vadd.f32 %v3798, %v3910
    %3912 = vdwg.mxu0
    %v3913 = vsub.f32 0.0, %v3835
    %v3914 = vsub.f32 0.0, %v3837
    %v3915 = vsub.f32 0.0, %v3839
    %v3916 = vsub.f32 0.0, %v3841
    %v3917 = vsub.f32 0.0, %v3845
    %v3918 = vsub.f32 0.0, %v3847
    %v3919 = vsub.f32 0.0, %v3849
    %v3920 = vsub.f32 0.0, %v3851
    %v3921 = vsub.f32 0.0, %v3855
    %v3922 = vsub.f32 0.0, %v3857
    %v3923 = vsub.f32 0.0, %v3859
    %v3924 = vsub.f32 0.0, %v3861
    %v3925 = vsub.f32 0.0, %v3865
    %v3926 = vsub.f32 0.0, %v3867
    %v3927 = vsub.f32 0.0, %v3869
    %v3928 = vsub.f32 0.0, %v3871
    %v3929 = vsub.f32 0.0, %v3875
    %v3930 = vsub.f32 0.0, %v3877
    %v3931 = vsub.f32 0.0, %v3879
    %v3932 = vsub.f32 0.0, %v3881
    %v3933 = vsub.f32 0.0, %v3885
    %v3934 = vsub.f32 0.0, %v3887
    %v3935 = vsub.f32 0.0, %v3889
    %v3936 = vsub.f32 0.0, %v3891
    %v3937 = vsub.f32 0.0, %v3895
    %v3938 = vsub.f32 0.0, %v3897
    %v3939 = vsub.f32 0.0, %v3899
    %v3940 = vsub.f32 0.0, %v3901
    %v3941 = vsub.f32 0.0, %v3905
    %v3942 = vsub.f32 0.0, %v3907
    %v3943 = vsub.f32 0.0, %v3909
    %v3944 = vsub.f32 0.0, %v3911
    %v3945 = vpack.c.bf16 %v3915, %v3913
    %v3946 = vpack.c.bf16 %v3916, %v3914
    %v3947 = vpack.c.bf16 %v3919, %v3917
    %v3948 = vpack.c.bf16 %v3920, %v3918
    %v3949 = vpack.c.bf16 %v3923, %v3921
    %v3950 = vpack.c.bf16 %v3924, %v3922
    %v3951 = vpack.c.bf16 %v3927, %v3925
    %v3952 = vpack.c.bf16 %v3928, %v3926
    %v3953 = vpack.c.bf16 %v3931, %v3929
    %v3954 = vpack.c.bf16 %v3932, %v3930
    %v3955 = vpack.c.bf16 %v3935, %v3933
    %v3956 = vpack.c.bf16 %v3936, %v3934
    %v3957 = vpack.c.bf16 %v3939, %v3937
    %v3958 = vpack.c.bf16 %v3940, %v3938
    %v3959 = vpack.c.bf16 %v3943, %v3941
    %v3960 = vpack.c.bf16 %v3944, %v3942
    %v3962 = vmul.bf16 %v3945, 1069105081
    %v3963 = vpow.bf16.pop %v3962
    %v3965 = vmul.bf16 %v3946, 1069105081
    %v3966 = vpow.bf16.pop %v3965
    %v3968 = vmul.bf16 %v3947, 1069105081
    %v3969 = vpow.bf16.pop %v3968
    %v3971 = vmul.bf16 %v3948, 1069105081
    %v3972 = vpow.bf16.pop %v3971
    %v3974 = vmul.bf16 %v3949, 1069105081
    %v3975 = vpow.bf16.pop %v3974
    %v3977 = vmul.bf16 %v3950, 1069105081
    %v3978 = vpow.bf16.pop %v3977
    %v3980 = vmul.bf16 %v3951, 1069105081
    %v3981 = vpow.bf16.pop %v3980
    %v3983 = vmul.bf16 %v3952, 1069105081
    %v3984 = vpow.bf16.pop %v3983
    %v3986 = vmul.bf16 %v3953, 1069105081
    %v3987 = vpow.bf16.pop %v3986
    %v3989 = vmul.bf16 %v3954, 1069105081
    %v3990 = vpow.bf16.pop %v3989
    %v3992 = vmul.bf16 %v3955, 1069105081
    %v3993 = vpow.bf16.pop %v3992
    %v3995 = vmul.bf16 %v3956, 1069105081
    %v3996 = vpow.bf16.pop %v3995
    %v3998 = vmul.bf16 %v3957, 1069105081
    %v3999 = vpow.bf16.pop %v3998
    %v4001 = vmul.bf16 %v3958, 1069105081
    %v4002 = vpow.bf16.pop %v4001
    %v4004 = vmul.bf16 %v3959, 1069105081
    %v4005 = vpow.bf16.pop %v4004
    %v4007 = vmul.bf16 %v3960, 1069105081
    %v4008 = vpow.bf16.pop %v4007
    %v4009 = vunpack.c.l.bf16 %v3963
    %v4010 = vunpack.c.l.bf16 %v3966
    %v4011 = vunpack.c.h.bf16 %v3963
    %v4012 = vunpack.c.h.bf16 %v3966
    %v4013 = vunpack.c.l.bf16 %v3969
    %v4014 = vunpack.c.l.bf16 %v3972
    %v4015 = vunpack.c.h.bf16 %v3969
    %v4016 = vunpack.c.h.bf16 %v3972
    %v4017 = vunpack.c.l.bf16 %v3975
    %v4018 = vunpack.c.l.bf16 %v3978
    %v4019 = vunpack.c.h.bf16 %v3975
    %v4020 = vunpack.c.h.bf16 %v3978
    %v4021 = vunpack.c.l.bf16 %v3981
    %v4022 = vunpack.c.l.bf16 %v3984
    %v4023 = vunpack.c.h.bf16 %v3981
    %v4024 = vunpack.c.h.bf16 %v3984
    %v4025 = vunpack.c.l.bf16 %v3987
    %v4026 = vunpack.c.l.bf16 %v3990
    %v4027 = vunpack.c.h.bf16 %v3987
    %v4028 = vunpack.c.h.bf16 %v3990
    %v4029 = vunpack.c.l.bf16 %v3993
    %v4030 = vunpack.c.l.bf16 %v3996
    %v4031 = vunpack.c.h.bf16 %v3993
    %v4032 = vunpack.c.h.bf16 %v3996
    %v4033 = vunpack.c.l.bf16 %v3999
    %v4034 = vunpack.c.l.bf16 %v4002
    %v4035 = vunpack.c.h.bf16 %v3999
    %v4036 = vunpack.c.h.bf16 %v4002
    %v4037 = vunpack.c.l.bf16 %v4005
    %v4038 = vunpack.c.l.bf16 %v4008
    %v4039 = vunpack.c.h.bf16 %v4005
    %v4040 = vunpack.c.h.bf16 %v4008
    %v4041 = vadd.f32 %v4009, 1.0
    %v4042 = vadd.f32 %v4010, 1.0
    %v4043 = vadd.f32 %v4011, 1.0
    %v4044 = vadd.f32 %v4012, 1.0
    %v4045 = vadd.f32 %v4013, 1.0
    %v4046 = vadd.f32 %v4014, 1.0
    %v4047 = vadd.f32 %v4015, 1.0
    %v4048 = vadd.f32 %v4016, 1.0
    %v4049 = vadd.f32 %v4017, 1.0
    %v4050 = vadd.f32 %v4018, 1.0
    %v4051 = vadd.f32 %v4019, 1.0
    %v4052 = vadd.f32 %v4020, 1.0
    %v4053 = vadd.f32 %v4021, 1.0
    %v4054 = vadd.f32 %v4022, 1.0
    %v4055 = vadd.f32 %v4023, 1.0
    %v4056 = vadd.f32 %v4024, 1.0
    %v4057 = vadd.f32 %v4025, 1.0
    %v4058 = vadd.f32 %v4026, 1.0
    %v4059 = vadd.f32 %v4027, 1.0
    %v4060 = vadd.f32 %v4028, 1.0
    %v4061 = vadd.f32 %v4029, 1.0
    %v4062 = vadd.f32 %v4030, 1.0
    %v4063 = vadd.f32 %v4031, 1.0
    %v4064 = vadd.f32 %v4032, 1.0
    %v4065 = vadd.f32 %v4033, 1.0
    %v4066 = vadd.f32 %v4034, 1.0
    %v4067 = vadd.f32 %v4035, 1.0
    %v4068 = vadd.f32 %v4036, 1.0
    %v4069 = vadd.f32 %v4037, 1.0
    %v4070 = vadd.f32 %v4038, 1.0
    %v4071 = vadd.f32 %v4039, 1.0
    %v4072 = vadd.f32 %v4040, 1.0
    %v4073 = vrcp.pop %v4041
    %v4074 = vrcp.pop %v4042
    %v4075 = vrcp.pop %v4043
    %v4076 = vrcp.pop %v4044
    %v4077 = vrcp.pop %v4045
    %v4078 = vrcp.pop %v4046
    %v4079 = vrcp.pop %v4047
    %v4080 = vrcp.pop %v4048
    %v4081 = vrcp.pop %v4049
    %v4082 = vrcp.pop %v4050
    %v4083 = vrcp.pop %v4051
    %v4084 = vrcp.pop %v4052
    %v4085 = vrcp.pop %v4053
    %v4086 = vrcp.pop %v4054
    %v4087 = vrcp.pop %v4055
    %v4088 = vrcp.pop %v4056
    %v4089 = vrcp.pop %v4057
    %v4090 = vrcp.pop %v4058
    %v4091 = vrcp.pop %v4059
    %v4092 = vrcp.pop %v4060
    %v4093 = vrcp.pop %v4061
    %v4094 = vrcp.pop %v4062
    %v4095 = vrcp.pop %v4063
    %v4096 = vrcp.pop %v4064
    %v4097 = vrcp.pop %v4065
    %v4098 = vrcp.pop %v4066
    %v4099 = vrcp.pop %v4067
    %v4100 = vrcp.pop %v4068
    %v4101 = vrcp.pop %v4069
    %v4102 = vrcp.pop %v4070
    %v4103 = vrcp.pop %v4071
    %v4104 = vrcp.pop %v4072
    %v4105 = vmul.f32 %v3835, %v4073
    %v4106 = vmul.f32 %v3837, %v4074
    %v4107 = vmul.f32 %v3839, %v4075
    %v4108 = vmul.f32 %v3841, %v4076
    %v4109 = vmul.f32 %v3845, %v4077
    %v4110 = vmul.f32 %v3847, %v4078
    %v4111 = vmul.f32 %v3849, %v4079
    %v4112 = vmul.f32 %v3851, %v4080
    %v4113 = vmul.f32 %v3855, %v4081
    %v4114 = vmul.f32 %v3857, %v4082
    %v4115 = vmul.f32 %v3859, %v4083
    %v4116 = vmul.f32 %v3861, %v4084
    %v4117 = vmul.f32 %v3865, %v4085
    %v4118 = vmul.f32 %v3867, %v4086
    %v4119 = vmul.f32 %v3869, %v4087
    %v4120 = vmul.f32 %v3871, %v4088
    %v4121 = vmul.f32 %v3875, %v4089
    %v4122 = vmul.f32 %v3877, %v4090
    %v4123 = vmul.f32 %v3879, %v4091
    %v4124 = vmul.f32 %v3881, %v4092
    %v4125 = vmul.f32 %v3885, %v4093
    %v4126 = vmul.f32 %v3887, %v4094
    %v4127 = vmul.f32 %v3889, %v4095
    %v4128 = vmul.f32 %v3891, %v4096
    %v4129 = vmul.f32 %v3895, %v4097
    %v4130 = vmul.f32 %v3897, %v4098
    %v4131 = vmul.f32 %v3899, %v4099
    %v4132 = vmul.f32 %v3901, %v4100
    %v4133 = vmul.f32 %v3905, %v4101
    %v4134 = vmul.f32 %v3907, %v4102
    %v4135 = vmul.f32 %v3909, %v4103
    %v4136 = vmul.f32 %v3911, %v4104
    %v4137 = vpack.c.bf16 %v4107, %v4105
    %v4138 = vpack.c.bf16 %v4108, %v4106
    %v4139 = vpack.c.bf16 %v4111, %v4109
    %v4140 = vpack.c.bf16 %v4112, %v4110
    %v4141 = vpack.c.bf16 %v4115, %v4113
    %v4142 = vpack.c.bf16 %v4116, %v4114
    %v4143 = vpack.c.bf16 %v4119, %v4117
    %v4144 = vpack.c.bf16 %v4120, %v4118
    %v4145 = vpack.c.bf16 %v4123, %v4121
    %v4146 = vpack.c.bf16 %v4124, %v4122
    %v4147 = vpack.c.bf16 %v4127, %v4125
    %v4148 = vpack.c.bf16 %v4128, %v4126
    %v4149 = vpack.c.bf16 %v4131, %v4129
    %v4150 = vpack.c.bf16 %v4132, %v4130
    %v4151 = vpack.c.bf16 %v4135, %v4133
    %v4152 = vpack.c.bf16 %v4136, %v4134
    %4153 = vmatprep.subr.bf16.mxu0 %v4138
    %4154 = vmatpush1.bf16.msra.mxu0 %v4137
    %4155 = vmatprep.subr.bf16.mxu0 %v4140
    %4156 = vmatpush1.bf16.msra.mxu0 %v4139
    %4157 = vmatprep.subr.bf16.mxu0 %v4142
    %4158 = vmatpush1.bf16.msra.mxu0 %v4141
    %4159 = vmatprep.subr.bf16.mxu0 %v4144
    %4160 = vmatpush1.bf16.msra.mxu0 %v4143
    %4161 = vmatprep.subr.bf16.mxu0 %v4146
    %4162 = vmatpush1.bf16.msra.mxu0 %v4145
    %4163 = vmatprep.subr.bf16.mxu0 %v4148
    %4164 = vmatpush1.bf16.msra.mxu0 %v4147
    %4165 = vmatprep.subr.bf16.mxu0 %v4150
    %4166 = vmatpush1.bf16.msra.mxu0 %v4149
    %4167 = vmatprep.subr.bf16.mxu0 %v4152
    %4168 = vmatpush1.bf16.msra.mxu0 %v4151
    %4169 = vmatprep.subr.bf16.mxu0 0
    %4170 = vmatpush1.bf16.msra.mxu0 0
    %4171 = vmatprep.subr.bf16.mxu0 0
    %4172 = vmatpush1.bf16.msra.mxu0 0
    %4173 = vmatprep.subr.bf16.mxu0 0
    %4174 = vmatpush1.bf16.msra.mxu0 0
    %4175 = vmatprep.subr.bf16.mxu0 0
    %4176 = vmatpush1.bf16.msra.mxu0 0
    %4177 = vmatprep.subr.bf16.mxu0 0
    %4178 = vmatpush1.bf16.msra.mxu0 0
    %4179 = vmatprep.subr.bf16.mxu0 0
    %4180 = vmatpush1.bf16.msra.mxu0 0
    %4181 = vmatprep.subr.bf16.mxu0 0
    %4182 = vmatpush1.bf16.msra.mxu0 0
    %4183 = vmatprep.subr.bf16.mxu0 0
    %4184 = vmatpush1.bf16.msra.mxu0 0
    %4185 = vmatprep.mubr.bf16.mxu0 0
    %4186 = vmatmul.mubr.bf16.gmra.mrb[0].mxu0 %v150
    %v4187 = vpop.f32.mrb[0].mxu0
    %v4188 = vadd.f32 0.0, %v4187
    %v4189 = vpop.f32.mrb[0].mxu0
    %v4190 = vadd.f32 0.0, %v4189
    %v4191 = vpop.f32.mrb[0].mxu0
    %v4192 = vpop.f32.mrb[0].mxu0
    %4193 = vdwg.mxu0
    %v4194 = vmul.f32 %v4188, 0.015625
    %v4195 = vmul.f32 %v4190, 0.015625
    %v4196 = vpack.c.bf16 %v958, %v958
    %v4197 = vpack.c.bf16 %v959, %v959
    %v4198 = vpack.c.bf16 %v1767, %v1767
    %v4199 = vpack.c.bf16 %v1768, %v1768
    %v4200 = vpack.c.bf16 %v2576, %v2576
    %v4201 = vpack.c.bf16 %v2577, %v2577
    %v4202 = vpack.c.bf16 %v3385, %v3385
    %v4203 = vpack.c.bf16 %v3386, %v3386
    %v4204 = vpack.c.bf16 %v4194, %v4194
    %v4205 = vpack.c.bf16 %v4195, %v4195
    %v4206 = vld [vmem:[#allocation8] sm:$0xf]
    %v4207 = vld [vmem:[#allocation8 + $0x4] sm:$0xf]
    %v4208 = vld [vmem:[#allocation8 + $0x8] sm:$0xf]
    %v4209 = vld [vmem:[#allocation8 + $0xc] sm:$0xf]
    %v4210 = vld [vmem:[#allocation8 + $0x10] sm:$0xf]
    %v4211 = vld [vmem:[#allocation8 + $0x14] sm:$0xf]
    %v4212 = vld [vmem:[#allocation8 + $0x18] sm:$0xf]
    %v4213 = vld [vmem:[#allocation8 + $0x1c] sm:$0xf]
    %v4214 = vld [vmem:[#allocation8 + $0x20] sm:$0xf]
    %v4215 = vld [vmem:[#allocation8 + $0x24] sm:$0xf]
    %v4216 = vld [vmem:[#allocation8 + $0x28] sm:$0xf]
    %v4217 = vld [vmem:[#allocation8 + $0x2c] sm:$0xf]
    %v4218 = vld [vmem:[#allocation8 + $0x30] sm:$0xf]
    %v4219 = vld [vmem:[#allocation8 + $0x34] sm:$0xf]
    %v4220 = vld [vmem:[#allocation8 + $0x38] sm:$0xf]
    %v4221 = vld [vmem:[#allocation8 + $0x3c] sm:$0xf]
    %v4222 = vld [vmem:[#allocation8 + $0x40] sm:$0xf]
    %v4223 = vld [vmem:[#allocation8 + $0x44] sm:$0xf]
    %v4224 = vld [vmem:[#allocation8 + $0x48] sm:$0xf]
    %v4225 = vld [vmem:[#allocation8 + $0x4c] sm:$0xf]
    %v4226 = vld [vmem:[#allocation8 + $0x50] sm:$0xf]
    %v4227 = vld [vmem:[#allocation8 + $0x54] sm:$0xf]
    %v4228 = vld [vmem:[#allocation8 + $0x58] sm:$0xf]
    %v4229 = vld [vmem:[#allocation8 + $0x5c] sm:$0xf]
    %v4230 = vld [vmem:[#allocation8 + $0x60] sm:$0xf]
    %v4231 = vld [vmem:[#allocation8 + $0x64] sm:$0xf]
    %v4232 = vld [vmem:[#allocation8 + $0x68] sm:$0xf]
    %v4233 = vld [vmem:[#allocation8 + $0x6c] sm:$0xf]
    %v4234 = vld [vmem:[#allocation8 + $0x70] sm:$0xf]
    %v4235 = vld [vmem:[#allocation8 + $0x74] sm:$0xf]
    %v4236 = vld [vmem:[#allocation8 + $0x78] sm:$0xf]
    %v4237 = vld [vmem:[#allocation8 + $0x7c] sm:$0xf]
    %v4238 = vld [vmem:[#allocation8 + $0x80] sm:$0xf]
    %v4239 = vld [vmem:[#allocation8 + $0x84] sm:$0xf]
    %v4240 = vld [vmem:[#allocation8 + $0x88] sm:$0xf]
    %v4241 = vld [vmem:[#allocation8 + $0x8c] sm:$0xf]
    %v4242 = vld [vmem:[#allocation8 + $0x90] sm:$0xf]
    %v4243 = vld [vmem:[#allocation8 + $0x94] sm:$0xf]
    %v4244 = vld [vmem:[#allocation8 + $0x98] sm:$0xf]
    %v4245 = vld [vmem:[#allocation8 + $0x9c] sm:$0xf]
    %v4246 = vld [vmem:[#allocation8 + $0xa0] sm:$0xf]
    %v4247 = vld [vmem:[#allocation8 + $0xa4] sm:$0xf]
    %v4248 = vld [vmem:[#allocation8 + $0xa8] sm:$0xf]
    %v4249 = vld [vmem:[#allocation8 + $0xac] sm:$0xf]
    %v4250 = vld [vmem:[#allocation8 + $0xb0] sm:$0xf]
    %v4251 = vld [vmem:[#allocation8 + $0xb4] sm:$0xf]
    %v4252 = vld [vmem:[#allocation8 + $0xb8] sm:$0xf]
    %v4253 = vld [vmem:[#allocation8 + $0xbc] sm:$0xf]
    %v4254 = vld [vmem:[#allocation8 + $0xc0] sm:$0xf]
    %v4255 = vld [vmem:[#allocation8 + $0xc4] sm:$0xf]
    %v4256 = vld [vmem:[#allocation8 + $0xc8] sm:$0xf]
    %v4257 = vld [vmem:[#allocation8 + $0xcc] sm:$0xf]
    %v4258 = vld [vmem:[#allocation8 + $0xd0] sm:$0xf]
    %v4259 = vld [vmem:[#allocation8 + $0xd4] sm:$0xf]
    %v4260 = vld [vmem:[#allocation8 + $0xd8] sm:$0xf]
    %v4261 = vld [vmem:[#allocation8 + $0xdc] sm:$0xf]
    %v4262 = vld [vmem:[#allocation8 + $0xe0] sm:$0xf]
    %v4263 = vld [vmem:[#allocation8 + $0xe4] sm:$0xf]
    %v4264 = vld [vmem:[#allocation8 + $0xe8] sm:$0xf]
    %v4265 = vld [vmem:[#allocation8 + $0xec] sm:$0xf]
    %v4266 = vld [vmem:[#allocation8 + $0xf0] sm:$0xf]
    %v4267 = vld [vmem:[#allocation8 + $0xf4] sm:$0xf]
    %v4268 = vld [vmem:[#allocation8 + $0xf8] sm:$0xf]
    %v4269 = vld [vmem:[#allocation8 + $0xfc] sm:$0xf]
    %v4270 = vld [vmem:[#allocation8 + $0x100] sm:$0xf]
    %v4271 = vld [vmem:[#allocation8 + $0x104] sm:$0xf]
    %v4272 = vld [vmem:[#allocation8 + $0x108] sm:$0xf]
    %v4273 = vld [vmem:[#allocation8 + $0x10c] sm:$0xf]
    %v4274 = vld [vmem:[#allocation8 + $0x110] sm:$0xf]
    %v4275 = vld [vmem:[#allocation8 + $0x114] sm:$0xf]
    %v4276 = vld [vmem:[#allocation8 + $0x118] sm:$0xf]
    %v4277 = vld [vmem:[#allocation8 + $0x11c] sm:$0xf]
    %v4278 = vld [vmem:[#allocation8 + $0x120] sm:$0xf]
    %v4279 = vld [vmem:[#allocation8 + $0x124] sm:$0xf]
    %v4280 = vld [vmem:[#allocation8 + $0x128] sm:$0xf]
    %v4281 = vld [vmem:[#allocation8 + $0x12c] sm:$0xf]
    %v4282 = vld [vmem:[#allocation8 + $0x130] sm:$0xf]
    %v4283 = vld [vmem:[#allocation8 + $0x134] sm:$0xf]
    %v4284 = vld [vmem:[#allocation8 + $0x138] sm:$0xf]
    %v4285 = vld [vmem:[#allocation8 + $0x13c] sm:$0xf]
    %v4286 = vld [vmem:[#allocation8 + $0x140] sm:$0xf]
    %v4287 = vld [vmem:[#allocation8 + $0x144] sm:$0xf]
    %v4288 = vld [vmem:[#allocation8 + $0x148] sm:$0xf]
    %v4289 = vld [vmem:[#allocation8 + $0x14c] sm:$0xf]
    %v4290 = vld [vmem:[#allocation8 + $0x150] sm:$0xf]
    %v4291 = vld [vmem:[#allocation8 + $0x154] sm:$0xf]
    %v4292 = vld [vmem:[#allocation8 + $0x158] sm:$0xf]
    %v4293 = vld [vmem:[#allocation8 + $0x15c] sm:$0xf]
    %v4294 = vld [vmem:[#allocation8 + $0x160] sm:$0xf]
    %v4295 = vld [vmem:[#allocation8 + $0x164] sm:$0xf]
    %v4296 = vld [vmem:[#allocation8 + $0x168] sm:$0xf]
    %v4297 = vld [vmem:[#allocation8 + $0x16c] sm:$0xf]
    %v4298 = vld [vmem:[#allocation8 + $0x170] sm:$0xf]
    %v4299 = vld [vmem:[#allocation8 + $0x174] sm:$0xf]
    %v4300 = vld [vmem:[#allocation8 + $0x178] sm:$0xf]
    %v4301 = vld [vmem:[#allocation8 + $0x17c] sm:$0xf]
    %v4302 = vld [vmem:[#allocation8 + $0x180] sm:$0xf]
    %v4303 = vld [vmem:[#allocation8 + $0x184] sm:$0xf]
    %v4304 = vld [vmem:[#allocation8 + $0x188] sm:$0xf]
    %v4305 = vld [vmem:[#allocation8 + $0x18c] sm:$0xf]
    %v4306 = vld [vmem:[#allocation8 + $0x190] sm:$0xf]
    %v4307 = vld [vmem:[#allocation8 + $0x194] sm:$0xf]
    %v4308 = vld [vmem:[#allocation8 + $0x198] sm:$0xf]
    %v4309 = vld [vmem:[#allocation8 + $0x19c] sm:$0xf]
    %v4310 = vld [vmem:[#allocation8 + $0x1a0] sm:$0xf]
    %v4311 = vld [vmem:[#allocation8 + $0x1a4] sm:$0xf]
    %v4312 = vld [vmem:[#allocation8 + $0x1a8] sm:$0xf]
    %v4313 = vld [vmem:[#allocation8 + $0x1ac] sm:$0xf]
    %v4314 = vld [vmem:[#allocation8 + $0x1b0] sm:$0xf]
    %v4315 = vld [vmem:[#allocation8 + $0x1b4] sm:$0xf]
    %v4316 = vld [vmem:[#allocation8 + $0x1b8] sm:$0xf]
    %v4317 = vld [vmem:[#allocation8 + $0x1bc] sm:$0xf]
    %v4318 = vld [vmem:[#allocation8 + $0x1c0] sm:$0xf]
    %v4319 = vld [vmem:[#allocation8 + $0x1c4] sm:$0xf]
    %v4320 = vld [vmem:[#allocation8 + $0x1c8] sm:$0xf]
    %v4321 = vld [vmem:[#allocation8 + $0x1cc] sm:$0xf]
    %v4322 = vld [vmem:[#allocation8 + $0x1d0] sm:$0xf]
    %v4323 = vld [vmem:[#allocation8 + $0x1d4] sm:$0xf]
    %v4324 = vld [vmem:[#allocation8 + $0x1d8] sm:$0xf]
    %v4325 = vld [vmem:[#allocation8 + $0x1dc] sm:$0xf]
    %v4326 = vld [vmem:[#allocation8 + $0x1e0] sm:$0xf]
    %v4327 = vld [vmem:[#allocation8 + $0x1e4] sm:$0xf]
    %v4328 = vld [vmem:[#allocation8 + $0x1e8] sm:$0xf]
    %v4329 = vld [vmem:[#allocation8 + $0x1ec] sm:$0xf]
    %v4330 = vld [vmem:[#allocation8 + $0x1f0] sm:$0xf]
    %v4331 = vld [vmem:[#allocation8 + $0x1f4] sm:$0xf]
    %v4332 = vld [vmem:[#allocation8 + $0x1f8] sm:$0xf]
    %v4333 = vld [vmem:[#allocation8 + $0x1fc] sm:$0xf]
    %v4334 = vld [vmem:[#allocation8 + $0x200] sm:$0xf]
    %v4335 = vld [vmem:[#allocation8 + $0x204] sm:$0xf]
    %v4336 = vld [vmem:[#allocation8 + $0x208] sm:$0xf]
    %v4337 = vld [vmem:[#allocation8 + $0x20c] sm:$0xf]
    %v4338 = vld [vmem:[#allocation8 + $0x210] sm:$0xf]
    %v4339 = vld [vmem:[#allocation8 + $0x214] sm:$0xf]
    %v4340 = vld [vmem:[#allocation8 + $0x218] sm:$0xf]
    %v4341 = vld [vmem:[#allocation8 + $0x21c] sm:$0xf]
    %v4342 = vld [vmem:[#allocation8 + $0x220] sm:$0xf]
    %v4343 = vld [vmem:[#allocation8 + $0x224] sm:$0xf]
    %v4344 = vld [vmem:[#allocation8 + $0x228] sm:$0xf]
    %v4345 = vld [vmem:[#allocation8 + $0x22c] sm:$0xf]
    %v4346 = vld [vmem:[#allocation8 + $0x230] sm:$0xf]
    %v4347 = vld [vmem:[#allocation8 + $0x234] sm:$0xf]
    %v4348 = vld [vmem:[#allocation8 + $0x238] sm:$0xf]
    %v4349 = vld [vmem:[#allocation8 + $0x23c] sm:$0xf]
    %v4350 = vld [vmem:[#allocation8 + $0x240] sm:$0xf]
    %v4351 = vld [vmem:[#allocation8 + $0x244] sm:$0xf]
    %v4352 = vld [vmem:[#allocation8 + $0x248] sm:$0xf]
    %v4353 = vld [vmem:[#allocation8 + $0x24c] sm:$0xf]
    %v4354 = vld [vmem:[#allocation8 + $0x250] sm:$0xf]
    %v4355 = vld [vmem:[#allocation8 + $0x254] sm:$0xf]
    %v4356 = vld [vmem:[#allocation8 + $0x258] sm:$0xf]
    %v4357 = vld [vmem:[#allocation8 + $0x25c] sm:$0xf]
    %v4358 = vld [vmem:[#allocation8 + $0x260] sm:$0xf]
    %v4359 = vld [vmem:[#allocation8 + $0x264] sm:$0xf]
    %v4360 = vld [vmem:[#allocation8 + $0x268] sm:$0xf]
    %v4361 = vld [vmem:[#allocation8 + $0x26c] sm:$0xf]
    %v4362 = vld [vmem:[#allocation8 + $0x270] sm:$0xf]
    %v4363 = vld [vmem:[#allocation8 + $0x274] sm:$0xf]
    %v4364 = vld [vmem:[#allocation8 + $0x278] sm:$0xf]
    %v4365 = vld [vmem:[#allocation8 + $0x27c] sm:$0xf]
    %v4366 = vld [vmem:[%s5] sm:$0x1]
    %v4368 = vlaneseq
    %v4369 = vshrl.u32 %v4368, 7
    %v4370 = vsub.s32 0, %v4369
    %v4371 = vrot.slane %v4366, %v4370
    %v4533 = vunpack.c.l.b16 %v4206
    %v4534 = vunpack.c.l.b16 %v4207
    %v4535 = vunpack.c.l.b16 %v4208
    %v4536 = vunpack.c.l.b16 %v4209
    %v4537 = vunpack.c.l.b16 %v4210
    %v4538 = vunpack.c.l.b16 %v4211
    %v4539 = vunpack.c.l.b16 %v4212
    %v4540 = vunpack.c.l.b16 %v4213
    %v4541 = vunpack.c.l.b16 %v4214
    %v4542 = vunpack.c.l.b16 %v4215
    %v4543 = vunpack.c.l.b16 %v4216
    %v4544 = vunpack.c.l.b16 %v4217
    %v4545 = vunpack.c.l.b16 %v4218
    %v4546 = vunpack.c.l.b16 %v4219
    %v4547 = vunpack.c.l.b16 %v4220
    %v4548 = vunpack.c.l.b16 %v4221
    %v4549 = vunpack.c.l.b16 %v4222
    %v4550 = vunpack.c.l.b16 %v4223
    %v4551 = vunpack.c.l.b16 %v4224
    %v4552 = vunpack.c.l.b16 %v4225
    %v4553 = vunpack.c.l.b16 %v4226
    %v4554 = vunpack.c.l.b16 %v4227
    %v4555 = vunpack.c.l.b16 %v4228
    %v4556 = vunpack.c.l.b16 %v4229
    %v4557 = vunpack.c.l.b16 %v4230
    %v4558 = vunpack.c.l.b16 %v4231
    %v4559 = vunpack.c.l.b16 %v4232
    %v4560 = vunpack.c.l.b16 %v4233
    %v4561 = vunpack.c.l.b16 %v4234
    %v4562 = vunpack.c.l.b16 %v4235
    %v4563 = vunpack.c.l.b16 %v4236
    %v4564 = vunpack.c.l.b16 %v4237
    %v4565 = vunpack.c.l.b16 %v4238
    %v4566 = vunpack.c.l.b16 %v4239
    %v4567 = vunpack.c.l.b16 %v4240
    %v4568 = vunpack.c.l.b16 %v4241
    %v4569 = vunpack.c.l.b16 %v4242
    %v4570 = vunpack.c.l.b16 %v4243
    %v4571 = vunpack.c.l.b16 %v4244
    %v4572 = vunpack.c.l.b16 %v4245
    %v4573 = vunpack.c.l.b16 %v4246
    %v4574 = vunpack.c.l.b16 %v4247
    %v4575 = vunpack.c.l.b16 %v4248
    %v4576 = vunpack.c.l.b16 %v4249
    %v4577 = vunpack.c.l.b16 %v4250
    %v4578 = vunpack.c.l.b16 %v4251
    %v4579 = vunpack.c.l.b16 %v4252
    %v4580 = vunpack.c.l.b16 %v4253
    %v4581 = vunpack.c.l.b16 %v4254
    %v4582 = vunpack.c.l.b16 %v4255
    %v4583 = vunpack.c.l.b16 %v4256
    %v4584 = vunpack.c.l.b16 %v4257
    %v4585 = vunpack.c.l.b16 %v4258
    %v4586 = vunpack.c.l.b16 %v4259
    %v4587 = vunpack.c.l.b16 %v4260
    %v4588 = vunpack.c.l.b16 %v4261
    %v4589 = vunpack.c.l.b16 %v4262
    %v4590 = vunpack.c.l.b16 %v4263
    %v4591 = vunpack.c.l.b16 %v4264
    %v4592 = vunpack.c.l.b16 %v4265
    %v4593 = vunpack.c.l.b16 %v4266
    %v4594 = vunpack.c.l.b16 %v4267
    %v4595 = vunpack.c.l.b16 %v4268
    %v4596 = vunpack.c.l.b16 %v4269
    %v4597 = vunpack.c.l.b16 %v4270
    %v4598 = vunpack.c.l.b16 %v4271
    %v4599 = vunpack.c.l.b16 %v4272
    %v4600 = vunpack.c.l.b16 %v4273
    %v4601 = vunpack.c.l.b16 %v4274
    %v4602 = vunpack.c.l.b16 %v4275
    %v4603 = vunpack.c.l.b16 %v4276
    %v4604 = vunpack.c.l.b16 %v4277
    %v4605 = vunpack.c.l.b16 %v4278
    %v4606 = vunpack.c.l.b16 %v4279
    %v4607 = vunpack.c.l.b16 %v4280
    %v4608 = vunpack.c.l.b16 %v4281
    %v4609 = vunpack.c.l.b16 %v4282
    %v4610 = vunpack.c.l.b16 %v4283
    %v4611 = vunpack.c.l.b16 %v4284
    %v4612 = vunpack.c.l.b16 %v4285
    %v4613 = vunpack.c.l.b16 %v4286
    %v4614 = vunpack.c.l.b16 %v4287
    %v4615 = vunpack.c.l.b16 %v4288
    %v4616 = vunpack.c.l.b16 %v4289
    %v4617 = vunpack.c.l.b16 %v4290
    %v4618 = vunpack.c.l.b16 %v4291
    %v4619 = vunpack.c.l.b16 %v4292
    %v4620 = vunpack.c.l.b16 %v4293
    %v4621 = vunpack.c.l.b16 %v4294
    %v4622 = vunpack.c.l.b16 %v4295
    %v4623 = vunpack.c.l.b16 %v4296
    %v4624 = vunpack.c.l.b16 %v4297
    %v4625 = vunpack.c.l.b16 %v4298
    %v4626 = vunpack.c.l.b16 %v4299
    %v4627 = vunpack.c.l.b16 %v4300
    %v4628 = vunpack.c.l.b16 %v4301
    %v4629 = vunpack.c.l.b16 %v4302
    %v4630 = vunpack.c.l.b16 %v4303
    %v4631 = vunpack.c.l.b16 %v4304
    %v4632 = vunpack.c.l.b16 %v4305
    %v4633 = vunpack.c.l.b16 %v4306
    %v4634 = vunpack.c.l.b16 %v4307
    %v4635 = vunpack.c.l.b16 %v4308
    %v4636 = vunpack.c.l.b16 %v4309
    %v4637 = vunpack.c.l.b16 %v4310
    %v4638 = vunpack.c.l.b16 %v4311
    %v4639 = vunpack.c.l.b16 %v4312
    %v4640 = vunpack.c.l.b16 %v4313
    %v4641 = vunpack.c.l.b16 %v4314
    %v4642 = vunpack.c.l.b16 %v4315
    %v4643 = vunpack.c.l.b16 %v4316
    %v4644 = vunpack.c.l.b16 %v4317
    %v4645 = vunpack.c.l.b16 %v4318
    %v4646 = vunpack.c.l.b16 %v4319
    %v4647 = vunpack.c.l.b16 %v4320
    %v4648 = vunpack.c.l.b16 %v4321
    %v4649 = vunpack.c.l.b16 %v4322
    %v4650 = vunpack.c.l.b16 %v4323
    %v4651 = vunpack.c.l.b16 %v4324
    %v4652 = vunpack.c.l.b16 %v4325
    %v4653 = vunpack.c.l.b16 %v4326
    %v4654 = vunpack.c.l.b16 %v4327
    %v4655 = vunpack.c.l.b16 %v4328
    %v4656 = vunpack.c.l.b16 %v4329
    %v4657 = vunpack.c.l.b16 %v4330
    %v4658 = vunpack.c.l.b16 %v4331
    %v4659 = vunpack.c.l.b16 %v4332
    %v4660 = vunpack.c.l.b16 %v4333
    %v4661 = vunpack.c.l.b16 %v4334
    %v4662 = vunpack.c.l.b16 %v4335
    %v4663 = vunpack.c.l.b16 %v4336
    %v4664 = vunpack.c.l.b16 %v4337
    %v4665 = vunpack.c.l.b16 %v4338
    %v4666 = vunpack.c.l.b16 %v4339
    %v4667 = vunpack.c.l.b16 %v4340
    %v4668 = vunpack.c.l.b16 %v4341
    %v4669 = vunpack.c.l.b16 %v4342
    %v4670 = vunpack.c.l.b16 %v4343
    %v4671 = vunpack.c.l.b16 %v4344
    %v4672 = vunpack.c.l.b16 %v4345
    %v4673 = vunpack.c.l.b16 %v4346
    %v4674 = vunpack.c.l.b16 %v4347
    %v4675 = vunpack.c.l.b16 %v4348
    %v4676 = vunpack.c.l.b16 %v4349
    %v4677 = vunpack.c.l.b16 %v4350
    %v4678 = vunpack.c.l.b16 %v4351
    %v4679 = vunpack.c.l.b16 %v4352
    %v4680 = vunpack.c.l.b16 %v4353
    %v4681 = vunpack.c.l.b16 %v4354
    %v4682 = vunpack.c.l.b16 %v4355
    %v4683 = vunpack.c.l.b16 %v4356
    %v4684 = vunpack.c.l.b16 %v4357
    %v4685 = vunpack.c.l.b16 %v4358
    %v4686 = vunpack.c.l.b16 %v4359
    %v4687 = vunpack.c.l.b16 %v4360
    %v4688 = vunpack.c.l.b16 %v4361
    %v4689 = vunpack.c.l.b16 %v4362
    %v4690 = vunpack.c.l.b16 %v4363
    %v4691 = vunpack.c.l.b16 %v4364
    %v4692 = vunpack.c.l.b16 %v4365
    %v4693 = vpack.c.b16 %v4534, %v4533
    %v4694 = vpack.c.b16 %v4536, %v4535
    %v4695 = vpack.c.b16 %v4538, %v4537
    %v4696 = vpack.c.b16 %v4540, %v4539
    %v4697 = vpack.c.b16 %v4542, %v4541
    %v4698 = vpack.c.b16 %v4544, %v4543
    %v4699 = vpack.c.b16 %v4546, %v4545
    %v4700 = vpack.c.b16 %v4548, %v4547
    %v4701 = vpack.c.b16 %v4550, %v4549
    %v4702 = vpack.c.b16 %v4552, %v4551
    %v4703 = vpack.c.b16 %v4554, %v4553
    %v4704 = vpack.c.b16 %v4556, %v4555
    %v4705 = vpack.c.b16 %v4558, %v4557
    %v4706 = vpack.c.b16 %v4560, %v4559
    %v4707 = vpack.c.b16 %v4562, %v4561
    %v4708 = vpack.c.b16 %v4564, %v4563
    %v4709 = vpack.c.b16 %v4566, %v4565
    %v4710 = vpack.c.b16 %v4568, %v4567
    %v4711 = vpack.c.b16 %v4570, %v4569
    %v4712 = vpack.c.b16 %v4572, %v4571
    %v4713 = vpack.c.b16 %v4574, %v4573
    %v4714 = vpack.c.b16 %v4576, %v4575
    %v4715 = vpack.c.b16 %v4578, %v4577
    %v4716 = vpack.c.b16 %v4580, %v4579
    %v4717 = vpack.c.b16 %v4582, %v4581
    %v4718 = vpack.c.b16 %v4584, %v4583
    %v4719 = vpack.c.b16 %v4586, %v4585
    %v4720 = vpack.c.b16 %v4588, %v4587
    %v4721 = vpack.c.b16 %v4590, %v4589
    %v4722 = vpack.c.b16 %v4592, %v4591
    %v4723 = vpack.c.b16 %v4594, %v4593
    %v4724 = vpack.c.b16 %v4596, %v4595
    %v4725 = vpack.c.b16 %v4598, %v4597
    %v4726 = vpack.c.b16 %v4600, %v4599
    %v4727 = vpack.c.b16 %v4602, %v4601
    %v4728 = vpack.c.b16 %v4604, %v4603
    %v4729 = vpack.c.b16 %v4606, %v4605
    %v4730 = vpack.c.b16 %v4608, %v4607
    %v4731 = vpack.c.b16 %v4610, %v4609
    %v4732 = vpack.c.b16 %v4612, %v4611
    %v4733 = vpack.c.b16 %v4614, %v4613
    %v4734 = vpack.c.b16 %v4616, %v4615
    %v4735 = vpack.c.b16 %v4618, %v4617
    %v4736 = vpack.c.b16 %v4620, %v4619
    %v4737 = vpack.c.b16 %v4622, %v4621
    %v4738 = vpack.c.b16 %v4624, %v4623
    %v4739 = vpack.c.b16 %v4626, %v4625
    %v4740 = vpack.c.b16 %v4628, %v4627
    %v4741 = vpack.c.b16 %v4630, %v4629
    %v4742 = vpack.c.b16 %v4632, %v4631
    %v4743 = vpack.c.b16 %v4634, %v4633
    %v4744 = vpack.c.b16 %v4636, %v4635
    %v4745 = vpack.c.b16 %v4638, %v4637
    %v4746 = vpack.c.b16 %v4640, %v4639
    %v4747 = vpack.c.b16 %v4642, %v4641
    %v4748 = vpack.c.b16 %v4644, %v4643
    %v4749 = vpack.c.b16 %v4646, %v4645
    %v4750 = vpack.c.b16 %v4648, %v4647
    %v4751 = vpack.c.b16 %v4650, %v4649
    %v4752 = vpack.c.b16 %v4652, %v4651
    %v4753 = vpack.c.b16 %v4654, %v4653
    %v4754 = vpack.c.b16 %v4656, %v4655
    %v4755 = vpack.c.b16 %v4658, %v4657
    %v4756 = vpack.c.b16 %v4660, %v4659
    %v4757 = vpack.c.b16 %v4662, %v4661
    %v4758 = vpack.c.b16 %v4664, %v4663
    %v4759 = vpack.c.b16 %v4666, %v4665
    %v4760 = vpack.c.b16 %v4668, %v4667
    %v4761 = vpack.c.b16 %v4670, %v4669
    %v4762 = vpack.c.b16 %v4672, %v4671
    %v4763 = vpack.c.b16 %v4674, %v4673
    %v4764 = vpack.c.b16 %v4676, %v4675
    %v4765 = vpack.c.b16 %v4678, %v4677
    %v4766 = vpack.c.b16 %v4680, %v4679
    %v4767 = vpack.c.b16 %v4682, %v4681
    %v4768 = vpack.c.b16 %v4684, %v4683
    %v4769 = vpack.c.b16 %v4686, %v4685
    %v4770 = vpack.c.b16 %v4688, %v4687
    %v4771 = vpack.c.b16 %v4690, %v4689
    %v4772 = vpack.c.b16 %v4692, %v4691
    %4853 = vmatprep.subr.bf16.mxu0 0
    %4854 = vmatpush1.bf16.msra.mxu0 %v4693
    %4855 = vmatprep.subr.bf16.mxu0 0
    %4856 = vmatpush1.bf16.msra.mxu0 %v4694
    %4857 = vmatprep.subr.bf16.mxu0 0
    %4858 = vmatpush1.bf16.msra.mxu0 %v4695
    %4859 = vmatprep.subr.bf16.mxu0 0
    %4860 = vmatpush1.bf16.msra.mxu0 %v4696
    %4861 = vmatprep.subr.bf16.mxu0 0
    %4862 = vmatpush1.bf16.msra.mxu0 %v4697
    %4863 = vmatprep.subr.bf16.mxu0 0
    %4864 = vmatpush1.bf16.msra.mxu0 %v4698
    %4865 = vmatprep.subr.bf16.mxu0 0
    %4866 = vmatpush1.bf16.msra.mxu0 %v4699
    %4867 = vmatprep.subr.bf16.mxu0 0
    %4868 = vmatpush1.bf16.msra.mxu0 %v4700
    %4869 = vmatprep.subr.bf16.mxu0 0
    %4870 = vmatpush1.bf16.msra.mxu0 %v4701
    %4871 = vmatprep.subr.bf16.mxu0 0
    %4872 = vmatpush1.bf16.msra.mxu0 %v4702
    %4873 = vmatprep.subr.bf16.mxu0 0
    %4874 = vmatpush1.bf16.msra.mxu0 %v4703
    %4875 = vmatprep.subr.bf16.mxu0 0
    %4876 = vmatpush1.bf16.msra.mxu0 %v4704
    %4877 = vmatprep.subr.bf16.mxu0 0
    %4878 = vmatpush1.bf16.msra.mxu0 %v4705
    %4879 = vmatprep.subr.bf16.mxu0 0
    %4880 = vmatpush1.bf16.msra.mxu0 %v4706
    %4881 = vmatprep.subr.bf16.mxu0 0
    %4882 = vmatpush1.bf16.msra.mxu0 %v4707
    %4883 = vmatprep.subr.bf16.mxu0 0
    %4884 = vmatpush1.bf16.msra.mxu0 %v4708
    %4885 = vmatprep.mubr.bf16.mxu0 %v4197
    %4886 = vmatmul.mubr.bf16.gmra.mrb[0].mxu0 %v4196
    %v4887 = vpop.f32.mrb[0].mxu0
    %v4888 = vadd.f32 %v4371, %v4887
    %v4889 = vpop.f32.mrb[0].mxu0
    %v4890 = vpop.f32.mrb[0].mxu0
    %v4891 = vpop.f32.mrb[0].mxu0
    %4892 = vdwg.mxu0
    %4893 = vmatprep.subr.bf16.mxu0 0
    %4894 = vmatpush1.bf16.msra.mxu0 %v4709
    %4895 = vmatprep.subr.bf16.mxu0 0
    %4896 = vmatpush1.bf16.msra.mxu0 %v4710
    %4897 = vmatprep.subr.bf16.mxu0 0
    %4898 = vmatpush1.bf16.msra.mxu0 %v4711
    %4899 = vmatprep.subr.bf16.mxu0 0
    %4900 = vmatpush1.bf16.msra.mxu0 %v4712
    %4901 = vmatprep.subr.bf16.mxu0 0
    %4902 = vmatpush1.bf16.msra.mxu0 %v4713
    %4903 = vmatprep.subr.bf16.mxu0 0
    %4904 = vmatpush1.bf16.msra.mxu0 %v4714
    %4905 = vmatprep.subr.bf16.mxu0 0
    %4906 = vmatpush1.bf16.msra.mxu0 %v4715
    %4907 = vmatprep.subr.bf16.mxu0 0
    %4908 = vmatpush1.bf16.msra.mxu0 %v4716
    %4909 = vmatprep.subr.bf16.mxu0 0
    %4910 = vmatpush1.bf16.msra.mxu0 %v4717
    %4911 = vmatprep.subr.bf16.mxu0 0
    %4912 = vmatpush1.bf16.msra.mxu0 %v4718
    %4913 = vmatprep.subr.bf16.mxu0 0
    %4914 = vmatpush1.bf16.msra.mxu0 %v4719
    %4915 = vmatprep.subr.bf16.mxu0 0
    %4916 = vmatpush1.bf16.msra.mxu0 %v4720
    %4917 = vmatprep.subr.bf16.mxu0 0
    %4918 = vmatpush1.bf16.msra.mxu0 %v4721
    %4919 = vmatprep.subr.bf16.mxu0 0
    %4920 = vmatpush1.bf16.msra.mxu0 %v4722
    %4921 = vmatprep.subr.bf16.mxu0 0
    %4922 = vmatpush1.bf16.msra.mxu0 %v4723
    %4923 = vmatprep.subr.bf16.mxu0 0
    %4924 = vmatpush1.bf16.msra.mxu0 %v4724
    %4925 = vmatprep.mubr.bf16.mxu0 %v4199
    %4926 = vmatmul.mubr.bf16.gmra.mrb[0].mxu0 %v4198
    %v4927 = vpop.f32.mrb[0].mxu0
    %v4928 = vadd.f32 %v4888, %v4927
    %v4929 = vpop.f32.mrb[0].mxu0
    %v4930 = vpop.f32.mrb[0].mxu0
    %v4931 = vpop.f32.mrb[0].mxu0
    %4932 = vdwg.mxu0
    %4933 = vmatprep.subr.bf16.mxu0 0
    %4934 = vmatpush1.bf16.msra.mxu0 %v4725
    %4935 = vmatprep.subr.bf16.mxu0 0
    %4936 = vmatpush1.bf16.msra.mxu0 %v4726
    %4937 = vmatprep.subr.bf16.mxu0 0
    %4938 = vmatpush1.bf16.msra.mxu0 %v4727
    %4939 = vmatprep.subr.bf16.mxu0 0
    %4940 = vmatpush1.bf16.msra.mxu0 %v4728
    %4941 = vmatprep.subr.bf16.mxu0 0
    %4942 = vmatpush1.bf16.msra.mxu0 %v4729
    %4943 = vmatprep.subr.bf16.mxu0 0
    %4944 = vmatpush1.bf16.msra.mxu0 %v4730
    %4945 = vmatprep.subr.bf16.mxu0 0
    %4946 = vmatpush1.bf16.msra.mxu0 %v4731
    %4947 = vmatprep.subr.bf16.mxu0 0
    %4948 = vmatpush1.bf16.msra.mxu0 %v4732
    %4949 = vmatprep.subr.bf16.mxu0 0
    %4950 = vmatpush1.bf16.msra.mxu0 %v4733
    %4951 = vmatprep.subr.bf16.mxu0 0
    %4952 = vmatpush1.bf16.msra.mxu0 %v4734
    %4953 = vmatprep.subr.bf16.mxu0 0
    %4954 = vmatpush1.bf16.msra.mxu0 %v4735
    %4955 = vmatprep.subr.bf16.mxu0 0
    %4956 = vmatpush1.bf16.msra.mxu0 %v4736
    %4957 = vmatprep.subr.bf16.mxu0 0
    %4958 = vmatpush1.bf16.msra.mxu0 %v4737
    %4959 = vmatprep.subr.bf16.mxu0 0
    %4960 = vmatpush1.bf16.msra.mxu0 %v4738
    %4961 = vmatprep.subr.bf16.mxu0 0
    %4962 = vmatpush1.bf16.msra.mxu0 %v4739
    %4963 = vmatprep.subr.bf16.mxu0 0
    %4964 = vmatpush1.bf16.msra.mxu0 %v4740
    %4965 = vmatprep.mubr.bf16.mxu0 %v4201
    %4966 = vmatmul.mubr.bf16.gmra.mrb[0].mxu0 %v4200
    %v4967 = vpop.f32.mrb[0].mxu0
    %v4968 = vadd.f32 %v4928, %v4967
    %v4969 = vpop.f32.mrb[0].mxu0
    %v4970 = vpop.f32.mrb[0].mxu0
    %v4971 = vpop.f32.mrb[0].mxu0
    %4972 = vdwg.mxu0
    %4973 = vmatprep.subr.bf16.mxu0 0
    %4974 = vmatpush1.bf16.msra.mxu0 %v4741
    %4975 = vmatprep.subr.bf16.mxu0 0
    %4976 = vmatpush1.bf16.msra.mxu0 %v4742
    %4977 = vmatprep.subr.bf16.mxu0 0
    %4978 = vmatpush1.bf16.msra.mxu0 %v4743
    %4979 = vmatprep.subr.bf16.mxu0 0
    %4980 = vmatpush1.bf16.msra.mxu0 %v4744
    %4981 = vmatprep.subr.bf16.mxu0 0
    %4982 = vmatpush1.bf16.msra.mxu0 %v4745
    %4983 = vmatprep.subr.bf16.mxu0 0
    %4984 = vmatpush1.bf16.msra.mxu0 %v4746
    %4985 = vmatprep.subr.bf16.mxu0 0
    %4986 = vmatpush1.bf16.msra.mxu0 %v4747
    %4987 = vmatprep.subr.bf16.mxu0 0
    %4988 = vmatpush1.bf16.msra.mxu0 %v4748
    %4989 = vmatprep.subr.bf16.mxu0 0
    %4990 = vmatpush1.bf16.msra.mxu0 %v4749
    %4991 = vmatprep.subr.bf16.mxu0 0
    %4992 = vmatpush1.bf16.msra.mxu0 %v4750
    %4993 = vmatprep.subr.bf16.mxu0 0
    %4994 = vmatpush1.bf16.msra.mxu0 %v4751
    %4995 = vmatprep.subr.bf16.mxu0 0
    %4996 = vmatpush1.bf16.msra.mxu0 %v4752
    %4997 = vmatprep.subr.bf16.mxu0 0
    %4998 = vmatpush1.bf16.msra.mxu0 %v4753
    %4999 = vmatprep.subr.bf16.mxu0 0
    %5000 = vmatpush1.bf16.msra.mxu0 %v4754
    %5001 = vmatprep.subr.bf16.mxu0 0
    %5002 = vmatpush1.bf16.msra.mxu0 %v4755
    %5003 = vmatprep.subr.bf16.mxu0 0
    %5004 = vmatpush1.bf16.msra.mxu0 %v4756
    %5005 = vmatprep.mubr.bf16.mxu0 %v4203
    %5006 = vmatmul.mubr.bf16.gmra.mrb[0].mxu0 %v4202
    %v5007 = vpop.f32.mrb[0].mxu0
    %v5008 = vadd.f32 %v4968, %v5007
    %v5009 = vpop.f32.mrb[0].mxu0
    %v5010 = vpop.f32.mrb[0].mxu0
    %v5011 = vpop.f32.mrb[0].mxu0
    %5012 = vdwg.mxu0
    %5013 = vmatprep.subr.bf16.mxu0 0
    %5014 = vmatpush1.bf16.msra.mxu0 %v4757
    %5015 = vmatprep.subr.bf16.mxu0 0
    %5016 = vmatpush1.bf16.msra.mxu0 %v4758
    %5017 = vmatprep.subr.bf16.mxu0 0
    %5018 = vmatpush1.bf16.msra.mxu0 %v4759
    %5019 = vmatprep.subr.bf16.mxu0 0
    %5020 = vmatpush1.bf16.msra.mxu0 %v4760
    %5021 = vmatprep.subr.bf16.mxu0 0
    %5022 = vmatpush1.bf16.msra.mxu0 %v4761
    %5023 = vmatprep.subr.bf16.mxu0 0
    %5024 = vmatpush1.bf16.msra.mxu0 %v4762
    %5025 = vmatprep.subr.bf16.mxu0 0
    %5026 = vmatpush1.bf16.msra.mxu0 %v4763
    %5027 = vmatprep.subr.bf16.mxu0 0
    %5028 = vmatpush1.bf16.msra.mxu0 %v4764
    %5029 = vmatprep.subr.bf16.mxu0 0
    %5030 = vmatpush1.bf16.msra.mxu0 %v4765
    %5031 = vmatprep.subr.bf16.mxu0 0
    %5032 = vmatpush1.bf16.msra.mxu0 %v4766
    %5033 = vmatprep.subr.bf16.mxu0 0
    %5034 = vmatpush1.bf16.msra.mxu0 %v4767
    %5035 = vmatprep.subr.bf16.mxu0 0
    %5036 = vmatpush1.bf16.msra.mxu0 %v4768
    %5037 = vmatprep.subr.bf16.mxu0 0
    %5038 = vmatpush1.bf16.msra.mxu0 %v4769
    %5039 = vmatprep.subr.bf16.mxu0 0
    %5040 = vmatpush1.bf16.msra.mxu0 %v4770
    %5041 = vmatprep.subr.bf16.mxu0 0
    %5042 = vmatpush1.bf16.msra.mxu0 %v4771
    %5043 = vmatprep.subr.bf16.mxu0 0
    %5044 = vmatpush1.bf16.msra.mxu0 %v4772
    %5045 = vmatprep.mubr.bf16.mxu0 %v4205
    %5046 = vmatmul.mubr.bf16.gmra.mrb[0].mxu0 %v4204
    %v5047 = vpop.f32.mrb[0].mxu0
    %v5048 = vadd.f32 %v5008, %v5047
    %v5049 = vpop.f32.mrb[0].mxu0
    %v5050 = vpop.f32.mrb[0].mxu0
    %v5051 = vpop.f32.mrb[0].mxu0
    %5052 = vdwg.mxu0
    %5053 = vst [vmem:[#allocation10] sm:$0x3] %v5048
    // Predicated region
    $region42: #{tpu_custom_call.1} parent=1 // pred_check
      _
    $region43: #{tpu_custom_call.1} parent=1 // pred_check_branch
      %5055 = sbr.rel (0) target = $region45
    $region44: #{tpu_custom_call.1} parent=1 // pred_region
      %s5057 = ssub.s32 32, 32
      %5058 = vsyncadd [#allocation4], %s5057
      %s5060 = sshll.u32 [#allocation10], 4
      %s5061 = int_to_ptr.vmem [resolvable:$true] %s5060
      %5063 = dma.vmem_to_hbm [thread:$0]  %s5061, 32, %s6, [#allocation4]
    $region45: #{tpu_custom_call.1} parent=1 // pred_fallthru
      _
    // Predicated region
    $region46: #{tpu_custom_call.1} parent=1 // pred_check
      _
    $region47: #{tpu_custom_call.1} parent=1 // pred_check_branch
      %5065 = sbr.rel (0) target = $region49
    $region48: #{tpu_custom_call.1} parent=1 // pred_region
      %5066 = dma.done [#allocation4], 32
    $region49: #{tpu_custom_call.1} parent=1 // pred_fallthru
      _
    %5067 = vsyncpa [#allocation3], 1
    %5068 = vsyncpa [#allocation6], 1
    %5069 = vsyncpa [#allocation9], 1
    %5070 = vsyncpa [#allocation4], 1

</llo_original>
